<compile_context>
chip_gen: v6e
topology: v6e:2x2x1
jax: 0.10.0
libtpu: 0.0.40
codegen_flags: <defaults>
</compile_context>

<pallas_src>
import functools
import numpy as np
import jax
import jax.numpy as jnp
from jax.experimental import pallas as pl
from jax.experimental.pallas import tpu as pltpu

# ----------------------------- model configuration ---------------------------------
IMG_W, IMG_H = 32, 48          # data_cfg['image_size'] = [W, H]; interpolate -> (H, W)
PATCH = 16
HP, WP = IMG_H // PATCH, IMG_W // PATCH        # 3 x 2 patch grid
T = HP * WP                                    # 6 tokens per sample
EMBED = 32
HEADS = 2
DH = EMBED // HEADS
DEPTH = 2
MLP_HIDDEN = 2 * EMBED
NUM_KPT = 17                                   # COCO keypoints
KPT_PAD = 128                                  # head output padded to lane-dense width
HM_H, HM_W = HP * 4, WP * 4                    # heatmap size (12, 8)
HM_HW = HM_H * HM_W
LN_EPS = 1e-6


# ----------------------------- compile-time constant matrices -----------------------
@functools.lru_cache(maxsize=None)
def _bilinear_matrix(n_in, n_out):
    """(n_out, n_in) interp matrix matching F.interpolate(bilinear, align_corners=False)."""
    scale = n_in / n_out
    src = np.clip((np.arange(n_out, dtype=np.float64) + 0.5) * scale - 0.5, 0.0, n_in - 1)
    i0 = np.floor(src).astype(np.int64)
    i1 = np.minimum(i0 + 1, n_in - 1)
    w1 = (src - i0).astype(np.float32)
    w0 = (1.0 - w1).astype(np.float32)
    m = np.zeros((n_out, n_in), np.float32)
    rows = np.arange(n_out)
    m[rows, i0] += w0
    m[rows, i1] += w1
    return m


def _per_token_resize_kernels(in_h, in_w):
    """(T, PATCH*PATCH, in_h*in_w): bilinear-resize weights feeding each token's patch."""
    wh = _bilinear_matrix(in_h, IMG_H)          # (IMG_H, in_h)
    ww = _bilinear_matrix(in_w, IMG_W)          # (IMG_W, in_w)
    k_all = np.zeros((T, PATCH * PATCH, in_h * in_w), np.float32)
    for t in range(T):
        pr, pc = divmod(t, WP)
        k_all[t] = np.kron(wh[pr * PATCH:(pr + 1) * PATCH],
                           ww[pc * PATCH:(pc + 1) * PATCH])
    return k_all


# ----------------------------- Pallas kernel -----------------------------------------
def _layernorm(x, g, b):
    mu = jnp.mean(x, axis=-1, keepdims=True)
    var = jnp.mean((x - mu) ** 2, axis=-1, keepdims=True)
    return (x - mu) * jax.lax.rsqrt(var + LN_EPS) * g + b


def _vit_fused_kernel(tok_ref,
                      ln1_g_ref, ln1_b_ref, qkv_w_ref, qkv_b_ref,
                      proj_w_ref, proj_b_ref, ln2_g_ref, ln2_b_ref,
                      fc1_w_ref, fc1_b_ref, fc2_w_ref, fc2_b_ref,
                      head_w_ref, head_b_ref, up_w_ref, o_ref):
    """Whole ViT forward + keypoint head + 4x heatmap upsample; everything VMEM-resident."""
    nt = tok_ref.shape[0]
    n = nt // T
    x = tok_ref[...]                                            # (n*T, EMBED) f32

    # Block-diagonal (per-sample) additive attention mask, built in-kernel.
    rid = jnp.floor((jax.lax.broadcasted_iota(jnp.int32, (nt, nt), 0).astype(jnp.float32)
                     + 0.5) * (1.0 / T))
    cid = jnp.floor((jax.lax.broadcasted_iota(jnp.int32, (nt, nt), 1).astype(jnp.float32)
                     + 0.5) * (1.0 / T))
    neg = jnp.where(rid == cid, 0.0, -1e30)

    scale = 1.0 / (DH ** 0.5)
    # TODO(synk): replace the static depth unroll with a depth grid axis + double-buffered
    # weight streaming before scaling DEPTH / EMBED to real ViTPose-L.
    for d in range(DEPTH):
        qkv_w = qkv_w_ref[d]
        proj_w = proj_w_ref[d]
        fc1_w = fc1_w_ref[d]
        fc2_w = fc2_w_ref[d]

        # --- attention ---
        h = _layernorm(x, ln1_g_ref[d], ln1_b_ref[d])
        qkv = jnp.dot(h.astype(jnp.bfloat16), qkv_w,
                      preferred_element_type=jnp.float32) + qkv_b_ref[d]
        # per-head outputs accumulate straight through proj_w row-slices (no concat relayout)
        for hh in range(HEADS):
            q = qkv[:, hh * DH:(hh + 1) * DH]
            k = qkv[:, EMBED + hh * DH:EMBED + (hh + 1) * DH]
            v = qkv[:, 2 * EMBED + hh * DH:2 * EMBED + (hh + 1) * DH]
            s = jnp.dot(q.astype(jnp.bfloat16), k.astype(jnp.bfloat16).T,
                        preferred_element_type=jnp.float32) * scale + neg
            s = s - jnp.max(s, axis=-1, keepdims=True)
            p = jnp.exp(s)
            p = p * pl.reciprocal(jnp.sum(p, axis=-1, keepdims=True), approx=True)
            o_h = jnp.dot(p.astype(jnp.bfloat16), v.astype(jnp.bfloat16),
                          preferred_element_type=jnp.float32)
            x = x + jnp.dot(o_h.astype(jnp.bfloat16), proj_w[hh * DH:(hh + 1) * DH, :],
                            preferred_element_type=jnp.float32)
        x = x + proj_b_ref[d]

        # --- MLP ---
        h = _layernorm(x, ln2_g_ref[d], ln2_b_ref[d])
        h = jnp.dot(h.astype(jnp.bfloat16), fc1_w,
                    preferred_element_type=jnp.float32) + fc1_b_ref[d]
        h = jax.nn.gelu(h, approximate=True)   # TODO(synk): PyTorch default is exact erf GELU
        x = x + jnp.dot(h.astype(jnp.bfloat16), fc2_w,
                        preferred_element_type=jnp.float32) + fc2_b_ref[d]

    # --- keypoint head (padded to 128 lanes -> lane-dense) ---
    hm_tok = jnp.dot(x.astype(jnp.bfloat16), head_w_ref[...],
                     preferred_element_type=jnp.float32) + head_b_ref[...]   # (n*T, KPT_PAD)

    # --- fused 4x bilinear heatmap upsample, per sample, lane-dense store ---
    up = up_w_ref[...]                                          # (HM_HW, T)
    for i in range(n):
        blk = hm_tok[i * T:(i + 1) * T, :]                      # (T, KPT_PAD)
        o_ref[i * HM_HW:(i + 1) * HM_HW, :] = jnp.dot(
            up, blk, preferred_element_type=jnp.float32)


def _vit_pose_fused(tok, p):
    n = tok.shape[0] // T
    return pl.pallas_call(
        _vit_fused_kernel,
        out_shape=jax.ShapeDtypeStruct((n * HM_HW, KPT_PAD), jnp.float32),
        compiler_params=pltpu.CompilerParams(vmem_limit_bytes=48 * 1024 * 1024),
    )(tok,
      p["ln1_g"], p["ln1_b"], p["qkv_w"], p["qkv_b"],
      p["proj_w"], p["proj_b"], p["ln2_g"], p["ln2_b"],
      p["fc1_w"], p["fc1_b"], p["fc2_w"], p["fc2_b"],
      p["head_w"], p["head_b"], p["up_w"])


# ----------------------------- synthetic ViTPose params -----------------------------
def init_params(key):
    ks = jax.random.split(key, 3 + 4 * DEPTH)

    def w(k, shape, scale=0.02):
        return scale * jax.random.normal(k, shape, jnp.float32)

    qkv_w = jnp.stack([w(ks[3 + 4 * d + 0], (EMBED, 3 * EMBED)) for d in range(DEPTH)])
    proj_w = jnp.stack([w(ks[3 + 4 * d + 1], (EMBED, EMBED)) for d in range(DEPTH)])
    fc1_w = jnp.stack([w(ks[3 + 4 * d + 2], (EMBED, MLP_HIDDEN)) for d in range(DEPTH)])
    fc2_w = jnp.stack([w(ks[3 + 4 * d + 3], (MLP_HIDDEN, EMBED)) for d in range(DEPTH)])

    return {
        "patch_w": w(ks[0], (3 * PATCH * PATCH, EMBED)),
        "patch_b": jnp.zeros((1, EMBED), jnp.float32),
        "pos_emb": w(ks[1], (T, EMBED)),
        "head_w": w(ks[2], (EMBED, NUM_KPT)),
        "head_b": jnp.zeros((1, NUM_KPT), jnp.float32),
        "ln1_g": jnp.ones((DEPTH, 1, EMBED), jnp.float32),
        "ln1_b": jnp.zeros((DEPTH, 1, EMBED), jnp.float32),
        "qkv_w": qkv_w,
        "qkv_b": jnp.zeros((DEPTH, 1, 3 * EMBED), jnp.float32),
        "proj_w": proj_w,
        "proj_b": jnp.zeros((DEPTH, 1, EMBED), jnp.float32),
        "ln2_g": jnp.ones((DEPTH, 1, EMBED), jnp.float32),
        "ln2_b": jnp.zeros((DEPTH, 1, EMBED), jnp.float32),
        "fc1_w": fc1_w,
        "fc1_b": jnp.zeros((DEPTH, 1, MLP_HIDDEN), jnp.float32),
        "fc2_w": fc2_w,
        "fc2_b": jnp.zeros((DEPTH, 1, EMBED), jnp.float32),
    }


def prepare_infer_params(params, in_h, in_w):
    """One-time (per input resolution) packing of inference weights:
    * folds bilinear resize + RGB->BGR flip + patchify + patch-embed + pos-embed into a
      single constant matrix (tokw) and bias (tokbias),
    * pads the keypoint head to 128 output lanes,
    * builds the 4x heatmap-upsample matrix,
    * casts MXU weight operands to bf16 (accumulation stays f32 inside the kernel)."""
    k_all = jnp.asarray(_per_token_resize_kernels(in_h, in_w))        # (T, P*P, in_h*in_w)
    pw_bgr = params["patch_w"].reshape(3, PATCH * PATCH, EMBED)[::-1]  # BGR flip folded in
    # tokw[(c,q),(t,e)] = sum_p k_all[t,p,q] * pw_bgr[c,p,e]
    tokw = jnp.einsum("tpq,cpe->cqte", k_all, pw_bgr).reshape(3 * in_h * in_w, T * EMBED)
    tokbias = (params["patch_b"] + params["pos_emb"]).reshape(1, T * EMBED)

    head_w = jnp.zeros((EMBED, KPT_PAD), jnp.float32).at[:, :NUM_KPT].set(params["head_w"])
    head_b = jnp.zeros((1, KPT_PAD), jnp.float32).at[:, :NUM_KPT].set(params["head_b"])
    up_w = jnp.asarray(np.kron(_bilinear_matrix(HP, HM_H), _bilinear_matrix(WP, HM_W)))

    bf = lambda a: a.astype(jnp.bfloat16)
    return {
        "tokw": bf(tokw), "tokbias": tokbias,
        "ln1_g": params["ln1_g"], "ln1_b": params["ln1_b"],
        "qkv_w": bf(params["qkv_w"]), "qkv_b": params["qkv_b"],
        "proj_w": bf(params["proj_w"]), "proj_b": params["proj_b"],
        "ln2_g": params["ln2_g"], "ln2_b": params["ln2_b"],
        "fc1_w": bf(params["fc1_w"]), "fc1_b": params["fc1_b"],
        "fc2_w": bf(params["fc2_w"]), "fc2_b": params["fc2_b"],
        "head_w": bf(head_w), "head_b": head_b,
        "up_w": up_w,
    }


# ----------------------------- HeatmapInfer.forward ---------------------------------
@jax.jit
def heatmap_infer(img, gt, iparams):
    """Equivalent of HeatmapInfer.forward: returns (cur_heatmaps, gt_heatmaps)."""
    n_img = img.shape[0]
    x = jnp.concatenate([img, gt], axis=0)          # batch img + gt: one forward pass
    n, c = x.shape[0], x.shape[1]
    assert c == 3                                   # matches the reference asserts

    # fused resize + BGR + patchify + patch-embed + pos-embed: one constant-matrix matmul
    x_flat = x.reshape(n, -1).astype(jnp.bfloat16)  # (n, 3*hi*wi)
    tok = (jnp.dot(x_flat, iparams["tokw"], preferred_element_type=jnp.float32)
           + iparams["tokbias"]).reshape(n * T, EMBED)

    # whole ViT + head + 4x upsample in ONE fused Pallas kernel
    out = _vit_pose_fused(tok, iparams)             # (n*HM_HW, KPT_PAD), lane-dense
    hm = out.reshape(n, HM_H, HM_W, KPT_PAD)[..., :NUM_KPT].transpose(0, 3, 1, 2)
    return hm[:n_img], hm[n_img:]


if __name__ == "__main__":
    key = jax.random.PRNGKey(0)
    k_img, k_gt = jax.random.split(key)
    img = jax.random.uniform(k_img, (2, 3, 16, 16), jnp.float32)
    gt = jax.random.uniform(k_gt, (2, 3, 16, 16), jnp.float32)

    params = init_params(jax.random.PRNGKey(42))
    iparams = prepare_infer_params(params, 16, 16)   # once, outside the jit

    cur_hm, gt_hm = heatmap_infer(img, gt, iparams)
    jax.block_until_ready((cur_hm, gt_hm))
    assert cur_hm.shape == (2, NUM_KPT, IMG_H // 4, IMG_W // 4)
    assert gt_hm.shape == (2, NUM_KPT, IMG_H // 4, IMG_W // 4)
    print("KERNEL_OK")
</pallas_src>

<mosaic_0001>
module attributes {stable_mosaic.version = 11 : i64} {
  func.func @_vit_fused_kernel(%arg0: memref<24x32xf32, #tpu.memory_space<vmem>>, %arg1: memref<2x1x32xf32, #tpu.memory_space<vmem>>, %arg2: memref<2x1x32xf32, #tpu.memory_space<vmem>>, %arg3: memref<2x32x96xbf16, #tpu.memory_space<vmem>>, %arg4: memref<2x1x96xf32, #tpu.memory_space<vmem>>, %arg5: memref<2x32x32xbf16, #tpu.memory_space<vmem>>, %arg6: memref<2x1x32xf32, #tpu.memory_space<vmem>>, %arg7: memref<2x1x32xf32, #tpu.memory_space<vmem>>, %arg8: memref<2x1x32xf32, #tpu.memory_space<vmem>>, %arg9: memref<2x32x64xbf16, #tpu.memory_space<vmem>>, %arg10: memref<2x1x64xf32, #tpu.memory_space<vmem>>, %arg11: memref<2x64x32xbf16, #tpu.memory_space<vmem>>, %arg12: memref<2x1x32xf32, #tpu.memory_space<vmem>>, %arg13: memref<32x128xbf16, #tpu.memory_space<vmem>>, %arg14: memref<1x128xf32, #tpu.memory_space<vmem>>, %arg15: memref<96x6xf32, #tpu.memory_space<vmem>>, %arg16: memref<384x128xf32, #tpu.memory_space<vmem>>) attributes {dimension_semantics = [], scalar_prefetch = 0 : i64, scratch_operands = 0 : i64, tpu.core_type = #tpu.core_type<tc>} {
    %c0 = arith.constant 0 : index
    %c0_0 = arith.constant 0 : index
    %0 = vector.load %arg0[%c0, %c0_0] : memref<24x32xf32, #tpu.memory_space<vmem>>, vector<24x32xf32>
    %1 = tpu.iota {dimensions = array<i32: 0>} : vector<24x24xi32>
    %2 = arith.sitofp %1 : vector<24x24xi32> to vector<24x24xf32>
    %cst = arith.constant 5.000000e-01 : f32
    %3 = vector.broadcast %cst : f32 to vector<24x24xf32>
    %4 = arith.addf %2, %3 : vector<24x24xf32>
    %cst_1 = arith.constant 0.166666672 : f32
    %5 = vector.broadcast %cst_1 : f32 to vector<24x24xf32>
    %6 = arith.mulf %4, %5 : vector<24x24xf32>
    %7 = math.floor %6 : vector<24x24xf32>
    %8 = tpu.iota {dimensions = array<i32: 1>} : vector<24x24xi32>
    %9 = arith.sitofp %8 : vector<24x24xi32> to vector<24x24xf32>
    %cst_2 = arith.constant 5.000000e-01 : f32
    %10 = vector.broadcast %cst_2 : f32 to vector<24x24xf32>
    %11 = arith.addf %9, %10 : vector<24x24xf32>
    %cst_3 = arith.constant 0.166666672 : f32
    %12 = vector.broadcast %cst_3 : f32 to vector<24x24xf32>
    %13 = arith.mulf %11, %12 : vector<24x24xf32>
    %14 = math.floor %13 : vector<24x24xf32>
    %15 = arith.cmpf oeq, %7, %14 : vector<24x24xf32>
    %cst_4 = arith.constant 0.000000e+00 : f32
    %cst_5 = arith.constant -1.000000e+30 : f32
    %16 = vector.broadcast %cst_4 : f32 to vector<24x24xf32>
    %17 = vector.broadcast %cst_5 : f32 to vector<24x24xf32>
    %18 = arith.select %15, %16, %17 : vector<24x24xi1>, vector<24x24xf32>
    %c0_6 = arith.constant 0 : index
    %c0_7 = arith.constant 0 : index
    %c0_8 = arith.constant 0 : index
    %19 = vector.load %arg3[%c0_6, %c0_7, %c0_8] : memref<2x32x96xbf16, #tpu.memory_space<vmem>>, vector<1x32x96xbf16>
    %20 = vector.shape_cast %19 : vector<1x32x96xbf16> to vector<32x96xbf16>
    %c0_9 = arith.constant 0 : index
    %c0_10 = arith.constant 0 : index
    %c0_11 = arith.constant 0 : index
    %21 = vector.load %arg5[%c0_9, %c0_10, %c0_11] : memref<2x32x32xbf16, #tpu.memory_space<vmem>>, vector<1x32x32xbf16>
    %22 = vector.shape_cast %21 : vector<1x32x32xbf16> to vector<32x32xbf16>
    %c0_12 = arith.constant 0 : index
    %c0_13 = arith.constant 0 : index
    %c0_14 = arith.constant 0 : index
    %23 = vector.load %arg9[%c0_12, %c0_13, %c0_14] : memref<2x32x64xbf16, #tpu.memory_space<vmem>>, vector<1x32x64xbf16>
    %24 = vector.shape_cast %23 : vector<1x32x64xbf16> to vector<32x64xbf16>
    %c0_15 = arith.constant 0 : index
    %c0_16 = arith.constant 0 : index
    %c0_17 = arith.constant 0 : index
    %25 = vector.load %arg11[%c0_15, %c0_16, %c0_17] : memref<2x64x32xbf16, #tpu.memory_space<vmem>>, vector<1x64x32xbf16>
    %26 = vector.shape_cast %25 : vector<1x64x32xbf16> to vector<64x32xbf16>
    %c0_18 = arith.constant 0 : index
    %c0_19 = arith.constant 0 : index
    %c0_20 = arith.constant 0 : index
    %27 = vector.load %arg1[%c0_18, %c0_19, %c0_20] : memref<2x1x32xf32, #tpu.memory_space<vmem>>, vector<1x1x32xf32>
    %28 = vector.shape_cast %27 : vector<1x1x32xf32> to vector<1x32xf32>
    %c0_21 = arith.constant 0 : index
    %c0_22 = arith.constant 0 : index
    %c0_23 = arith.constant 0 : index
    %29 = vector.load %arg2[%c0_21, %c0_22, %c0_23] : memref<2x1x32xf32, #tpu.memory_space<vmem>>, vector<1x1x32xf32>
    %30 = vector.shape_cast %29 : vector<1x1x32xf32> to vector<1x32xf32>
    %cst_24 = arith.constant dense<0.000000e+00> : vector<24xf32>
    %31 = vector.multi_reduction <add>, %0, %cst_24 [1] : vector<24x32xf32> to vector<24xf32>
    %32 = vector.shape_cast %31 : vector<24xf32> to vector<24x1xf32>
    %cst_25 = arith.constant 3.200000e+01 : f32
    %33 = vector.broadcast %cst_25 : f32 to vector<24x1xf32>
    %34 = arith.divf %32, %33 : vector<24x1xf32>
    %35 = vector.broadcast %34 : vector<24x1xf32> to vector<24x32xf32>
    %36 = arith.subf %0, %35 : vector<24x32xf32>
    %37 = arith.mulf %36, %36 : vector<24x32xf32>
    %cst_26 = arith.constant dense<0.000000e+00> : vector<24xf32>
    %38 = vector.multi_reduction <add>, %37, %cst_26 [1] : vector<24x32xf32> to vector<24xf32>
    %39 = vector.shape_cast %38 : vector<24xf32> to vector<24x1xf32>
    %cst_27 = arith.constant 3.200000e+01 : f32
    %40 = vector.broadcast %cst_27 : f32 to vector<24x1xf32>
    %41 = arith.divf %39, %40 : vector<24x1xf32>
    %42 = vector.broadcast %34 : vector<24x1xf32> to vector<24x32xf32>
    %43 = arith.subf %0, %42 : vector<24x32xf32>
    %cst_28 = arith.constant 9.99999997E-7 : f32
    %44 = vector.broadcast %cst_28 : f32 to vector<24x1xf32>
    %45 = arith.addf %41, %44 : vector<24x1xf32>
    %46 = math.rsqrt %45 : vector<24x1xf32>
    %47 = vector.broadcast %46 : vector<24x1xf32> to vector<24x32xf32>
    %48 = arith.mulf %43, %47 : vector<24x32xf32>
    %49 = vector.broadcast %28 : vector<1x32xf32> to vector<24x32xf32>
    %50 = arith.mulf %48, %49 : vector<24x32xf32>
    %51 = vector.broadcast %30 : vector<1x32xf32> to vector<24x32xf32>
    %52 = arith.addf %50, %51 : vector<24x32xf32>
    %53 = arith.truncf %52 : vector<24x32xf32> to vector<24x32xbf16>
    %cst_29 = arith.constant dense<0.000000e+00> : vector<24x96xf32>
    %54 = tpu.matmul %53, %20, %cst_29 {dimension_numbers = #tpu.dot_dimension_numbers<[1], [0], [0], [1], [0, 0, 1, 1], [], []>} : vector<24x32xbf16>, vector<32x96xbf16>, vector<24x96xf32> -> vector<24x96xf32>
    %c0_30 = arith.constant 0 : index
    %c0_31 = arith.constant 0 : index
    %c0_32 = arith.constant 0 : index
    %55 = vector.load %arg4[%c0_30, %c0_31, %c0_32] : memref<2x1x96xf32, #tpu.memory_space<vmem>>, vector<1x1x96xf32>
    %56 = vector.shape_cast %55 : vector<1x1x96xf32> to vector<1x96xf32>
    %57 = vector.broadcast %56 : vector<1x96xf32> to vector<24x96xf32>
    %58 = arith.addf %54, %57 : vector<24x96xf32>
    %59 = vector.extract_strided_slice %58 {offsets = [0, 0], sizes = [24, 16], strides = [1, 1]} : vector<24x96xf32> to vector<24x16xf32>
    %60 = vector.extract_strided_slice %58 {offsets = [0, 32], sizes = [24, 16], strides = [1, 1]} : vector<24x96xf32> to vector<24x16xf32>
    %61 = vector.extract_strided_slice %58 {offsets = [0, 64], sizes = [24, 16], strides = [1, 1]} : vector<24x96xf32> to vector<24x16xf32>
    %62 = arith.truncf %59 : vector<24x16xf32> to vector<24x16xbf16>
    %63 = arith.truncf %60 : vector<24x16xf32> to vector<24x16xbf16>
    %64 = tpu.transpose %63, [1, 0] : vector<24x16xbf16> -> vector<16x24xbf16>
    %cst_33 = arith.constant dense<0.000000e+00> : vector<24x24xf32>
    %65 = tpu.matmul %62, %64, %cst_33 {dimension_numbers = #tpu.dot_dimension_numbers<[1], [0], [0], [1], [0, 0, 1, 1], [], []>} : vector<24x16xbf16>, vector<16x24xbf16>, vector<24x24xf32> -> vector<24x24xf32>
    %cst_34 = arith.constant 2.500000e-01 : f32
    %66 = vector.broadcast %cst_34 : f32 to vector<24x24xf32>
    %67 = arith.mulf %65, %66 : vector<24x24xf32>
    %68 = arith.addf %67, %18 : vector<24x24xf32>
    %cst_35 = arith.constant dense<0xFF800000> : vector<24xf32>
    %69 = vector.multi_reduction <maximumf>, %68, %cst_35 [1] : vector<24x24xf32> to vector<24xf32>
    %70 = vector.shape_cast %69 : vector<24xf32> to vector<24x1xf32>
    %71 = vector.broadcast %70 : vector<24x1xf32> to vector<24x24xf32>
    %72 = arith.subf %68, %71 : vector<24x24xf32>
    %73 = math.exp %72 : vector<24x24xf32>
    %cst_36 = arith.constant dense<0.000000e+00> : vector<24xf32>
    %74 = vector.multi_reduction <add>, %73, %cst_36 [1] : vector<24x24xf32> to vector<24xf32>
    %75 = vector.shape_cast %74 : vector<24xf32> to vector<24x1xf32>
    %76 = tpu.reciprocal %75 {approx = true} : vector<24x1xf32> -> vector<24x1xf32>
    %77 = vector.broadcast %76 : vector<24x1xf32> to vector<24x24xf32>
    %78 = arith.mulf %73, %77 : vector<24x24xf32>
    %79 = arith.truncf %78 : vector<24x24xf32> to vector<24x24xbf16>
    %80 = arith.truncf %61 : vector<24x16xf32> to vector<24x16xbf16>
    %cst_37 = arith.constant dense<0.000000e+00> : vector<24x16xf32>
    %81 = tpu.matmul %79, %80, %cst_37 {dimension_numbers = #tpu.dot_dimension_numbers<[1], [0], [0], [1], [0, 0, 1, 1], [], []>} : vector<24x24xbf16>, vector<24x16xbf16>, vector<24x16xf32> -> vector<24x16xf32>
    %82 = arith.truncf %81 : vector<24x16xf32> to vector<24x16xbf16>
    %83 = vector.extract_strided_slice %22 {offsets = [0, 0], sizes = [16, 32], strides = [1, 1]} : vector<32x32xbf16> to vector<16x32xbf16>
    %cst_38 = arith.constant dense<0.000000e+00> : vector<24x32xf32>
    %84 = tpu.matmul %82, %83, %cst_38 {dimension_numbers = #tpu.dot_dimension_numbers<[1], [0], [0], [1], [0, 0, 1, 1], [], []>} : vector<24x16xbf16>, vector<16x32xbf16>, vector<24x32xf32> -> vector<24x32xf32>
    %85 = arith.addf %0, %84 : vector<24x32xf32>
    %86 = vector.extract_strided_slice %58 {offsets = [0, 16], sizes = [24, 16], strides = [1, 1]} : vector<24x96xf32> to vector<24x16xf32>
    %87 = vector.extract_strided_slice %58 {offsets = [0, 48], sizes = [24, 16], strides = [1, 1]} : vector<24x96xf32> to vector<24x16xf32>
    %88 = vector.extract_strided_slice %58 {offsets = [0, 80], sizes = [24, 16], strides = [1, 1]} : vector<24x96xf32> to vector<24x16xf32>
    %89 = arith.truncf %86 : vector<24x16xf32> to vector<24x16xbf16>
    %90 = arith.truncf %87 : vector<24x16xf32> to vector<24x16xbf16>
    %91 = tpu.transpose %90, [1, 0] : vector<24x16xbf16> -> vector<16x24xbf16>
    %cst_39 = arith.constant dense<0.000000e+00> : vector<24x24xf32>
    %92 = tpu.matmul %89, %91, %cst_39 {dimension_numbers = #tpu.dot_dimension_numbers<[1], [0], [0], [1], [0, 0, 1, 1], [], []>} : vector<24x16xbf16>, vector<16x24xbf16>, vector<24x24xf32> -> vector<24x24xf32>
    %cst_40 = arith.constant 2.500000e-01 : f32
    %93 = vector.broadcast %cst_40 : f32 to vector<24x24xf32>
    %94 = arith.mulf %92, %93 : vector<24x24xf32>
    %95 = arith.addf %94, %18 : vector<24x24xf32>
    %cst_41 = arith.constant dense<0xFF800000> : vector<24xf32>
    %96 = vector.multi_reduction <maximumf>, %95, %cst_41 [1] : vector<24x24xf32> to vector<24xf32>
    %97 = vector.shape_cast %96 : vector<24xf32> to vector<24x1xf32>
    %98 = vector.broadcast %97 : vector<24x1xf32> to vector<24x24xf32>
    %99 = arith.subf %95, %98 : vector<24x24xf32>
    %100 = math.exp %99 : vector<24x24xf32>
    %cst_42 = arith.constant dense<0.000000e+00> : vector<24xf32>
    %101 = vector.multi_reduction <add>, %100, %cst_42 [1] : vector<24x24xf32> to vector<24xf32>
    %102 = vector.shape_cast %101 : vector<24xf32> to vector<24x1xf32>
    %103 = tpu.reciprocal %102 {approx = true} : vector<24x1xf32> -> vector<24x1xf32>
    %104 = vector.broadcast %103 : vector<24x1xf32> to vector<24x24xf32>
    %105 = arith.mulf %100, %104 : vector<24x24xf32>
    %106 = arith.truncf %105 : vector<24x24xf32> to vector<24x24xbf16>
    %107 = arith.truncf %88 : vector<24x16xf32> to vector<24x16xbf16>
    %cst_43 = arith.constant dense<0.000000e+00> : vector<24x16xf32>
    %108 = tpu.matmul %106, %107, %cst_43 {dimension_numbers = #tpu.dot_dimension_numbers<[1], [0], [0], [1], [0, 0, 1, 1], [], []>} : vector<24x24xbf16>, vector<24x16xbf16>, vector<24x16xf32> -> vector<24x16xf32>
    %109 = arith.truncf %108 : vector<24x16xf32> to vector<24x16xbf16>
    %110 = vector.extract_strided_slice %22 {offsets = [16, 0], sizes = [16, 32], strides = [1, 1]} : vector<32x32xbf16> to vector<16x32xbf16>
    %cst_44 = arith.constant dense<0.000000e+00> : vector<24x32xf32>
    %111 = tpu.matmul %109, %110, %cst_44 {dimension_numbers = #tpu.dot_dimension_numbers<[1], [0], [0], [1], [0, 0, 1, 1], [], []>} : vector<24x16xbf16>, vector<16x32xbf16>, vector<24x32xf32> -> vector<24x32xf32>
    %112 = arith.addf %85, %111 : vector<24x32xf32>
    %c0_45 = arith.constant 0 : index
    %c0_46 = arith.constant 0 : index
    %c0_47 = arith.constant 0 : index
    %113 = vector.load %arg6[%c0_45, %c0_46, %c0_47] : memref<2x1x32xf32, #tpu.memory_space<vmem>>, vector<1x1x32xf32>
    %114 = vector.shape_cast %113 : vector<1x1x32xf32> to vector<1x32xf32>
    %115 = vector.broadcast %114 : vector<1x32xf32> to vector<24x32xf32>
    %116 = arith.addf %112, %115 : vector<24x32xf32>
    %c0_48 = arith.constant 0 : index
    %c0_49 = arith.constant 0 : index
    %c0_50 = arith.constant 0 : index
    %117 = vector.load %arg7[%c0_48, %c0_49, %c0_50] : memref<2x1x32xf32, #tpu.memory_space<vmem>>, vector<1x1x32xf32>
    %118 = vector.shape_cast %117 : vector<1x1x32xf32> to vector<1x32xf32>
    %c0_51 = arith.constant 0 : index
    %c0_52 = arith.constant 0 : index
    %c0_53 = arith.constant 0 : index
    %119 = vector.load %arg8[%c0_51, %c0_52, %c0_53] : memref<2x1x32xf32, #tpu.memory_space<vmem>>, vector<1x1x32xf32>
    %120 = vector.shape_cast %119 : vector<1x1x32xf32> to vector<1x32xf32>
    %cst_54 = arith.constant dense<0.000000e+00> : vector<24xf32>
    %121 = vector.multi_reduction <add>, %116, %cst_54 [1] : vector<24x32xf32> to vector<24xf32>
    %122 = vector.shape_cast %121 : vector<24xf32> to vector<24x1xf32>
    %cst_55 = arith.constant 3.200000e+01 : f32
    %123 = vector.broadcast %cst_55 : f32 to vector<24x1xf32>
    %124 = arith.divf %122, %123 : vector<24x1xf32>
    %125 = vector.broadcast %124 : vector<24x1xf32> to vector<24x32xf32>
    %126 = arith.subf %116, %125 : vector<24x32xf32>
    %127 = arith.mulf %126, %126 : vector<24x32xf32>
    %cst_56 = arith.constant dense<0.000000e+00> : vector<24xf32>
    %128 = vector.multi_reduction <add>, %127, %cst_56 [1] : vector<24x32xf32> to vector<24xf32>
    %129 = vector.shape_cast %128 : vector<24xf32> to vector<24x1xf32>
    %cst_57 = arith.constant 3.200000e+01 : f32
    %130 = vector.broadcast %cst_57 : f32 to vector<24x1xf32>
    %131 = arith.divf %129, %130 : vector<24x1xf32>
    %132 = vector.broadcast %124 : vector<24x1xf32> to vector<24x32xf32>
    %133 = arith.subf %116, %132 : vector<24x32xf32>
    %cst_58 = arith.constant 9.99999997E-7 : f32
    %134 = vector.broadcast %cst_58 : f32 to vector<24x1xf32>
    %135 = arith.addf %131, %134 : vector<24x1xf32>
    %136 = math.rsqrt %135 : vector<24x1xf32>
    %137 = vector.broadcast %136 : vector<24x1xf32> to vector<24x32xf32>
    %138 = arith.mulf %133, %137 : vector<24x32xf32>
    %139 = vector.broadcast %118 : vector<1x32xf32> to vector<24x32xf32>
    %140 = arith.mulf %138, %139 : vector<24x32xf32>
    %141 = vector.broadcast %120 : vector<1x32xf32> to vector<24x32xf32>
    %142 = arith.addf %140, %141 : vector<24x32xf32>
    %143 = arith.truncf %142 : vector<24x32xf32> to vector<24x32xbf16>
    %cst_59 = arith.constant dense<0.000000e+00> : vector<24x64xf32>
    %144 = tpu.matmul %143, %24, %cst_59 {dimension_numbers = #tpu.dot_dimension_numbers<[1], [0], [0], [1], [0, 0, 1, 1], [], []>} : vector<24x32xbf16>, vector<32x64xbf16>, vector<24x64xf32> -> vector<24x64xf32>
    %c0_60 = arith.constant 0 : index
    %c0_61 = arith.constant 0 : index
    %c0_62 = arith.constant 0 : index
    %145 = vector.load %arg10[%c0_60, %c0_61, %c0_62] : memref<2x1x64xf32, #tpu.memory_space<vmem>>, vector<1x1x64xf32>
    %146 = vector.shape_cast %145 : vector<1x1x64xf32> to vector<1x64xf32>
    %147 = vector.broadcast %146 : vector<1x64xf32> to vector<24x64xf32>
    %148 = arith.addf %144, %147 : vector<24x64xf32>
    %149 = arith.mulf %148, %148 : vector<24x64xf32>
    %150 = arith.mulf %148, %149 : vector<24x64xf32>
    %cst_63 = arith.constant 4.471500e-02 : f32
    %151 = vector.broadcast %cst_63 : f32 to vector<24x64xf32>
    %152 = arith.mulf %151, %150 : vector<24x64xf32>
    %153 = arith.addf %148, %152 : vector<24x64xf32>
    %cst_64 = arith.constant 0.797884583 : f32
    %154 = vector.broadcast %cst_64 : f32 to vector<24x64xf32>
    %155 = arith.mulf %154, %153 : vector<24x64xf32>
    %156 = math.tanh %155 : vector<24x64xf32>
    %cst_65 = arith.constant 1.000000e+00 : f32
    %157 = vector.broadcast %cst_65 : f32 to vector<24x64xf32>
    %158 = arith.addf %157, %156 : vector<24x64xf32>
    %cst_66 = arith.constant 5.000000e-01 : f32
    %159 = vector.broadcast %cst_66 : f32 to vector<24x64xf32>
    %160 = arith.mulf %159, %158 : vector<24x64xf32>
    %161 = arith.mulf %148, %160 : vector<24x64xf32>
    %162 = arith.truncf %161 : vector<24x64xf32> to vector<24x64xbf16>
    %cst_67 = arith.constant dense<0.000000e+00> : vector<24x32xf32>
    %163 = tpu.matmul %162, %26, %cst_67 {dimension_numbers = #tpu.dot_dimension_numbers<[1], [0], [0], [1], [0, 0, 1, 1], [], []>} : vector<24x64xbf16>, vector<64x32xbf16>, vector<24x32xf32> -> vector<24x32xf32>
    %164 = arith.addf %116, %163 : vector<24x32xf32>
    %c0_68 = arith.constant 0 : index
    %c0_69 = arith.constant 0 : index
    %c0_70 = arith.constant 0 : index
    %165 = vector.load %arg12[%c0_68, %c0_69, %c0_70] : memref<2x1x32xf32, #tpu.memory_space<vmem>>, vector<1x1x32xf32>
    %166 = vector.shape_cast %165 : vector<1x1x32xf32> to vector<1x32xf32>
    %167 = vector.broadcast %166 : vector<1x32xf32> to vector<24x32xf32>
    %168 = arith.addf %164, %167 : vector<24x32xf32>
    %c1 = arith.constant 1 : index
    %c0_71 = arith.constant 0 : index
    %c0_72 = arith.constant 0 : index
    %169 = vector.load %arg3[%c1, %c0_71, %c0_72] : memref<2x32x96xbf16, #tpu.memory_space<vmem>>, vector<1x32x96xbf16>
    %170 = vector.shape_cast %169 : vector<1x32x96xbf16> to vector<32x96xbf16>
    %c1_73 = arith.constant 1 : index
    %c0_74 = arith.constant 0 : index
    %c0_75 = arith.constant 0 : index
    %171 = vector.load %arg5[%c1_73, %c0_74, %c0_75] : memref<2x32x32xbf16, #tpu.memory_space<vmem>>, vector<1x32x32xbf16>
    %172 = vector.shape_cast %171 : vector<1x32x32xbf16> to vector<32x32xbf16>
    %c1_76 = arith.constant 1 : index
    %c0_77 = arith.constant 0 : index
    %c0_78 = arith.constant 0 : index
    %173 = vector.load %arg9[%c1_76, %c0_77, %c0_78] : memref<2x32x64xbf16, #tpu.memory_space<vmem>>, vector<1x32x64xbf16>
    %174 = vector.shape_cast %173 : vector<1x32x64xbf16> to vector<32x64xbf16>
    %c1_79 = arith.constant 1 : index
    %c0_80 = arith.constant 0 : index
    %c0_81 = arith.constant 0 : index
    %175 = vector.load %arg11[%c1_79, %c0_80, %c0_81] : memref<2x64x32xbf16, #tpu.memory_space<vmem>>, vector<1x64x32xbf16>
    %176 = vector.shape_cast %175 : vector<1x64x32xbf16> to vector<64x32xbf16>
    %c1_82 = arith.constant 1 : index
    %c0_83 = arith.constant 0 : index
    %c0_84 = arith.constant 0 : index
    %177 = vector.load %arg1[%c1_82, %c0_83, %c0_84] : memref<2x1x32xf32, #tpu.memory_space<vmem>>, vector<1x1x32xf32>
    %178 = vector.shape_cast %177 : vector<1x1x32xf32> to vector<1x32xf32>
    %c1_85 = arith.constant 1 : index
    %c0_86 = arith.constant 0 : index
    %c0_87 = arith.constant 0 : index
    %179 = vector.load %arg2[%c1_85, %c0_86, %c0_87] : memref<2x1x32xf32, #tpu.memory_space<vmem>>, vector<1x1x32xf32>
    %180 = vector.shape_cast %179 : vector<1x1x32xf32> to vector<1x32xf32>
    %cst_88 = arith.constant dense<0.000000e+00> : vector<24xf32>
    %181 = vector.multi_reduction <add>, %168, %cst_88 [1] : vector<24x32xf32> to vector<24xf32>
    %182 = vector.shape_cast %181 : vector<24xf32> to vector<24x1xf32>
    %cst_89 = arith.constant 3.200000e+01 : f32
    %183 = vector.broadcast %cst_89 : f32 to vector<24x1xf32>
    %184 = arith.divf %182, %183 : vector<24x1xf32>
    %185 = vector.broadcast %184 : vector<24x1xf32> to vector<24x32xf32>
    %186 = arith.subf %168, %185 : vector<24x32xf32>
    %187 = arith.mulf %186, %186 : vector<24x32xf32>
    %cst_90 = arith.constant dense<0.000000e+00> : vector<24xf32>
    %188 = vector.multi_reduction <add>, %187, %cst_90 [1] : vector<24x32xf32> to vector<24xf32>
    %189 = vector.shape_cast %188 : vector<24xf32> to vector<24x1xf32>
    %cst_91 = arith.constant 3.200000e+01 : f32
    %190 = vector.broadcast %cst_91 : f32 to vector<24x1xf32>
    %191 = arith.divf %189, %190 : vector<24x1xf32>
    %192 = vector.broadcast %184 : vector<24x1xf32> to vector<24x32xf32>
    %193 = arith.subf %168, %192 : vector<24x32xf32>
    %cst_92 = arith.constant 9.99999997E-7 : f32
    %194 = vector.broadcast %cst_92 : f32 to vector<24x1xf32>
    %195 = arith.addf %191, %194 : vector<24x1xf32>
    %196 = math.rsqrt %195 : vector<24x1xf32>
    %197 = vector.broadcast %196 : vector<24x1xf32> to vector<24x32xf32>
    %198 = arith.mulf %193, %197 : vector<24x32xf32>
    %199 = vector.broadcast %178 : vector<1x32xf32> to vector<24x32xf32>
    %200 = arith.mulf %198, %199 : vector<24x32xf32>
    %201 = vector.broadcast %180 : vector<1x32xf32> to vector<24x32xf32>
    %202 = arith.addf %200, %201 : vector<24x32xf32>
    %203 = arith.truncf %202 : vector<24x32xf32> to vector<24x32xbf16>
    %cst_93 = arith.constant dense<0.000000e+00> : vector<24x96xf32>
    %204 = tpu.matmul %203, %170, %cst_93 {dimension_numbers = #tpu.dot_dimension_numbers<[1], [0], [0], [1], [0, 0, 1, 1], [], []>} : vector<24x32xbf16>, vector<32x96xbf16>, vector<24x96xf32> -> vector<24x96xf32>
    %c1_94 = arith.constant 1 : index
    %c0_95 = arith.constant 0 : index
    %c0_96 = arith.constant 0 : index
    %205 = vector.load %arg4[%c1_94, %c0_95, %c0_96] : memref<2x1x96xf32, #tpu.memory_space<vmem>>, vector<1x1x96xf32>
    %206 = vector.shape_cast %205 : vector<1x1x96xf32> to vector<1x96xf32>
    %207 = vector.broadcast %206 : vector<1x96xf32> to vector<24x96xf32>
    %208 = arith.addf %204, %207 : vector<24x96xf32>
    %209 = vector.extract_strided_slice %208 {offsets = [0, 0], sizes = [24, 16], strides = [1, 1]} : vector<24x96xf32> to vector<24x16xf32>
    %210 = vector.extract_strided_slice %208 {offsets = [0, 32], sizes = [24, 16], strides = [1, 1]} : vector<24x96xf32> to vector<24x16xf32>
    %211 = vector.extract_strided_slice %208 {offsets = [0, 64], sizes = [24, 16], strides = [1, 1]} : vector<24x96xf32> to vector<24x16xf32>
    %212 = arith.truncf %209 : vector<24x16xf32> to vector<24x16xbf16>
    %213 = arith.truncf %210 : vector<24x16xf32> to vector<24x16xbf16>
    %214 = tpu.transpose %213, [1, 0] : vector<24x16xbf16> -> vector<16x24xbf16>
    %cst_97 = arith.constant dense<0.000000e+00> : vector<24x24xf32>
    %215 = tpu.matmul %212, %214, %cst_97 {dimension_numbers = #tpu.dot_dimension_numbers<[1], [0], [0], [1], [0, 0, 1, 1], [], []>} : vector<24x16xbf16>, vector<16x24xbf16>, vector<24x24xf32> -> vector<24x24xf32>
    %cst_98 = arith.constant 2.500000e-01 : f32
    %216 = vector.broadcast %cst_98 : f32 to vector<24x24xf32>
    %217 = arith.mulf %215, %216 : vector<24x24xf32>
    %218 = arith.addf %217, %18 : vector<24x24xf32>
    %cst_99 = arith.constant dense<0xFF800000> : vector<24xf32>
    %219 = vector.multi_reduction <maximumf>, %218, %cst_99 [1] : vector<24x24xf32> to vector<24xf32>
    %220 = vector.shape_cast %219 : vector<24xf32> to vector<24x1xf32>
    %221 = vector.broadcast %220 : vector<24x1xf32> to vector<24x24xf32>
    %222 = arith.subf %218, %221 : vector<24x24xf32>
    %223 = math.exp %222 : vector<24x24xf32>
    %cst_100 = arith.constant dense<0.000000e+00> : vector<24xf32>
    %224 = vector.multi_reduction <add>, %223, %cst_100 [1] : vector<24x24xf32> to vector<24xf32>
    %225 = vector.shape_cast %224 : vector<24xf32> to vector<24x1xf32>
    %226 = tpu.reciprocal %225 {approx = true} : vector<24x1xf32> -> vector<24x1xf32>
    %227 = vector.broadcast %226 : vector<24x1xf32> to vector<24x24xf32>
    %228 = arith.mulf %223, %227 : vector<24x24xf32>
    %229 = arith.truncf %228 : vector<24x24xf32> to vector<24x24xbf16>
    %230 = arith.truncf %211 : vector<24x16xf32> to vector<24x16xbf16>
    %cst_101 = arith.constant dense<0.000000e+00> : vector<24x16xf32>
    %231 = tpu.matmul %229, %230, %cst_101 {dimension_numbers = #tpu.dot_dimension_numbers<[1], [0], [0], [1], [0, 0, 1, 1], [], []>} : vector<24x24xbf16>, vector<24x16xbf16>, vector<24x16xf32> -> vector<24x16xf32>
    %232 = arith.truncf %231 : vector<24x16xf32> to vector<24x16xbf16>
    %233 = vector.extract_strided_slice %172 {offsets = [0, 0], sizes = [16, 32], strides = [1, 1]} : vector<32x32xbf16> to vector<16x32xbf16>
    %cst_102 = arith.constant dense<0.000000e+00> : vector<24x32xf32>
    %234 = tpu.matmul %232, %233, %cst_102 {dimension_numbers = #tpu.dot_dimension_numbers<[1], [0], [0], [1], [0, 0, 1, 1], [], []>} : vector<24x16xbf16>, vector<16x32xbf16>, vector<24x32xf32> -> vector<24x32xf32>
    %235 = arith.addf %168, %234 : vector<24x32xf32>
    %236 = vector.extract_strided_slice %208 {offsets = [0, 16], sizes = [24, 16], strides = [1, 1]} : vector<24x96xf32> to vector<24x16xf32>
    %237 = vector.extract_strided_slice %208 {offsets = [0, 48], sizes = [24, 16], strides = [1, 1]} : vector<24x96xf32> to vector<24x16xf32>
    %238 = vector.extract_strided_slice %208 {offsets = [0, 80], sizes = [24, 16], strides = [1, 1]} : vector<24x96xf32> to vector<24x16xf32>
    %239 = arith.truncf %236 : vector<24x16xf32> to vector<24x16xbf16>
    %240 = arith.truncf %237 : vector<24x16xf32> to vector<24x16xbf16>
    %241 = tpu.transpose %240, [1, 0] : vector<24x16xbf16> -> vector<16x24xbf16>
    %cst_103 = arith.constant dense<0.000000e+00> : vector<24x24xf32>
    %242 = tpu.matmul %239, %241, %cst_103 {dimension_numbers = #tpu.dot_dimension_numbers<[1], [0], [0], [1], [0, 0, 1, 1], [], []>} : vector<24x16xbf16>, vector<16x24xbf16>, vector<24x24xf32> -> vector<24x24xf32>
    %cst_104 = arith.constant 2.500000e-01 : f32
    %243 = vector.broadcast %cst_104 : f32 to vector<24x24xf32>
    %244 = arith.mulf %242, %243 : vector<24x24xf32>
    %245 = arith.addf %244, %18 : vector<24x24xf32>
    %cst_105 = arith.constant dense<0xFF800000> : vector<24xf32>
    %246 = vector.multi_reduction <maximumf>, %245, %cst_105 [1] : vector<24x24xf32> to vector<24xf32>
    %247 = vector.shape_cast %246 : vector<24xf32> to vector<24x1xf32>
    %248 = vector.broadcast %247 : vector<24x1xf32> to vector<24x24xf32>
    %249 = arith.subf %245, %248 : vector<24x24xf32>
    %250 = math.exp %249 : vector<24x24xf32>
    %cst_106 = arith.constant dense<0.000000e+00> : vector<24xf32>
    %251 = vector.multi_reduction <add>, %250, %cst_106 [1] : vector<24x24xf32> to vector<24xf32>
    %252 = vector.shape_cast %251 : vector<24xf32> to vector<24x1xf32>
    %253 = tpu.reciprocal %252 {approx = true} : vector<24x1xf32> -> vector<24x1xf32>
    %254 = vector.broadcast %253 : vector<24x1xf32> to vector<24x24xf32>
    %255 = arith.mulf %250, %254 : vector<24x24xf32>
    %256 = arith.truncf %255 : vector<24x24xf32> to vector<24x24xbf16>
    %257 = arith.truncf %238 : vector<24x16xf32> to vector<24x16xbf16>
    %cst_107 = arith.constant dense<0.000000e+00> : vector<24x16xf32>
    %258 = tpu.matmul %256, %257, %cst_107 {dimension_numbers = #tpu.dot_dimension_numbers<[1], [0], [0], [1], [0, 0, 1, 1], [], []>} : vector<24x24xbf16>, vector<24x16xbf16>, vector<24x16xf32> -> vector<24x16xf32>
    %259 = arith.truncf %258 : vector<24x16xf32> to vector<24x16xbf16>
    %260 = vector.extract_strided_slice %172 {offsets = [16, 0], sizes = [16, 32], strides = [1, 1]} : vector<32x32xbf16> to vector<16x32xbf16>
    %cst_108 = arith.constant dense<0.000000e+00> : vector<24x32xf32>
    %261 = tpu.matmul %259, %260, %cst_108 {dimension_numbers = #tpu.dot_dimension_numbers<[1], [0], [0], [1], [0, 0, 1, 1], [], []>} : vector<24x16xbf16>, vector<16x32xbf16>, vector<24x32xf32> -> vector<24x32xf32>
    %262 = arith.addf %235, %261 : vector<24x32xf32>
    %c1_109 = arith.constant 1 : index
    %c0_110 = arith.constant 0 : index
    %c0_111 = arith.constant 0 : index
    %263 = vector.load %arg6[%c1_109, %c0_110, %c0_111] : memref<2x1x32xf32, #tpu.memory_space<vmem>>, vector<1x1x32xf32>
    %264 = vector.shape_cast %263 : vector<1x1x32xf32> to vector<1x32xf32>
    %265 = vector.broadcast %264 : vector<1x32xf32> to vector<24x32xf32>
    %266 = arith.addf %262, %265 : vector<24x32xf32>
    %c1_112 = arith.constant 1 : index
    %c0_113 = arith.constant 0 : index
    %c0_114 = arith.constant 0 : index
    %267 = vector.load %arg7[%c1_112, %c0_113, %c0_114] : memref<2x1x32xf32, #tpu.memory_space<vmem>>, vector<1x1x32xf32>
    %268 = vector.shape_cast %267 : vector<1x1x32xf32> to vector<1x32xf32>
    %c1_115 = arith.constant 1 : index
    %c0_116 = arith.constant 0 : index
    %c0_117 = arith.constant 0 : index
    %269 = vector.load %arg8[%c1_115, %c0_116, %c0_117] : memref<2x1x32xf32, #tpu.memory_space<vmem>>, vector<1x1x32xf32>
    %270 = vector.shape_cast %269 : vector<1x1x32xf32> to vector<1x32xf32>
    %cst_118 = arith.constant dense<0.000000e+00> : vector<24xf32>
    %271 = vector.multi_reduction <add>, %266, %cst_118 [1] : vector<24x32xf32> to vector<24xf32>
    %272 = vector.shape_cast %271 : vector<24xf32> to vector<24x1xf32>
    %cst_119 = arith.constant 3.200000e+01 : f32
    %273 = vector.broadcast %cst_119 : f32 to vector<24x1xf32>
    %274 = arith.divf %272, %273 : vector<24x1xf32>
    %275 = vector.broadcast %274 : vector<24x1xf32> to vector<24x32xf32>
    %276 = arith.subf %266, %275 : vector<24x32xf32>
    %277 = arith.mulf %276, %276 : vector<24x32xf32>
    %cst_120 = arith.constant dense<0.000000e+00> : vector<24xf32>
    %278 = vector.multi_reduction <add>, %277, %cst_120 [1] : vector<24x32xf32> to vector<24xf32>
    %279 = vector.shape_cast %278 : vector<24xf32> to vector<24x1xf32>
    %cst_121 = arith.constant 3.200000e+01 : f32
    %280 = vector.broadcast %cst_121 : f32 to vector<24x1xf32>
    %281 = arith.divf %279, %280 : vector<24x1xf32>
    %282 = vector.broadcast %274 : vector<24x1xf32> to vector<24x32xf32>
    %283 = arith.subf %266, %282 : vector<24x32xf32>
    %cst_122 = arith.constant 9.99999997E-7 : f32
    %284 = vector.broadcast %cst_122 : f32 to vector<24x1xf32>
    %285 = arith.addf %281, %284 : vector<24x1xf32>
    %286 = math.rsqrt %285 : vector<24x1xf32>
    %287 = vector.broadcast %286 : vector<24x1xf32> to vector<24x32xf32>
    %288 = arith.mulf %283, %287 : vector<24x32xf32>
    %289 = vector.broadcast %268 : vector<1x32xf32> to vector<24x32xf32>
    %290 = arith.mulf %288, %289 : vector<24x32xf32>
    %291 = vector.broadcast %270 : vector<1x32xf32> to vector<24x32xf32>
    %292 = arith.addf %290, %291 : vector<24x32xf32>
    %293 = arith.truncf %292 : vector<24x32xf32> to vector<24x32xbf16>
    %cst_123 = arith.constant dense<0.000000e+00> : vector<24x64xf32>
    %294 = tpu.matmul %293, %174, %cst_123 {dimension_numbers = #tpu.dot_dimension_numbers<[1], [0], [0], [1], [0, 0, 1, 1], [], []>} : vector<24x32xbf16>, vector<32x64xbf16>, vector<24x64xf32> -> vector<24x64xf32>
    %c1_124 = arith.constant 1 : index
    %c0_125 = arith.constant 0 : index
    %c0_126 = arith.constant 0 : index
    %295 = vector.load %arg10[%c1_124, %c0_125, %c0_126] : memref<2x1x64xf32, #tpu.memory_space<vmem>>, vector<1x1x64xf32>
    %296 = vector.shape_cast %295 : vector<1x1x64xf32> to vector<1x64xf32>
    %297 = vector.broadcast %296 : vector<1x64xf32> to vector<24x64xf32>
    %298 = arith.addf %294, %297 : vector<24x64xf32>
    %299 = arith.mulf %298, %298 : vector<24x64xf32>
    %300 = arith.mulf %298, %299 : vector<24x64xf32>
    %cst_127 = arith.constant 4.471500e-02 : f32
    %301 = vector.broadcast %cst_127 : f32 to vector<24x64xf32>
    %302 = arith.mulf %301, %300 : vector<24x64xf32>
    %303 = arith.addf %298, %302 : vector<24x64xf32>
    %cst_128 = arith.constant 0.797884583 : f32
    %304 = vector.broadcast %cst_128 : f32 to vector<24x64xf32>
    %305 = arith.mulf %304, %303 : vector<24x64xf32>
    %306 = math.tanh %305 : vector<24x64xf32>
    %cst_129 = arith.constant 1.000000e+00 : f32
    %307 = vector.broadcast %cst_129 : f32 to vector<24x64xf32>
    %308 = arith.addf %307, %306 : vector<24x64xf32>
    %cst_130 = arith.constant 5.000000e-01 : f32
    %309 = vector.broadcast %cst_130 : f32 to vector<24x64xf32>
    %310 = arith.mulf %309, %308 : vector<24x64xf32>
    %311 = arith.mulf %298, %310 : vector<24x64xf32>
    %312 = arith.truncf %311 : vector<24x64xf32> to vector<24x64xbf16>
    %cst_131 = arith.constant dense<0.000000e+00> : vector<24x32xf32>
    %313 = tpu.matmul %312, %176, %cst_131 {dimension_numbers = #tpu.dot_dimension_numbers<[1], [0], [0], [1], [0, 0, 1, 1], [], []>} : vector<24x64xbf16>, vector<64x32xbf16>, vector<24x32xf32> -> vector<24x32xf32>
    %314 = arith.addf %266, %313 : vector<24x32xf32>
    %c1_132 = arith.constant 1 : index
    %c0_133 = arith.constant 0 : index
    %c0_134 = arith.constant 0 : index
    %315 = vector.load %arg12[%c1_132, %c0_133, %c0_134] : memref<2x1x32xf32, #tpu.memory_space<vmem>>, vector<1x1x32xf32>
    %316 = vector.shape_cast %315 : vector<1x1x32xf32> to vector<1x32xf32>
    %317 = vector.broadcast %316 : vector<1x32xf32> to vector<24x32xf32>
    %318 = arith.addf %314, %317 : vector<24x32xf32>
    %319 = arith.truncf %318 : vector<24x32xf32> to vector<24x32xbf16>
    %c0_135 = arith.constant 0 : index
    %c0_136 = arith.constant 0 : index
    %320 = vector.load %arg13[%c0_135, %c0_136] : memref<32x128xbf16, #tpu.memory_space<vmem>>, vector<32x128xbf16>
    %cst_137 = arith.constant dense<0.000000e+00> : vector<24x128xf32>
    %321 = tpu.matmul %319, %320, %cst_137 {dimension_numbers = #tpu.dot_dimension_numbers<[1], [0], [0], [1], [0, 0, 1, 1], [], []>} : vector<24x32xbf16>, vector<32x128xbf16>, vector<24x128xf32> -> vector<24x128xf32>
    %c0_138 = arith.constant 0 : index
    %c0_139 = arith.constant 0 : index
    %322 = vector.load %arg14[%c0_138, %c0_139] : memref<1x128xf32, #tpu.memory_space<vmem>>, vector<1x128xf32>
    %323 = vector.broadcast %322 : vector<1x128xf32> to vector<24x128xf32>
    %324 = arith.addf %321, %323 : vector<24x128xf32>
    %c0_140 = arith.constant 0 : index
    %c0_141 = arith.constant 0 : index
    %325 = vector.load %arg15[%c0_140, %c0_141] : memref<96x6xf32, #tpu.memory_space<vmem>>, vector<96x6xf32>
    %326 = vector.extract_strided_slice %324 {offsets = [0, 0], sizes = [6, 128], strides = [1, 1]} : vector<24x128xf32> to vector<6x128xf32>
    %cst_142 = arith.constant dense<0.000000e+00> : vector<96x128xf32>
    %327 = tpu.matmul %325, %326, %cst_142 {dimension_numbers = #tpu.dot_dimension_numbers<[1], [0], [0], [1], [0, 0, 1, 1], [], []>} : vector<96x6xf32>, vector<6x128xf32>, vector<96x128xf32> -> vector<96x128xf32>
    %c0_143 = arith.constant 0 : index
    %c0_144 = arith.constant 0 : index
    %328 = vector.load %arg16[%c0_143, %c0_144] : memref<384x128xf32, #tpu.memory_space<vmem>>, vector<96x128xf32>
    tpu.vector_store %arg16[%c0_143, %c0_144], %327 {strides = array<i32>} : memref<384x128xf32, #tpu.memory_space<vmem>>, vector<96x128xf32>,
    %329 = vector.extract_strided_slice %324 {offsets = [6, 0], sizes = [6, 128], strides = [1, 1]} : vector<24x128xf32> to vector<6x128xf32>
    %cst_145 = arith.constant dense<0.000000e+00> : vector<96x128xf32>
    %330 = tpu.matmul %325, %329, %cst_145 {dimension_numbers = #tpu.dot_dimension_numbers<[1], [0], [0], [1], [0, 0, 1, 1], [], []>} : vector<96x6xf32>, vector<6x128xf32>, vector<96x128xf32> -> vector<96x128xf32>
    %c96 = arith.constant 96 : index
    %c0_146 = arith.constant 0 : index
    %331 = vector.load %arg16[%c96, %c0_146] : memref<384x128xf32, #tpu.memory_space<vmem>>, vector<96x128xf32>
    tpu.vector_store %arg16[%c96, %c0_146], %330 {strides = array<i32>} : memref<384x128xf32, #tpu.memory_space<vmem>>, vector<96x128xf32>,
    %332 = vector.extract_strided_slice %324 {offsets = [12, 0], sizes = [6, 128], strides = [1, 1]} : vector<24x128xf32> to vector<6x128xf32>
    %cst_147 = arith.constant dense<0.000000e+00> : vector<96x128xf32>
    %333 = tpu.matmul %325, %332, %cst_147 {dimension_numbers = #tpu.dot_dimension_numbers<[1], [0], [0], [1], [0, 0, 1, 1], [], []>} : vector<96x6xf32>, vector<6x128xf32>, vector<96x128xf32> -> vector<96x128xf32>
    %c192 = arith.constant 192 : index
    %c0_148 = arith.constant 0 : index
    %334 = vector.load %arg16[%c192, %c0_148] : memref<384x128xf32, #tpu.memory_space<vmem>>, vector<96x128xf32>
    tpu.vector_store %arg16[%c192, %c0_148], %333 {strides = array<i32>} : memref<384x128xf32, #tpu.memory_space<vmem>>, vector<96x128xf32>,
    %335 = vector.extract_strided_slice %324 {offsets = [18, 0], sizes = [6, 128], strides = [1, 1]} : vector<24x128xf32> to vector<6x128xf32>
    %cst_149 = arith.constant dense<0.000000e+00> : vector<96x128xf32>
    %336 = tpu.matmul %325, %335, %cst_149 {dimension_numbers = #tpu.dot_dimension_numbers<[1], [0], [0], [1], [0, 0, 1, 1], [], []>} : vector<96x6xf32>, vector<6x128xf32>, vector<96x128xf32> -> vector<96x128xf32>
    %c288 = arith.constant 288 : index
    %c0_150 = arith.constant 0 : index
    %337 = vector.load %arg16[%c288, %c0_150] : memref<384x128xf32, #tpu.memory_space<vmem>>, vector<96x128xf32>
    tpu.vector_store %arg16[%c288, %c0_150], %336 {strides = array<i32>} : memref<384x128xf32, #tpu.memory_space<vmem>>, vector<96x128xf32>,
    return
  }
}

</mosaic_0001>

<llo_original>
// kernel: heatmap_infer.1
$region0: #{heatmap_infer.1}
  #allocation0 [shape = 'u32[]', space=smem, size = 0x4, offset = 0x4, fixed_abs, tag = 'smem constant byte address 0x4 - core index']
  #allocation1 [shape = 'u32[144,128]{1,0:T(1,128)}', space=vmem, size = 0x12000, scoped, tag = 'internal scratch']
  %s0 = inlined_call_operand.vmem [shape: f32[24,32], index: 0, kind: input, shape index: {}]
  %s1 = inlined_call_operand.vmem [shape: f32[2,1,32], index: 1, kind: input, shape index: {}]
  %s2 = inlined_call_operand.vmem [shape: f32[2,1,32], index: 2, kind: input, shape index: {}]
  %s3 = inlined_call_operand.vmem [shape: bf16[2,32,96], index: 3, kind: input, shape index: {}]
  %s4 = inlined_call_operand.vmem [shape: f32[2,1,96], index: 4, kind: input, shape index: {}]
  %s5 = inlined_call_operand.vmem [shape: bf16[2,32,32], index: 5, kind: input, shape index: {}]
  %s6 = inlined_call_operand.vmem [shape: f32[2,1,32], index: 6, kind: input, shape index: {}]
  %s7 = inlined_call_operand.vmem [shape: f32[2,1,32], index: 7, kind: input, shape index: {}]
  %s8 = inlined_call_operand.vmem [shape: f32[2,1,32], index: 8, kind: input, shape index: {}]
  %s9 = inlined_call_operand.vmem [shape: bf16[2,32,64], index: 9, kind: input, shape index: {}]
  %s10 = inlined_call_operand.vmem [shape: f32[2,1,64], index: 10, kind: input, shape index: {}]
  %s11 = inlined_call_operand.vmem [shape: bf16[2,64,32], index: 11, kind: input, shape index: {}]
  %s12 = inlined_call_operand.vmem [shape: f32[2,1,32], index: 12, kind: input, shape index: {}]
  %s13 = inlined_call_operand.vmem [shape: bf16[32,128], index: 13, kind: input, shape index: {}]
  %s14 = inlined_call_operand.vmem [shape: f32[1,128], index: 14, kind: input, shape index: {}]
  %s15 = inlined_call_operand.vmem [shape: f32[96,6], index: 15, kind: input, shape index: {}]
  %s16 = inlined_call_operand.vmem [shape: f32[384,128], index: 16, kind: output, shape index: {}]
  %s17 = sld [smem:[#allocation0]]
  $region74: #{heatmap_infer.1} parent=0
    _
  %s19 = ssub.s32 1, %s17
  %s20 = scalar_select 0, %s19, %s17
  // Predicated region
  $region2: #{heatmap_infer.1} parent=0 // pred_check
    _
  $region3: #{heatmap_infer.1} parent=0 // pred_check_branch
    %22 = sbr.rel (0) target = $region5
  $region4: #{heatmap_infer.1} parent=0 // pred_region
    _
  $region5: #{heatmap_infer.1} parent=0 // pred_fallthru
    _
  // Predicated region
  $region6: #{heatmap_infer.1} parent=0 // pred_check
    _
  $region7: #{heatmap_infer.1} parent=0 // pred_check_branch
    %24 = sbr.rel (0) target = $region9
  $region8: #{heatmap_infer.1} parent=0 // pred_region
    _
  $region9: #{heatmap_infer.1} parent=0 // pred_fallthru
    _
  // Predicated region
  $region10: #{heatmap_infer.1} parent=0 // pred_check
    _
  $region11: #{heatmap_infer.1} parent=0 // pred_check_branch
    %26 = sbr.rel (0) target = $region13
  $region12: #{heatmap_infer.1} parent=0 // pred_region
    _
  $region13: #{heatmap_infer.1} parent=0 // pred_fallthru
    _
  // Predicated region
  $region14: #{heatmap_infer.1} parent=0 // pred_check
    _
  $region15: #{heatmap_infer.1} parent=0 // pred_check_branch
    %28 = sbr.rel (0) target = $region17
  $region16: #{heatmap_infer.1} parent=0 // pred_region
    _
  $region17: #{heatmap_infer.1} parent=0 // pred_fallthru
    _
  // Predicated region
  $region18: #{heatmap_infer.1} parent=0 // pred_check
    _
  $region19: #{heatmap_infer.1} parent=0 // pred_check_branch
    %30 = sbr.rel (0) target = $region21
  $region20: #{heatmap_infer.1} parent=0 // pred_region
    _
  $region21: #{heatmap_infer.1} parent=0 // pred_fallthru
    _
  // Predicated region
  $region22: #{heatmap_infer.1} parent=0 // pred_check
    _
  $region23: #{heatmap_infer.1} parent=0 // pred_check_branch
    %32 = sbr.rel (0) target = $region25
  $region24: #{heatmap_infer.1} parent=0 // pred_region
    _
  $region25: #{heatmap_infer.1} parent=0 // pred_fallthru
    _
  // Predicated region
  $region26: #{heatmap_infer.1} parent=0 // pred_check
    _
  $region27: #{heatmap_infer.1} parent=0 // pred_check_branch
    %34 = sbr.rel (0) target = $region29
  $region28: #{heatmap_infer.1} parent=0 // pred_region
    _
  $region29: #{heatmap_infer.1} parent=0 // pred_fallthru
    _
  // Predicated region
  $region30: #{heatmap_infer.1} parent=0 // pred_check
    _
  $region31: #{heatmap_infer.1} parent=0 // pred_check_branch
    %36 = sbr.rel (0) target = $region33
  $region32: #{heatmap_infer.1} parent=0 // pred_region
    _
  $region33: #{heatmap_infer.1} parent=0 // pred_fallthru
    _
  // Predicated region
  $region34: #{heatmap_infer.1} parent=0 // pred_check
    _
  $region35: #{heatmap_infer.1} parent=0 // pred_check_branch
    %38 = sbr.rel (0) target = $region37
  $region36: #{heatmap_infer.1} parent=0 // pred_region
    _
  $region37: #{heatmap_infer.1} parent=0 // pred_fallthru
    _
  // Predicated region
  $region38: #{heatmap_infer.1} parent=0 // pred_check
    _
  $region39: #{heatmap_infer.1} parent=0 // pred_check_branch
    %40 = sbr.rel (0) target = $region41
  $region40: #{heatmap_infer.1} parent=0 // pred_region
    _
  $region41: #{heatmap_infer.1} parent=0 // pred_fallthru
    _
  // Predicated region
  $region42: #{heatmap_infer.1} parent=0 // pred_check
    _
  $region43: #{heatmap_infer.1} parent=0 // pred_check_branch
    %42 = sbr.rel (0) target = $region45
  $region44: #{heatmap_infer.1} parent=0 // pred_region
    _
  $region45: #{heatmap_infer.1} parent=0 // pred_fallthru
    _
  // Predicated region
  $region46: #{heatmap_infer.1} parent=0 // pred_check
    _
  $region47: #{heatmap_infer.1} parent=0 // pred_check_branch
    %44 = sbr.rel (0) target = $region49
  $region48: #{heatmap_infer.1} parent=0 // pred_region
    _
  $region49: #{heatmap_infer.1} parent=0 // pred_fallthru
    _
  // Predicated region
  $region50: #{heatmap_infer.1} parent=0 // pred_check
    _
  $region51: #{heatmap_infer.1} parent=0 // pred_check_branch
    %46 = sbr.rel (0) target = $region53
  $region52: #{heatmap_infer.1} parent=0 // pred_region
    _
  $region53: #{heatmap_infer.1} parent=0 // pred_fallthru
    _
  // Predicated region
  $region54: #{heatmap_infer.1} parent=0 // pred_check
    _
  $region55: #{heatmap_infer.1} parent=0 // pred_check_branch
    %48 = sbr.rel (0) target = $region57
  $region56: #{heatmap_infer.1} parent=0 // pred_region
    _
  $region57: #{heatmap_infer.1} parent=0 // pred_fallthru
    _
  // Predicated region
  $region58: #{heatmap_infer.1} parent=0 // pred_check
    _
  $region59: #{heatmap_infer.1} parent=0 // pred_check_branch
    %50 = sbr.rel (0) target = $region61
  $region60: #{heatmap_infer.1} parent=0 // pred_region
    _
  $region61: #{heatmap_infer.1} parent=0 // pred_fallthru
    _
  // Predicated region
  $region62: #{heatmap_infer.1} parent=0 // pred_check
    _
  $region63: #{heatmap_infer.1} parent=0 // pred_check_branch
    %52 = sbr.rel (0) target = $region65
  $region64: #{heatmap_infer.1} parent=0 // pred_region
    _
  $region65: #{heatmap_infer.1} parent=0 // pred_fallthru
    _
  %v54 = vld [vmem:[%s0] sm:$0xff]
  %v55 = vld [vmem:[%s0 + $0x8] sm:$0xff]
  %v56 = vld [vmem:[%s0 + $0x10] sm:$0xff]
  %v57 = vlaneseq
  %v58 = vshrl.u32 %v57, 7
  %v59 = vadd.s32 %v58, 8
  %v60 = vadd.s32 %v58, 16
  %v61 = vcvt.s32.f32 %v58
  %v62 = vcvt.s32.f32 %v59
  %v63 = vcvt.s32.f32 %v60
  %v64 = vadd.f32 %v61, 0.5
  %v65 = vadd.f32 %v62, 0.5
  %v66 = vadd.f32 %v63, 0.5
  %v67 = vmul.f32 %v64, 0.16666667
  %v68 = vmul.f32 %v65, 0.16666667
  %v69 = vmul.f32 %v66, 0.16666667
  %v70 = vfloor.f32 %v67
  %v71 = vfloor.f32 %v68
  %v72 = vfloor.f32 %v69
  %v73 = vlaneseq
  %v74 = vand.u32 %v73, 127
  %v75 = vcvt.s32.f32 %v74
  %v76 = vadd.f32 %v75, 0.5
  %v77 = vmul.f32 %v76, 0.16666667
  %v78 = vfloor.f32 %v77
  %vm79 = vcmp.eq.f32.partialorder %v70, %v78
  %vm80 = vcmp.eq.f32.partialorder %v71, %v78
  %vm81 = vcmp.eq.f32.partialorder %v72, %v78
  %v82 = vsel %vm79, 0.0, -1e+30
  %v83 = vsel %vm80, 0.0, -1e+30
  %v84 = vsel %vm81, 0.0, -1e+30
  %v85 = vld [vmem:[%s3] sm:$0xf]
  %v86 = vld [vmem:[%s3 + $0x4] sm:$0xf]
  %v87 = vld [vmem:[%s3 + $0x8] sm:$0xf]
  %v88 = vld [vmem:[%s3 + $0xc] sm:$0xf]
  %v89 = vld [vmem:[%s5] sm:$0xf]
  %v90 = vld [vmem:[%s5 + $0x4] sm:$0xf]
  %v91 = vld [vmem:[%s5 + $0x8] sm:$0xf]
  %v92 = vld [vmem:[%s5 + $0xc] sm:$0xf]
  %v93 = vld [vmem:[%s9] sm:$0xf]
  %v94 = vld [vmem:[%s9 + $0x4] sm:$0xf]
  %v95 = vld [vmem:[%s9 + $0x8] sm:$0xf]
  %v96 = vld [vmem:[%s9 + $0xc] sm:$0xf]
  %v97 = vld [vmem:[%s11] sm:$0xf]
  %v98 = vld [vmem:[%s11 + $0x4] sm:$0xf]
  %v99 = vld [vmem:[%s11 + $0x8] sm:$0xf]
  %v100 = vld [vmem:[%s11 + $0xc] sm:$0xf]
  %v101 = vld [vmem:[%s11 + $0x10] sm:$0xf]
  %v102 = vld [vmem:[%s11 + $0x14] sm:$0xf]
  %v103 = vld [vmem:[%s11 + $0x18] sm:$0xf]
  %v104 = vld [vmem:[%s11 + $0x1c] sm:$0xf]
  %v105 = vld [vmem:[%s1] sm:$0x1]
  %v106 = vld [vmem:[%s2] sm:$0x1]
  %vm107 = vcmask 261120
  %v108 = vsel %vm107, %v54, 0.0
  %109 = vadd.xlane.f32.xlu0 %v108
  %v110 = vpop.xlane.xlu0 %109
  %v111 = vsel %vm107, %v55, 0.0
  %112 = vadd.xlane.f32.xlu0 %v111
  %v113 = vpop.xlane.xlu0 %112
  %v114 = vsel %vm107, %v56, 0.0
  %115 = vadd.xlane.f32.xlu0 %v114
  %v116 = vpop.xlane.xlu0 %115
  %v117 = vrcp.pop 32.0
  %v118 = vmul.f32 %v110, %v117
  %v119 = vmul.f32 %v113, %v117
  %v120 = vmul.f32 %v116, %v117
  %v121 = vsub.f32 %v54, %v118
  %v122 = vsub.f32 %v55, %v119
  %v123 = vsub.f32 %v56, %v120
  %v124 = vmul.f32 %v121, %v121
  %v125 = vmul.f32 %v122, %v122
  %v126 = vmul.f32 %v123, %v123
  %v127 = vsel %vm107, %v124, 0.0
  %128 = vadd.xlane.f32.xlu0 %v127
  %v129 = vpop.xlane.xlu0 %128
  %v130 = vsel %vm107, %v125, 0.0
  %131 = vadd.xlane.f32.xlu0 %v130
  %v132 = vpop.xlane.xlu0 %131
  %v133 = vsel %vm107, %v126, 0.0
  %134 = vadd.xlane.f32.xlu0 %v133
  %v135 = vpop.xlane.xlu0 %134
  %v136 = vmul.f32 %v129, %v117
  %v137 = vmul.f32 %v132, %v117
  %v138 = vmul.f32 %v135, %v117
  %v139 = vadd.f32 %v136, 1e-06
  %v140 = vadd.f32 %v137, 1e-06
  %v141 = vadd.f32 %v138, 1e-06
  %v142 = vrsqrt.pop %v139
  %v143 = vrsqrt.pop %v140
  %v144 = vrsqrt.pop %v141
  %v145 = vmul.f32 %v121, %v142
  %v146 = vmul.f32 %v122, %v143
  %v147 = vmul.f32 %v123, %v144
  %v149 = vlaneseq
  %v150 = vshrl.u32 %v149, 7
  %v151 = vsub.s32 0, %v150
  %v152 = vrot.slane %v105, %v151
  %v154 = vmul.f32 %v145, %v152
  %v155 = vmul.f32 %v146, %v152
  %v156 = vmul.f32 %v147, %v152
  %v158 = vlaneseq
  %v159 = vshrl.u32 %v158, 7
  %v160 = vsub.s32 0, %v159
  %v161 = vrot.slane %v106, %v160
  %v163 = vadd.f32 %v154, %v161
  %v164 = vadd.f32 %v155, %v161
  %v165 = vadd.f32 %v156, %v161
  %v166 = vpack.c.bf16 %v164, %v163
  %v167 = vpack.c.bf16 %v165, %v165
  %v168 = vld [vmem:[%s4] sm:$0x1]
  %v170 = vlaneseq
  %v171 = vshrl.u32 %v170, 7
  %v172 = vsub.s32 0, %v171
  %v173 = vrot.slane %v168, %v172
  %v179 = vunpack.c.l.b16 %v85
  %v180 = vunpack.c.l.b16 %v86
  %v181 = vunpack.c.l.b16 %v87
  %v182 = vunpack.c.l.b16 %v88
  %v183 = vpack.c.b16 %v180, %v179
  %v184 = vpack.c.b16 %v182, %v181
  %v188 = vsel %vm107, %v166, 0
  %v191 = vsel %vm107, %v167, 0
  %193 = vmatprep.subr.bf16.mxu0 0
  %194 = vmatpush1.bf16.msra.mxu0 0
  %195 = vmatprep.subr.bf16.mxu0 0
  %196 = vmatpush1.bf16.msra.mxu0 0
  %197 = vmatprep.subr.bf16.mxu0 0
  %198 = vmatpush1.bf16.msra.mxu0 0
  %199 = vmatprep.subr.bf16.mxu0 0
  %200 = vmatpush1.bf16.msra.mxu0 0
  %201 = vmatprep.subr.bf16.mxu0 0
  %202 = vmatpush1.bf16.msra.mxu0 0
  %203 = vmatprep.subr.bf16.mxu0 0
  %204 = vmatpush1.bf16.msra.mxu0 0
  %205 = vmatprep.subr.bf16.mxu0 0
  %206 = vmatpush1.bf16.msra.mxu0 %v184
  %207 = vmatprep.subr.bf16.mxu0 0
  %208 = vmatpush1.bf16.msra.mxu0 %v183
  %209 = vmatprep.subr.bf16.mxu0 0
  %210 = vmatpush2.bf16.msra.mxu0 0
  %211 = vmatprep.subr.bf16.mxu0 0
  %212 = vmatpush2.bf16.msra.mxu0 0
  %213 = vmatprep.subr.bf16.mxu0 0
  %214 = vmatpush2.bf16.msra.mxu0 0
  %215 = vmatprep.subr.bf16.mxu0 0
  %216 = vmatpush2.bf16.msra.mxu0 0
  %217 = vmatprep.subr.bf16.mxu0 0
  %218 = vmatpush2.bf16.msra.mxu0 0
  %219 = vmatprep.subr.bf16.mxu0 0
  %220 = vmatpush2.bf16.msra.mxu0 0
  %221 = vmatprep.subr.bf16.mxu0 0
  %222 = vmatpush2.bf16.msra.mxu0 0
  %223 = vmatprep.subr.bf16.mxu0 0
  %224 = vmatpush2.bf16.msra.mxu0 0
  %225 = vmatprep.mubr.bf16.mxu0 0
  %226 = vmatmul.mubr.bf16.gmra.mxu0 %v188
  %v227 = vpop.f32.mrf.mxu0
  %v228 = vadd.f32 %v173, %v227
  %v229 = vpop.f32.mrf.mxu0
  %v230 = vpop.f32.mrf.mxu0
  %v231 = vadd.f32 %v173, %v230
  %v232 = vpop.f32.mrf.mxu0
  %233 = vmatprep.mubr.bf16.mxu0 0
  %234 = vmatmul.mubr.bf16.gmra.mxu0 %v191
  %v235 = vpop.f32.mrf.mxu0
  %v236 = vadd.f32 %v173, %v235
  %v237 = vpop.f32.mrf.mxu0
  %v238 = vpop.f32.mrf.mxu0
  %v239 = vpop.f32.mrf.mxu0
  %240 = vdwg.mxu0
  %v241 = vpack.c.bf16 %v231, %v228
  %v242 = vpack.c.bf16 %v236, %v236
  %245 = vrot.lane.b32.xlu0 %v241, 96
  %v246 = vpop.permute.xlu0 %245
  %247 = vrot.lane.b32.xlu0 %v242, 96
  %v248 = vpop.permute.xlu0 %247
  %vm249 = vcmask 130048
  %v251 = vsel %vm249, %v241, 0
  %v254 = vsel %vm249, %v242, 0
  %v257 = vsel %vm249, %v246, 0
  %v260 = vsel %vm249, %v248, 0
  %262 = vmatprep.subr.bf16.mxu0 0
  %263 = vmatpush1.bf16.xpose.msra.mxu0 0
  %264 = vmatprep.subr.bf16.mxu0 0
  %265 = vmatpush1.bf16.xpose.msra.mxu0 0
  %266 = vmatprep.subr.bf16.mxu0 0
  %267 = vmatpush1.bf16.xpose.msra.mxu0 0
  %268 = vmatprep.subr.bf16.mxu0 0
  %269 = vmatpush1.bf16.xpose.msra.mxu0 0
  %270 = vmatprep.subr.bf16.mxu0 0
  %271 = vmatpush1.bf16.xpose.msra.mxu0 0
  %272 = vmatprep.subr.bf16.mxu0 0
  %273 = vmatpush1.bf16.xpose.msra.mxu0 0
  %274 = vmatprep.subr.bf16.mxu0 0
  %275 = vmatpush1.bf16.xpose.msra.mxu0 %v260
  %276 = vmatprep.subr.bf16.mxu0 0
  %277 = vmatpush1.bf16.xpose.msra.mxu0 %v257
  %278 = vmatprep.subr.bf16.mxu0 0
  %279 = vmatpush2.bf16.xpose.msra.mxu0 0
  %280 = vmatprep.subr.bf16.mxu0 0
  %281 = vmatpush2.bf16.xpose.msra.mxu0 0
  %282 = vmatprep.subr.bf16.mxu0 0
  %283 = vmatpush2.bf16.xpose.msra.mxu0 0
  %284 = vmatprep.subr.bf16.mxu0 0
  %285 = vmatpush2.bf16.xpose.msra.mxu0 0
  %286 = vmatprep.subr.bf16.mxu0 0
  %287 = vmatpush2.bf16.xpose.msra.mxu0 0
  %288 = vmatprep.subr.bf16.mxu0 0
  %289 = vmatpush2.bf16.xpose.msra.mxu0 0
  %290 = vmatprep.subr.bf16.mxu0 0
  %291 = vmatpush2.bf16.xpose.msra.mxu0 0
  %292 = vmatprep.subr.bf16.mxu0 0
  %293 = vmatpush2.bf16.xpose.msra.mxu0 0
  %294 = vmatprep.mubr.bf16.mxu0 0
  %295 = vmatmul.mubr.bf16.gmra.mxu0 %v251
  %v296 = vpop.f32.mrf.mxu0
  %v297 = vadd.f32 0.0, %v296
  %v298 = vpop.f32.mrf.mxu0
  %v299 = vpop.f32.mrf.mxu0
  %v300 = vadd.f32 0.0, %v299
  %v301 = vpop.f32.mrf.mxu0
  %302 = vmatprep.mubr.bf16.mxu0 0
  %303 = vmatmul.mubr.bf16.gmra.mxu0 %v254
  %v304 = vpop.f32.mrf.mxu0
  %v305 = vadd.f32 0.0, %v304
  %v306 = vpop.f32.mrf.mxu0
  %v307 = vpop.f32.mrf.mxu0
  %v308 = vpop.f32.mrf.mxu0
  %309 = vdwg.mxu0
  %v310 = vmul.f32 %v297, 0.25
  %v311 = vmul.f32 %v300, 0.25
  %v312 = vmul.f32 %v305, 0.25
  %v313 = vadd.f32 %v310, %v82
  %v314 = vadd.f32 %v311, %v83
  %v315 = vadd.f32 %v312, %v84
  %vm316 = vcmask 195584
  %v317 = vsel %vm316, %v313, -inf
  %318 = vmax.xlane.f32.xlu0 %v317
  %v319 = vpop.xlane.xlu0 %318
  %v320 = vsel %vm316, %v314, -inf
  %321 = vmax.xlane.f32.xlu0 %v320
  %v322 = vpop.xlane.xlu0 %321
  %v323 = vsel %vm316, %v315, -inf
  %324 = vmax.xlane.f32.xlu0 %v323
  %v325 = vpop.xlane.xlu0 %324
  %v326 = vsub.f32 %v313, %v319
  %v327 = vsub.f32 %v314, %v322
  %v328 = vsub.f32 %v315, %v325
  %v329 = vmul.f32 %v326, 1.442695
  %v330 = vpow.pop %v329
  %v331 = vmul.f32 %v327, 1.442695
  %v332 = vpow.pop %v331
  %v333 = vmul.f32 %v328, 1.442695
  %v334 = vpow.pop %v333
  %v335 = vsel %vm316, %v330, 0.0
  %336 = vadd.xlane.f32.xlu0 %v335
  %v337 = vpop.xlane.xlu0 %336
  %v338 = vsel %vm316, %v332, 0.0
  %339 = vadd.xlane.f32.xlu0 %v338
  %v340 = vpop.xlane.xlu0 %339
  %v341 = vsel %vm316, %v334, 0.0
  %342 = vadd.xlane.f32.xlu0 %v341
  %v343 = vpop.xlane.xlu0 %342
  %v344 = vrcp.pop %v337
  %v345 = vrcp.pop %v340
  %v346 = vrcp.pop %v343
  %v347 = vmul.f32 %v330, %v344
  %v348 = vmul.f32 %v332, %v345
  %v349 = vmul.f32 %v334, %v346
  %v350 = vpack.c.bf16 %v348, %v347
  %v351 = vpack.c.bf16 %v349, %v349
  %352 = vrot.lane.b32.xlu0 %v241, 64
  %v353 = vpop.permute.xlu0 %352
  %354 = vrot.lane.b32.xlu0 %v242, 64
  %v355 = vpop.permute.xlu0 %354
  %v358 = vsel %vm316, %v350, 0
  %v361 = vsel %vm316, %v351, 0
  %vm363 = vcmask 1043456
  %v365 = vsel %vm363, %v355, 0
  %367 = vmatprep.subr.bf16.mxu0 0
  %368 = vmatpush1.bf16.msra.mxu0 0
  %369 = vmatprep.subr.bf16.mxu0 0
  %370 = vmatpush1.bf16.msra.mxu0 0
  %371 = vmatprep.subr.bf16.mxu0 0
  %372 = vmatpush1.bf16.msra.mxu0 0
  %373 = vmatprep.subr.bf16.mxu0 0
  %374 = vmatpush1.bf16.msra.mxu0 0
  %375 = vmatprep.subr.bf16.mxu0 0
  %376 = vmatpush1.bf16.msra.mxu0 0
  %377 = vmatprep.subr.bf16.mxu0 0
  %378 = vmatpush1.bf16.msra.mxu0 0
  %379 = vmatprep.subr.bf16.mxu0 0
  %380 = vmatpush1.bf16.msra.mxu0 %v365
  %381 = vmatprep.subr.bf16.mxu0 0
  %382 = vmatpush1.bf16.msra.mxu0 %v353
  %383 = vmatprep.subr.bf16.mxu0 0
  %384 = vmatpush2.bf16.msra.mxu0 0
  %385 = vmatprep.subr.bf16.mxu0 0
  %386 = vmatpush2.bf16.msra.mxu0 0
  %387 = vmatprep.subr.bf16.mxu0 0
  %388 = vmatpush2.bf16.msra.mxu0 0
  %389 = vmatprep.subr.bf16.mxu0 0
  %390 = vmatpush2.bf16.msra.mxu0 0
  %391 = vmatprep.subr.bf16.mxu0 0
  %392 = vmatpush2.bf16.msra.mxu0 0
  %393 = vmatprep.subr.bf16.mxu0 0
  %394 = vmatpush2.bf16.msra.mxu0 0
  %395 = vmatprep.subr.bf16.mxu0 0
  %396 = vmatpush2.bf16.msra.mxu0 0
  %397 = vmatprep.subr.bf16.mxu0 0
  %398 = vmatpush2.bf16.msra.mxu0 0
  %399 = vmatprep.mubr.bf16.mxu0 0
  %400 = vmatmul.mubr.bf16.gmra.mxu0 %v358
  %v401 = vpop.f32.mrf.mxu0
  %v402 = vadd.f32 0.0, %v401
  %v403 = vpop.f32.mrf.mxu0
  %v404 = vpop.f32.mrf.mxu0
  %v405 = vadd.f32 0.0, %v404
  %v406 = vpop.f32.mrf.mxu0
  %407 = vmatprep.mubr.bf16.mxu0 0
  %408 = vmatmul.mubr.bf16.gmra.mxu0 %v361
  %v409 = vpop.f32.mrf.mxu0
  %v410 = vadd.f32 0.0, %v409
  %v411 = vpop.f32.mrf.mxu0
  %v412 = vpop.f32.mrf.mxu0
  %v413 = vpop.f32.mrf.mxu0
  %414 = vdwg.mxu0
  %v415 = vpack.c.bf16 %v405, %v402
  %v416 = vpack.c.bf16 %v410, %v410
  %v419 = vunpack.c.l.b16 %v89
  %v420 = vunpack.c.l.b16 %v90
  %v421 = vpack.c.b16 %v420, %v419
  %v424 = vsel %vm249, %v415, 0
  %v427 = vsel %vm249, %v416, 0
  %429 = vmatprep.subr.bf16.mxu0 0
  %430 = vmatpush1.bf16.msra.mxu0 0
  %431 = vmatprep.subr.bf16.mxu0 0
  %432 = vmatpush1.bf16.msra.mxu0 0
  %433 = vmatprep.subr.bf16.mxu0 0
  %434 = vmatpush1.bf16.msra.mxu0 0
  %435 = vmatprep.subr.bf16.mxu0 0
  %436 = vmatpush1.bf16.msra.mxu0 0
  %437 = vmatprep.subr.bf16.mxu0 0
  %438 = vmatpush1.bf16.msra.mxu0 0
  %439 = vmatprep.subr.bf16.mxu0 0
  %440 = vmatpush1.bf16.msra.mxu0 0
  %441 = vmatprep.subr.bf16.mxu0 0
  %442 = vmatpush1.bf16.msra.mxu0 0
  %443 = vmatprep.subr.bf16.mxu0 0
  %444 = vmatpush1.bf16.msra.mxu0 %v421
  %445 = vmatprep.subr.bf16.mxu0 0
  %446 = vmatpush2.bf16.msra.mxu0 0
  %447 = vmatprep.subr.bf16.mxu0 0
  %448 = vmatpush2.bf16.msra.mxu0 0
  %449 = vmatprep.subr.bf16.mxu0 0
  %450 = vmatpush2.bf16.msra.mxu0 0
  %451 = vmatprep.subr.bf16.mxu0 0
  %452 = vmatpush2.bf16.msra.mxu0 0
  %453 = vmatprep.subr.bf16.mxu0 0
  %454 = vmatpush2.bf16.msra.mxu0 0
  %455 = vmatprep.subr.bf16.mxu0 0
  %456 = vmatpush2.bf16.msra.mxu0 0
  %457 = vmatprep.subr.bf16.mxu0 0
  %458 = vmatpush2.bf16.msra.mxu0 0
  %459 = vmatprep.subr.bf16.mxu0 0
  %460 = vmatpush2.bf16.msra.mxu0 0
  %461 = vmatprep.mubr.bf16.mxu0 0
  %462 = vmatmul.mubr.bf16.gmra.mxu0 %v424
  %v463 = vpop.f32.mrf.mxu0
  %v464 = vadd.f32 0.0, %v463
  %v465 = vpop.f32.mrf.mxu0
  %v466 = vpop.f32.mrf.mxu0
  %v467 = vadd.f32 0.0, %v466
  %v468 = vpop.f32.mrf.mxu0
  %469 = vmatprep.mubr.bf16.mxu0 0
  %470 = vmatmul.mubr.bf16.gmra.mxu0 %v427
  %v471 = vpop.f32.mrf.mxu0
  %v472 = vadd.f32 0.0, %v471
  %v473 = vpop.f32.mrf.mxu0
  %v474 = vpop.f32.mrf.mxu0
  %v475 = vpop.f32.mrf.mxu0
  %476 = vdwg.mxu0
  %v477 = vadd.f32 %v54, %v464
  %v478 = vadd.f32 %v55, %v467
  %v479 = vadd.f32 %v56, %v472
  %480 = vrot.lane.b32.xlu0 %v241, 112
  %v481 = vpop.permute.xlu0 %480
  %482 = vrot.lane.b32.xlu0 %v242, 112
  %v483 = vpop.permute.xlu0 %482
  %484 = vrot.lane.b32.xlu0 %v241, 80
  %v485 = vpop.permute.xlu0 %484
  %486 = vrot.lane.b32.xlu0 %v242, 80
  %v487 = vpop.permute.xlu0 %486
  %v489 = vsel %vm249, %v481, 0
  %v492 = vsel %vm249, %v483, 0
  %v495 = vsel %vm249, %v485, 0
  %v498 = vsel %vm249, %v487, 0
  %500 = vmatprep.subr.bf16.mxu0 0
  %501 = vmatpush1.bf16.xpose.msra.mxu0 0
  %502 = vmatprep.subr.bf16.mxu0 0
  %503 = vmatpush1.bf16.xpose.msra.mxu0 0
  %504 = vmatprep.subr.bf16.mxu0 0
  %505 = vmatpush1.bf16.xpose.msra.mxu0 0
  %506 = vmatprep.subr.bf16.mxu0 0
  %507 = vmatpush1.bf16.xpose.msra.mxu0 0
  %508 = vmatprep.subr.bf16.mxu0 0
  %509 = vmatpush1.bf16.xpose.msra.mxu0 0
  %510 = vmatprep.subr.bf16.mxu0 0
  %511 = vmatpush1.bf16.xpose.msra.mxu0 0
  %512 = vmatprep.subr.bf16.mxu0 0
  %513 = vmatpush1.bf16.xpose.msra.mxu0 %v498
  %514 = vmatprep.subr.bf16.mxu0 0
  %515 = vmatpush1.bf16.xpose.msra.mxu0 %v495
  %516 = vmatprep.subr.bf16.mxu0 0
  %517 = vmatpush2.bf16.xpose.msra.mxu0 0
  %518 = vmatprep.subr.bf16.mxu0 0
  %519 = vmatpush2.bf16.xpose.msra.mxu0 0
  %520 = vmatprep.subr.bf16.mxu0 0
  %521 = vmatpush2.bf16.xpose.msra.mxu0 0
  %522 = vmatprep.subr.bf16.mxu0 0
  %523 = vmatpush2.bf16.xpose.msra.mxu0 0
  %524 = vmatprep.subr.bf16.mxu0 0
  %525 = vmatpush2.bf16.xpose.msra.mxu0 0
  %526 = vmatprep.subr.bf16.mxu0 0
  %527 = vmatpush2.bf16.xpose.msra.mxu0 0
  %528 = vmatprep.subr.bf16.mxu0 0
  %529 = vmatpush2.bf16.xpose.msra.mxu0 0
  %530 = vmatprep.subr.bf16.mxu0 0
  %531 = vmatpush2.bf16.xpose.msra.mxu0 0
  %532 = vmatprep.mubr.bf16.mxu0 0
  %533 = vmatmul.mubr.bf16.gmra.mxu0 %v489
  %v534 = vpop.f32.mrf.mxu0
  %v535 = vadd.f32 0.0, %v534
  %v536 = vpop.f32.mrf.mxu0
  %v537 = vpop.f32.mrf.mxu0
  %v538 = vadd.f32 0.0, %v537
  %v539 = vpop.f32.mrf.mxu0
  %540 = vmatprep.mubr.bf16.mxu0 0
  %541 = vmatmul.mubr.bf16.gmra.mxu0 %v492
  %v542 = vpop.f32.mrf.mxu0
  %v543 = vadd.f32 0.0, %v542
  %v544 = vpop.f32.mrf.mxu0
  %v545 = vpop.f32.mrf.mxu0
  %v546 = vpop.f32.mrf.mxu0
  %547 = vdwg.mxu0
  %v548 = vmul.f32 %v535, 0.25
  %v549 = vmul.f32 %v538, 0.25
  %v550 = vmul.f32 %v543, 0.25
  %v551 = vadd.f32 %v548, %v82
  %v552 = vadd.f32 %v549, %v83
  %v553 = vadd.f32 %v550, %v84
  %v554 = vsel %vm316, %v551, -inf
  %555 = vmax.xlane.f32.xlu0 %v554
  %v556 = vpop.xlane.xlu0 %555
  %v557 = vsel %vm316, %v552, -inf
  %558 = vmax.xlane.f32.xlu0 %v557
  %v559 = vpop.xlane.xlu0 %558
  %v560 = vsel %vm316, %v553, -inf
  %561 = vmax.xlane.f32.xlu0 %v560
  %v562 = vpop.xlane.xlu0 %561
  %v563 = vsub.f32 %v551, %v556
  %v564 = vsub.f32 %v552, %v559
  %v565 = vsub.f32 %v553, %v562
  %v566 = vmul.f32 %v563, 1.442695
  %v567 = vpow.pop %v566
  %v568 = vmul.f32 %v564, 1.442695
  %v569 = vpow.pop %v568
  %v570 = vmul.f32 %v565, 1.442695
  %v571 = vpow.pop %v570
  %v572 = vsel %vm316, %v567, 0.0
  %573 = vadd.xlane.f32.xlu0 %v572
  %v574 = vpop.xlane.xlu0 %573
  %v575 = vsel %vm316, %v569, 0.0
  %576 = vadd.xlane.f32.xlu0 %v575
  %v577 = vpop.xlane.xlu0 %576
  %v578 = vsel %vm316, %v571, 0.0
  %579 = vadd.xlane.f32.xlu0 %v578
  %v580 = vpop.xlane.xlu0 %579
  %v581 = vrcp.pop %v574
  %v582 = vrcp.pop %v577
  %v583 = vrcp.pop %v580
  %v584 = vmul.f32 %v567, %v581
  %v585 = vmul.f32 %v569, %v582
  %v586 = vmul.f32 %v571, %v583
  %v587 = vpack.c.bf16 %v585, %v584
  %v588 = vpack.c.bf16 %v586, %v586
  %589 = vrot.lane.b32.xlu0 %v241, 48
  %v590 = vpop.permute.xlu0 %589
  %591 = vrot.lane.b32.xlu0 %v242, 48
  %v592 = vpop.permute.xlu0 %591
  %v595 = vsel %vm316, %v587, 0
  %v598 = vsel %vm316, %v588, 0
  %v601 = vsel %vm363, %v592, 0
  %603 = vmatprep.subr.bf16.mxu0 0
  %604 = vmatpush1.bf16.msra.mxu0 0
  %605 = vmatprep.subr.bf16.mxu0 0
  %606 = vmatpush1.bf16.msra.mxu0 0
  %607 = vmatprep.subr.bf16.mxu0 0
  %608 = vmatpush1.bf16.msra.mxu0 0
  %609 = vmatprep.subr.bf16.mxu0 0
  %610 = vmatpush1.bf16.msra.mxu0 0
  %611 = vmatprep.subr.bf16.mxu0 0
  %612 = vmatpush1.bf16.msra.mxu0 0
  %613 = vmatprep.subr.bf16.mxu0 0
  %614 = vmatpush1.bf16.msra.mxu0 0
  %615 = vmatprep.subr.bf16.mxu0 0
  %616 = vmatpush1.bf16.msra.mxu0 %v601
  %617 = vmatprep.subr.bf16.mxu0 0
  %618 = vmatpush1.bf16.msra.mxu0 %v590
  %619 = vmatprep.subr.bf16.mxu0 0
  %620 = vmatpush2.bf16.msra.mxu0 0
  %621 = vmatprep.subr.bf16.mxu0 0
  %622 = vmatpush2.bf16.msra.mxu0 0
  %623 = vmatprep.subr.bf16.mxu0 0
  %624 = vmatpush2.bf16.msra.mxu0 0
  %625 = vmatprep.subr.bf16.mxu0 0
  %626 = vmatpush2.bf16.msra.mxu0 0
  %627 = vmatprep.subr.bf16.mxu0 0
  %628 = vmatpush2.bf16.msra.mxu0 0
  %629 = vmatprep.subr.bf16.mxu0 0
  %630 = vmatpush2.bf16.msra.mxu0 0
  %631 = vmatprep.subr.bf16.mxu0 0
  %632 = vmatpush2.bf16.msra.mxu0 0
  %633 = vmatprep.subr.bf16.mxu0 0
  %634 = vmatpush2.bf16.msra.mxu0 0
  %635 = vmatprep.mubr.bf16.mxu0 0
  %636 = vmatmul.mubr.bf16.gmra.mxu0 %v595
  %v637 = vpop.f32.mrf.mxu0
  %v638 = vadd.f32 0.0, %v637
  %v639 = vpop.f32.mrf.mxu0
  %v640 = vpop.f32.mrf.mxu0
  %v641 = vadd.f32 0.0, %v640
  %v642 = vpop.f32.mrf.mxu0
  %643 = vmatprep.mubr.bf16.mxu0 0
  %644 = vmatmul.mubr.bf16.gmra.mxu0 %v598
  %v645 = vpop.f32.mrf.mxu0
  %v646 = vadd.f32 0.0, %v645
  %v647 = vpop.f32.mrf.mxu0
  %v648 = vpop.f32.mrf.mxu0
  %v649 = vpop.f32.mrf.mxu0
  %650 = vdwg.mxu0
  %v651 = vpack.c.bf16 %v641, %v638
  %v652 = vpack.c.bf16 %v646, %v646
  %v655 = vunpack.c.l.b16 %v91
  %v656 = vunpack.c.l.b16 %v92
  %v657 = vpack.c.b16 %v656, %v655
  %v660 = vsel %vm249, %v651, 0
  %v663 = vsel %vm249, %v652, 0
  %665 = vmatprep.subr.bf16.mxu0 0
  %666 = vmatpush1.bf16.msra.mxu0 0
  %667 = vmatprep.subr.bf16.mxu0 0
  %668 = vmatpush1.bf16.msra.mxu0 0
  %669 = vmatprep.subr.bf16.mxu0 0
  %670 = vmatpush1.bf16.msra.mxu0 0
  %671 = vmatprep.subr.bf16.mxu0 0
  %672 = vmatpush1.bf16.msra.mxu0 0
  %673 = vmatprep.subr.bf16.mxu0 0
  %674 = vmatpush1.bf16.msra.mxu0 0
  %675 = vmatprep.subr.bf16.mxu0 0
  %676 = vmatpush1.bf16.msra.mxu0 0
  %677 = vmatprep.subr.bf16.mxu0 0
  %678 = vmatpush1.bf16.msra.mxu0 0
  %679 = vmatprep.subr.bf16.mxu0 0
  %680 = vmatpush1.bf16.msra.mxu0 %v657
  %681 = vmatprep.subr.bf16.mxu0 0
  %682 = vmatpush2.bf16.msra.mxu0 0
  %683 = vmatprep.subr.bf16.mxu0 0
  %684 = vmatpush2.bf16.msra.mxu0 0
  %685 = vmatprep.subr.bf16.mxu0 0
  %686 = vmatpush2.bf16.msra.mxu0 0
  %687 = vmatprep.subr.bf16.mxu0 0
  %688 = vmatpush2.bf16.msra.mxu0 0
  %689 = vmatprep.subr.bf16.mxu0 0
  %690 = vmatpush2.bf16.msra.mxu0 0
  %691 = vmatprep.subr.bf16.mxu0 0
  %692 = vmatpush2.bf16.msra.mxu0 0
  %693 = vmatprep.subr.bf16.mxu0 0
  %694 = vmatpush2.bf16.msra.mxu0 0
  %695 = vmatprep.subr.bf16.mxu0 0
  %696 = vmatpush2.bf16.msra.mxu0 0
  %697 = vmatprep.mubr.bf16.mxu0 0
  %698 = vmatmul.mubr.bf16.gmra.mxu0 %v660
  %v699 = vpop.f32.mrf.mxu0
  %v700 = vadd.f32 0.0, %v699
  %v701 = vpop.f32.mrf.mxu0
  %v702 = vpop.f32.mrf.mxu0
  %v703 = vadd.f32 0.0, %v702
  %v704 = vpop.f32.mrf.mxu0
  %705 = vmatprep.mubr.bf16.mxu0 0
  %706 = vmatmul.mubr.bf16.gmra.mxu0 %v663
  %v707 = vpop.f32.mrf.mxu0
  %v708 = vadd.f32 0.0, %v707
  %v709 = vpop.f32.mrf.mxu0
  %v710 = vpop.f32.mrf.mxu0
  %v711 = vpop.f32.mrf.mxu0
  %712 = vdwg.mxu0
  %v713 = vadd.f32 %v477, %v700
  %v714 = vadd.f32 %v478, %v703
  %v715 = vadd.f32 %v479, %v708
  %v716 = vld [vmem:[%s6] sm:$0x1]
  %v718 = vlaneseq
  %v719 = vshrl.u32 %v718, 7
  %v720 = vsub.s32 0, %v719
  %v721 = vrot.slane %v716, %v720
  %v723 = vadd.f32 %v713, %v721
  %v724 = vadd.f32 %v714, %v721
  %v725 = vadd.f32 %v715, %v721
  %v726 = vld [vmem:[%s7] sm:$0x1]
  %v727 = vld [vmem:[%s8] sm:$0x1]
  %v728 = vsel %vm107, %v723, 0.0
  %729 = vadd.xlane.f32.xlu0 %v728
  %v730 = vpop.xlane.xlu0 %729
  %v731 = vsel %vm107, %v724, 0.0
  %732 = vadd.xlane.f32.xlu0 %v731
  %v733 = vpop.xlane.xlu0 %732
  %v734 = vsel %vm107, %v725, 0.0
  %735 = vadd.xlane.f32.xlu0 %v734
  %v736 = vpop.xlane.xlu0 %735
  %v737 = vmul.f32 %v730, %v117
  %v738 = vmul.f32 %v733, %v117
  %v739 = vmul.f32 %v736, %v117
  %v740 = vsub.f32 %v723, %v737
  %v741 = vsub.f32 %v724, %v738
  %v742 = vsub.f32 %v725, %v739
  %v743 = vmul.f32 %v740, %v740
  %v744 = vmul.f32 %v741, %v741
  %v745 = vmul.f32 %v742, %v742
  %v746 = vsel %vm107, %v743, 0.0
  %747 = vadd.xlane.f32.xlu0 %v746
  %v748 = vpop.xlane.xlu0 %747
  %v749 = vsel %vm107, %v744, 0.0
  %750 = vadd.xlane.f32.xlu0 %v749
  %v751 = vpop.xlane.xlu0 %750
  %v752 = vsel %vm107, %v745, 0.0
  %753 = vadd.xlane.f32.xlu0 %v752
  %v754 = vpop.xlane.xlu0 %753
  %v755 = vmul.f32 %v748, %v117
  %v756 = vmul.f32 %v751, %v117
  %v757 = vmul.f32 %v754, %v117
  %v758 = vadd.f32 %v755, 1e-06
  %v759 = vadd.f32 %v756, 1e-06
  %v760 = vadd.f32 %v757, 1e-06
  %v761 = vrsqrt.pop %v758
  %v762 = vrsqrt.pop %v759
  %v763 = vrsqrt.pop %v760
  %v764 = vmul.f32 %v740, %v761
  %v765 = vmul.f32 %v741, %v762
  %v766 = vmul.f32 %v742, %v763
  %v768 = vlaneseq
  %v769 = vshrl.u32 %v768, 7
  %v770 = vsub.s32 0, %v769
  %v771 = vrot.slane %v726, %v770
  %v773 = vmul.f32 %v764, %v771
  %v774 = vmul.f32 %v765, %v771
  %v775 = vmul.f32 %v766, %v771
  %v777 = vlaneseq
  %v778 = vshrl.u32 %v777, 7
  %v779 = vsub.s32 0, %v778
  %v780 = vrot.slane %v727, %v779
  %v782 = vadd.f32 %v773, %v780
  %v783 = vadd.f32 %v774, %v780
  %v784 = vadd.f32 %v775, %v780
  %v785 = vpack.c.bf16 %v783, %v782
  %v786 = vpack.c.bf16 %v784, %v784
  %v787 = vld [vmem:[%s10] sm:$0x1]
  %v789 = vlaneseq
  %v790 = vshrl.u32 %v789, 7
  %v791 = vsub.s32 0, %v790
  %v792 = vrot.slane %v787, %v791
  %v798 = vunpack.c.l.b16 %v93
  %v799 = vunpack.c.l.b16 %v94
  %v800 = vunpack.c.l.b16 %v95
  %v801 = vunpack.c.l.b16 %v96
  %v802 = vpack.c.b16 %v799, %v798
  %v803 = vpack.c.b16 %v801, %v800
  %v807 = vsel %vm107, %v785, 0
  %v810 = vsel %vm107, %v786, 0
  %812 = vmatprep.subr.bf16.mxu0 0
  %813 = vmatpush1.bf16.msra.mxu0 0
  %814 = vmatprep.subr.bf16.mxu0 0
  %815 = vmatpush1.bf16.msra.mxu0 0
  %816 = vmatprep.subr.bf16.mxu0 0
  %817 = vmatpush1.bf16.msra.mxu0 0
  %818 = vmatprep.subr.bf16.mxu0 0
  %819 = vmatpush1.bf16.msra.mxu0 0
  %820 = vmatprep.subr.bf16.mxu0 0
  %821 = vmatpush1.bf16.msra.mxu0 0
  %822 = vmatprep.subr.bf16.mxu0 0
  %823 = vmatpush1.bf16.msra.mxu0 0
  %824 = vmatprep.subr.bf16.mxu0 0
  %825 = vmatpush1.bf16.msra.mxu0 %v803
  %826 = vmatprep.subr.bf16.mxu0 0
  %827 = vmatpush1.bf16.msra.mxu0 %v802
  %828 = vmatprep.subr.bf16.mxu0 0
  %829 = vmatpush2.bf16.msra.mxu0 0
  %830 = vmatprep.subr.bf16.mxu0 0
  %831 = vmatpush2.bf16.msra.mxu0 0
  %832 = vmatprep.subr.bf16.mxu0 0
  %833 = vmatpush2.bf16.msra.mxu0 0
  %834 = vmatprep.subr.bf16.mxu0 0
  %835 = vmatpush2.bf16.msra.mxu0 0
  %836 = vmatprep.subr.bf16.mxu0 0
  %837 = vmatpush2.bf16.msra.mxu0 0
  %838 = vmatprep.subr.bf16.mxu0 0
  %839 = vmatpush2.bf16.msra.mxu0 0
  %840 = vmatprep.subr.bf16.mxu0 0
  %841 = vmatpush2.bf16.msra.mxu0 0
  %842 = vmatprep.subr.bf16.mxu0 0
  %843 = vmatpush2.bf16.msra.mxu0 0
  %844 = vmatprep.mubr.bf16.mxu0 0
  %845 = vmatmul.mubr.bf16.gmra.mxu0 %v807
  %v846 = vpop.f32.mrf.mxu0
  %v847 = vadd.f32 %v792, %v846
  %v848 = vpop.f32.mrf.mxu0
  %v849 = vpop.f32.mrf.mxu0
  %v850 = vadd.f32 %v792, %v849
  %v851 = vpop.f32.mrf.mxu0
  %852 = vmatprep.mubr.bf16.mxu0 0
  %853 = vmatmul.mubr.bf16.gmra.mxu0 %v810
  %v854 = vpop.f32.mrf.mxu0
  %v855 = vadd.f32 %v792, %v854
  %v856 = vpop.f32.mrf.mxu0
  %v857 = vpop.f32.mrf.mxu0
  %v858 = vpop.f32.mrf.mxu0
  %859 = vdwg.mxu0
  %v860 = vmul.f32 %v847, %v847
  %v861 = vmul.f32 %v850, %v850
  %v862 = vmul.f32 %v855, %v855
  %v863 = vmul.f32 %v847, %v860
  %v864 = vmul.f32 %v850, %v861
  %v865 = vmul.f32 %v855, %v862
  %v866 = vmul.f32 %v863, 0.044715
  %v867 = vmul.f32 %v864, 0.044715
  %v868 = vmul.f32 %v865, 0.044715
  %v869 = vadd.f32 %v847, %v866
  %v870 = vadd.f32 %v850, %v867
  %v871 = vadd.f32 %v855, %v868
  %v872 = vmul.f32 %v869, 0.7978846
  %v873 = vmul.f32 %v870, 0.7978846
  %v874 = vmul.f32 %v871, 0.7978846
  %v875 = vtanh.pop %v872
  %v876 = vtanh.pop %v873
  %v877 = vtanh.pop %v874
  %v878 = vadd.f32 %v875, 1.0
  %v879 = vadd.f32 %v876, 1.0
  %v880 = vadd.f32 %v877, 1.0
  %v881 = vmul.f32 %v878, 0.5
  %v882 = vmul.f32 %v879, 0.5
  %v883 = vmul.f32 %v880, 0.5
  %v884 = vmul.f32 %v847, %v881
  %v885 = vmul.f32 %v850, %v882
  %v886 = vmul.f32 %v855, %v883
  %v887 = vpack.c.bf16 %v885, %v884
  %v888 = vpack.c.bf16 %v886, %v886
  %v897 = vunpack.c.l.b16 %v97
  %v898 = vunpack.c.l.b16 %v98
  %v899 = vunpack.c.l.b16 %v99
  %v900 = vunpack.c.l.b16 %v100
  %v901 = vunpack.c.l.b16 %v101
  %v902 = vunpack.c.l.b16 %v102
  %v903 = vunpack.c.l.b16 %v103
  %v904 = vunpack.c.l.b16 %v104
  %v905 = vpack.c.b16 %v898, %v897
  %v906 = vpack.c.b16 %v900, %v899
  %v907 = vpack.c.b16 %v902, %v901
  %v908 = vpack.c.b16 %v904, %v903
  %vm913 = vcmask 523264
  %v915 = vsel %vm913, %v887, 0
  %v918 = vsel %vm913, %v888, 0
  %920 = vmatprep.subr.bf16.mxu0 0
  %921 = vmatpush1.bf16.msra.mxu0 0
  %922 = vmatprep.subr.bf16.mxu0 0
  %923 = vmatpush1.bf16.msra.mxu0 0
  %924 = vmatprep.subr.bf16.mxu0 0
  %925 = vmatpush1.bf16.msra.mxu0 0
  %926 = vmatprep.subr.bf16.mxu0 0
  %927 = vmatpush1.bf16.msra.mxu0 0
  %928 = vmatprep.subr.bf16.mxu0 0
  %929 = vmatpush1.bf16.msra.mxu0 %v908
  %930 = vmatprep.subr.bf16.mxu0 0
  %931 = vmatpush1.bf16.msra.mxu0 %v907
  %932 = vmatprep.subr.bf16.mxu0 0
  %933 = vmatpush1.bf16.msra.mxu0 %v906
  %934 = vmatprep.subr.bf16.mxu0 0
  %935 = vmatpush1.bf16.msra.mxu0 %v905
  %936 = vmatprep.subr.bf16.mxu0 0
  %937 = vmatpush2.bf16.msra.mxu0 0
  %938 = vmatprep.subr.bf16.mxu0 0
  %939 = vmatpush2.bf16.msra.mxu0 0
  %940 = vmatprep.subr.bf16.mxu0 0
  %941 = vmatpush2.bf16.msra.mxu0 0
  %942 = vmatprep.subr.bf16.mxu0 0
  %943 = vmatpush2.bf16.msra.mxu0 0
  %944 = vmatprep.subr.bf16.mxu0 0
  %945 = vmatpush2.bf16.msra.mxu0 0
  %946 = vmatprep.subr.bf16.mxu0 0
  %947 = vmatpush2.bf16.msra.mxu0 0
  %948 = vmatprep.subr.bf16.mxu0 0
  %949 = vmatpush2.bf16.msra.mxu0 0
  %950 = vmatprep.subr.bf16.mxu0 0
  %951 = vmatpush2.bf16.msra.mxu0 0
  %952 = vmatprep.mubr.bf16.mxu0 0
  %953 = vmatmul.mubr.bf16.gmra.mxu0 %v915
  %v954 = vpop.f32.mrf.mxu0
  %v955 = vadd.f32 0.0, %v954
  %v956 = vpop.f32.mrf.mxu0
  %v957 = vpop.f32.mrf.mxu0
  %v958 = vadd.f32 0.0, %v957
  %v959 = vpop.f32.mrf.mxu0
  %960 = vmatprep.mubr.bf16.mxu0 0
  %961 = vmatmul.mubr.bf16.gmra.mxu0 %v918
  %v962 = vpop.f32.mrf.mxu0
  %v963 = vadd.f32 0.0, %v962
  %v964 = vpop.f32.mrf.mxu0
  %v965 = vpop.f32.mrf.mxu0
  %v966 = vpop.f32.mrf.mxu0
  %967 = vdwg.mxu0
  %v968 = vadd.f32 %v723, %v955
  %v969 = vadd.f32 %v724, %v958
  %v970 = vadd.f32 %v725, %v963
  %v971 = vld [vmem:[%s12] sm:$0x1]
  %v973 = vlaneseq
  %v974 = vshrl.u32 %v973, 7
  %v975 = vsub.s32 0, %v974
  %v976 = vrot.slane %v971, %v975
  %v978 = vadd.f32 %v968, %v976
  %v979 = vadd.f32 %v969, %v976
  %v980 = vadd.f32 %v970, %v976
  %s981 = scalar_lea.vmem %s3, 16
  %v982 = vld [vmem:[%s981] sm:$0xf]
  %v983 = vld [vmem:[%s981 + $0x4] sm:$0xf]
  %v984 = vld [vmem:[%s981 + $0x8] sm:$0xf]
  %v985 = vld [vmem:[%s981 + $0xc] sm:$0xf]
  %s986 = scalar_lea.vmem %s5, 16
  %v987 = vld [vmem:[%s986] sm:$0xf]
  %v988 = vld [vmem:[%s986 + $0x4] sm:$0xf]
  %v989 = vld [vmem:[%s986 + $0x8] sm:$0xf]
  %v990 = vld [vmem:[%s986 + $0xc] sm:$0xf]
  %s991 = scalar_lea.vmem %s9, 16
  %v992 = vld [vmem:[%s991] sm:$0xf]
  %v993 = vld [vmem:[%s991 + $0x4] sm:$0xf]
  %v994 = vld [vmem:[%s991 + $0x8] sm:$0xf]
  %v995 = vld [vmem:[%s991 + $0xc] sm:$0xf]
  %s996 = scalar_lea.vmem %s11, 32
  %v997 = vld [vmem:[%s996] sm:$0xf]
  %v998 = vld [vmem:[%s996 + $0x4] sm:$0xf]
  %v999 = vld [vmem:[%s996 + $0x8] sm:$0xf]
  %v1000 = vld [vmem:[%s996 + $0xc] sm:$0xf]
  %v1001 = vld [vmem:[%s996 + $0x10] sm:$0xf]
  %v1002 = vld [vmem:[%s996 + $0x14] sm:$0xf]
  %v1003 = vld [vmem:[%s996 + $0x18] sm:$0xf]
  %v1004 = vld [vmem:[%s996 + $0x1c] sm:$0xf]
  %s1005 = scalar_lea.vmem %s1, 1
  %v1006 = vld [vmem:[%s1005] sm:$0x1]
  %s1007 = scalar_lea.vmem %s2, 1
  %v1008 = vld [vmem:[%s1007] sm:$0x1]
  %v1009 = vsel %vm107, %v978, 0.0
  %1010 = vadd.xlane.f32.xlu0 %v1009
  %v1011 = vpop.xlane.xlu0 %1010
  %v1012 = vsel %vm107, %v979, 0.0
  %1013 = vadd.xlane.f32.xlu0 %v1012
  %v1014 = vpop.xlane.xlu0 %1013
  %v1015 = vsel %vm107, %v980, 0.0
  %1016 = vadd.xlane.f32.xlu0 %v1015
  %v1017 = vpop.xlane.xlu0 %1016
  %v1018 = vmul.f32 %v1011, %v117
  %v1019 = vmul.f32 %v1014, %v117
  %v1020 = vmul.f32 %v1017, %v117
  %v1021 = vsub.f32 %v978, %v1018
  %v1022 = vsub.f32 %v979, %v1019
  %v1023 = vsub.f32 %v980, %v1020
  %v1024 = vmul.f32 %v1021, %v1021
  %v1025 = vmul.f32 %v1022, %v1022
  %v1026 = vmul.f32 %v1023, %v1023
  %v1027 = vsel %vm107, %v1024, 0.0
  %1028 = vadd.xlane.f32.xlu0 %v1027
  %v1029 = vpop.xlane.xlu0 %1028
  %v1030 = vsel %vm107, %v1025, 0.0
  %1031 = vadd.xlane.f32.xlu0 %v1030
  %v1032 = vpop.xlane.xlu0 %1031
  %v1033 = vsel %vm107, %v1026, 0.0
  %1034 = vadd.xlane.f32.xlu0 %v1033
  %v1035 = vpop.xlane.xlu0 %1034
  %v1036 = vmul.f32 %v1029, %v117
  %v1037 = vmul.f32 %v1032, %v117
  %v1038 = vmul.f32 %v1035, %v117
  %v1039 = vadd.f32 %v1036, 1e-06
  %v1040 = vadd.f32 %v1037, 1e-06
  %v1041 = vadd.f32 %v1038, 1e-06
  %v1042 = vrsqrt.pop %v1039
  %v1043 = vrsqrt.pop %v1040
  %v1044 = vrsqrt.pop %v1041
  %v1045 = vmul.f32 %v1021, %v1042
  %v1046 = vmul.f32 %v1022, %v1043
  %v1047 = vmul.f32 %v1023, %v1044
  %v1049 = vlaneseq
  %v1050 = vshrl.u32 %v1049, 7
  %v1051 = vsub.s32 0, %v1050
  %v1052 = vrot.slane %v1006, %v1051
  %v1054 = vmul.f32 %v1045, %v1052
  %v1055 = vmul.f32 %v1046, %v1052
  %v1056 = vmul.f32 %v1047, %v1052
  %v1058 = vlaneseq
  %v1059 = vshrl.u32 %v1058, 7
  %v1060 = vsub.s32 0, %v1059
  %v1061 = vrot.slane %v1008, %v1060
  %v1063 = vadd.f32 %v1054, %v1061
  %v1064 = vadd.f32 %v1055, %v1061
  %v1065 = vadd.f32 %v1056, %v1061
  %v1066 = vpack.c.bf16 %v1064, %v1063
  %v1067 = vpack.c.bf16 %v1065, %v1065
  %s1068 = scalar_lea.vmem %s4, 1
  %v1069 = vld [vmem:[%s1068] sm:$0x1]
  %v1071 = vlaneseq
  %v1072 = vshrl.u32 %v1071, 7
  %v1073 = vsub.s32 0, %v1072
  %v1074 = vrot.slane %v1069, %v1073
  %v1080 = vunpack.c.l.b16 %v982
  %v1081 = vunpack.c.l.b16 %v983
  %v1082 = vunpack.c.l.b16 %v984
  %v1083 = vunpack.c.l.b16 %v985
  %v1084 = vpack.c.b16 %v1081, %v1080
  %v1085 = vpack.c.b16 %v1083, %v1082
  %v1089 = vsel %vm107, %v1066, 0
  %v1092 = vsel %vm107, %v1067, 0
  %1094 = vmatprep.subr.bf16.mxu0 0
  %1095 = vmatpush1.bf16.msra.mxu0 0
  %1096 = vmatprep.subr.bf16.mxu0 0
  %1097 = vmatpush1.bf16.msra.mxu0 0
  %1098 = vmatprep.subr.bf16.mxu0 0
  %1099 = vmatpush1.bf16.msra.mxu0 0
  %1100 = vmatprep.subr.bf16.mxu0 0
  %1101 = vmatpush1.bf16.msra.mxu0 0
  %1102 = vmatprep.subr.bf16.mxu0 0
  %1103 = vmatpush1.bf16.msra.mxu0 0
  %1104 = vmatprep.subr.bf16.mxu0 0
  %1105 = vmatpush1.bf16.msra.mxu0 0
  %1106 = vmatprep.subr.bf16.mxu0 0
  %1107 = vmatpush1.bf16.msra.mxu0 %v1085
  %1108 = vmatprep.subr.bf16.mxu0 0
  %1109 = vmatpush1.bf16.msra.mxu0 %v1084
  %1110 = vmatprep.subr.bf16.mxu0 0
  %1111 = vmatpush2.bf16.msra.mxu0 0
  %1112 = vmatprep.subr.bf16.mxu0 0
  %1113 = vmatpush2.bf16.msra.mxu0 0
  %1114 = vmatprep.subr.bf16.mxu0 0
  %1115 = vmatpush2.bf16.msra.mxu0 0
  %1116 = vmatprep.subr.bf16.mxu0 0
  %1117 = vmatpush2.bf16.msra.mxu0 0
  %1118 = vmatprep.subr.bf16.mxu0 0
  %1119 = vmatpush2.bf16.msra.mxu0 0
  %1120 = vmatprep.subr.bf16.mxu0 0
  %1121 = vmatpush2.bf16.msra.mxu0 0
  %1122 = vmatprep.subr.bf16.mxu0 0
  %1123 = vmatpush2.bf16.msra.mxu0 0
  %1124 = vmatprep.subr.bf16.mxu0 0
  %1125 = vmatpush2.bf16.msra.mxu0 0
  %1126 = vmatprep.mubr.bf16.mxu0 0
  %1127 = vmatmul.mubr.bf16.gmra.mxu0 %v1089
  %v1128 = vpop.f32.mrf.mxu0
  %v1129 = vadd.f32 %v1074, %v1128
  %v1130 = vpop.f32.mrf.mxu0
  %v1131 = vpop.f32.mrf.mxu0
  %v1132 = vadd.f32 %v1074, %v1131
  %v1133 = vpop.f32.mrf.mxu0
  %1134 = vmatprep.mubr.bf16.mxu0 0
  %1135 = vmatmul.mubr.bf16.gmra.mxu0 %v1092
  %v1136 = vpop.f32.mrf.mxu0
  %v1137 = vadd.f32 %v1074, %v1136
  %v1138 = vpop.f32.mrf.mxu0
  %v1139 = vpop.f32.mrf.mxu0
  %v1140 = vpop.f32.mrf.mxu0
  %1141 = vdwg.mxu0
  %v1142 = vpack.c.bf16 %v1132, %v1129
  %v1143 = vpack.c.bf16 %v1137, %v1137
  %1146 = vrot.lane.b32.xlu0 %v1142, 96
  %v1147 = vpop.permute.xlu0 %1146
  %1148 = vrot.lane.b32.xlu0 %v1143, 96
  %v1149 = vpop.permute.xlu0 %1148
  %v1151 = vsel %vm249, %v1142, 0
  %v1154 = vsel %vm249, %v1143, 0
  %v1157 = vsel %vm249, %v1147, 0
  %v1160 = vsel %vm249, %v1149, 0
  %1162 = vmatprep.subr.bf16.mxu0 0
  %1163 = vmatpush1.bf16.xpose.msra.mxu0 0
  %1164 = vmatprep.subr.bf16.mxu0 0
  %1165 = vmatpush1.bf16.xpose.msra.mxu0 0
  %1166 = vmatprep.subr.bf16.mxu0 0
  %1167 = vmatpush1.bf16.xpose.msra.mxu0 0
  %1168 = vmatprep.subr.bf16.mxu0 0
  %1169 = vmatpush1.bf16.xpose.msra.mxu0 0
  %1170 = vmatprep.subr.bf16.mxu0 0
  %1171 = vmatpush1.bf16.xpose.msra.mxu0 0
  %1172 = vmatprep.subr.bf16.mxu0 0
  %1173 = vmatpush1.bf16.xpose.msra.mxu0 0
  %1174 = vmatprep.subr.bf16.mxu0 0
  %1175 = vmatpush1.bf16.xpose.msra.mxu0 %v1160
  %1176 = vmatprep.subr.bf16.mxu0 0
  %1177 = vmatpush1.bf16.xpose.msra.mxu0 %v1157
  %1178 = vmatprep.subr.bf16.mxu0 0
  %1179 = vmatpush2.bf16.xpose.msra.mxu0 0
  %1180 = vmatprep.subr.bf16.mxu0 0
  %1181 = vmatpush2.bf16.xpose.msra.mxu0 0
  %1182 = vmatprep.subr.bf16.mxu0 0
  %1183 = vmatpush2.bf16.xpose.msra.mxu0 0
  %1184 = vmatprep.subr.bf16.mxu0 0
  %1185 = vmatpush2.bf16.xpose.msra.mxu0 0
  %1186 = vmatprep.subr.bf16.mxu0 0
  %1187 = vmatpush2.bf16.xpose.msra.mxu0 0
  %1188 = vmatprep.subr.bf16.mxu0 0
  %1189 = vmatpush2.bf16.xpose.msra.mxu0 0
  %1190 = vmatprep.subr.bf16.mxu0 0
  %1191 = vmatpush2.bf16.xpose.msra.mxu0 0
  %1192 = vmatprep.subr.bf16.mxu0 0
  %1193 = vmatpush2.bf16.xpose.msra.mxu0 0
  %1194 = vmatprep.mubr.bf16.mxu0 0
  %1195 = vmatmul.mubr.bf16.gmra.mxu0 %v1151
  %v1196 = vpop.f32.mrf.mxu0
  %v1197 = vadd.f32 0.0, %v1196
  %v1198 = vpop.f32.mrf.mxu0
  %v1199 = vpop.f32.mrf.mxu0
  %v1200 = vadd.f32 0.0, %v1199
  %v1201 = vpop.f32.mrf.mxu0
  %1202 = vmatprep.mubr.bf16.mxu0 0
  %1203 = vmatmul.mubr.bf16.gmra.mxu0 %v1154
  %v1204 = vpop.f32.mrf.mxu0
  %v1205 = vadd.f32 0.0, %v1204
  %v1206 = vpop.f32.mrf.mxu0
  %v1207 = vpop.f32.mrf.mxu0
  %v1208 = vpop.f32.mrf.mxu0
  %1209 = vdwg.mxu0
  %v1210 = vmul.f32 %v1197, 0.25
  %v1211 = vmul.f32 %v1200, 0.25
  %v1212 = vmul.f32 %v1205, 0.25
  %v1213 = vadd.f32 %v1210, %v82
  %v1214 = vadd.f32 %v1211, %v83
  %v1215 = vadd.f32 %v1212, %v84
  %v1216 = vsel %vm316, %v1213, -inf
  %1217 = vmax.xlane.f32.xlu0 %v1216
  %v1218 = vpop.xlane.xlu0 %1217
  %v1219 = vsel %vm316, %v1214, -inf
  %1220 = vmax.xlane.f32.xlu0 %v1219
  %v1221 = vpop.xlane.xlu0 %1220
  %v1222 = vsel %vm316, %v1215, -inf
  %1223 = vmax.xlane.f32.xlu0 %v1222
  %v1224 = vpop.xlane.xlu0 %1223
  %v1225 = vsub.f32 %v1213, %v1218
  %v1226 = vsub.f32 %v1214, %v1221
  %v1227 = vsub.f32 %v1215, %v1224
  %v1228 = vmul.f32 %v1225, 1.442695
  %v1229 = vpow.pop %v1228
  %v1230 = vmul.f32 %v1226, 1.442695
  %v1231 = vpow.pop %v1230
  %v1232 = vmul.f32 %v1227, 1.442695
  %v1233 = vpow.pop %v1232
  %v1234 = vsel %vm316, %v1229, 0.0
  %1235 = vadd.xlane.f32.xlu0 %v1234
  %v1236 = vpop.xlane.xlu0 %1235
  %v1237 = vsel %vm316, %v1231, 0.0
  %1238 = vadd.xlane.f32.xlu0 %v1237
  %v1239 = vpop.xlane.xlu0 %1238
  %v1240 = vsel %vm316, %v1233, 0.0
  %1241 = vadd.xlane.f32.xlu0 %v1240
  %v1242 = vpop.xlane.xlu0 %1241
  %v1243 = vrcp.pop %v1236
  %v1244 = vrcp.pop %v1239
  %v1245 = vrcp.pop %v1242
  %v1246 = vmul.f32 %v1229, %v1243
  %v1247 = vmul.f32 %v1231, %v1244
  %v1248 = vmul.f32 %v1233, %v1245
  %v1249 = vpack.c.bf16 %v1247, %v1246
  %v1250 = vpack.c.bf16 %v1248, %v1248
  %1251 = vrot.lane.b32.xlu0 %v1142, 64
  %v1252 = vpop.permute.xlu0 %1251
  %1253 = vrot.lane.b32.xlu0 %v1143, 64
  %v1254 = vpop.permute.xlu0 %1253
  %v1257 = vsel %vm316, %v1249, 0
  %v1260 = vsel %vm316, %v1250, 0
  %v1263 = vsel %vm363, %v1254, 0
  %1265 = vmatprep.subr.bf16.mxu0 0
  %1266 = vmatpush1.bf16.msra.mxu0 0
  %1267 = vmatprep.subr.bf16.mxu0 0
  %1268 = vmatpush1.bf16.msra.mxu0 0
  %1269 = vmatprep.subr.bf16.mxu0 0
  %1270 = vmatpush1.bf16.msra.mxu0 0
  %1271 = vmatprep.subr.bf16.mxu0 0
  %1272 = vmatpush1.bf16.msra.mxu0 0
  %1273 = vmatprep.subr.bf16.mxu0 0
  %1274 = vmatpush1.bf16.msra.mxu0 0
  %1275 = vmatprep.subr.bf16.mxu0 0
  %1276 = vmatpush1.bf16.msra.mxu0 0
  %1277 = vmatprep.subr.bf16.mxu0 0
  %1278 = vmatpush1.bf16.msra.mxu0 %v1263
  %1279 = vmatprep.subr.bf16.mxu0 0
  %1280 = vmatpush1.bf16.msra.mxu0 %v1252
  %1281 = vmatprep.subr.bf16.mxu0 0
  %1282 = vmatpush2.bf16.msra.mxu0 0
  %1283 = vmatprep.subr.bf16.mxu0 0
  %1284 = vmatpush2.bf16.msra.mxu0 0
  %1285 = vmatprep.subr.bf16.mxu0 0
  %1286 = vmatpush2.bf16.msra.mxu0 0
  %1287 = vmatprep.subr.bf16.mxu0 0
  %1288 = vmatpush2.bf16.msra.mxu0 0
  %1289 = vmatprep.subr.bf16.mxu0 0
  %1290 = vmatpush2.bf16.msra.mxu0 0
  %1291 = vmatprep.subr.bf16.mxu0 0
  %1292 = vmatpush2.bf16.msra.mxu0 0
  %1293 = vmatprep.subr.bf16.mxu0 0
  %1294 = vmatpush2.bf16.msra.mxu0 0
  %1295 = vmatprep.subr.bf16.mxu0 0
  %1296 = vmatpush2.bf16.msra.mxu0 0
  %1297 = vmatprep.mubr.bf16.mxu0 0
  %1298 = vmatmul.mubr.bf16.gmra.mxu0 %v1257
  %v1299 = vpop.f32.mrf.mxu0
  %v1300 = vadd.f32 0.0, %v1299
  %v1301 = vpop.f32.mrf.mxu0
  %v1302 = vpop.f32.mrf.mxu0
  %v1303 = vadd.f32 0.0, %v1302
  %v1304 = vpop.f32.mrf.mxu0
  %1305 = vmatprep.mubr.bf16.mxu0 0
  %1306 = vmatmul.mubr.bf16.gmra.mxu0 %v1260
  %v1307 = vpop.f32.mrf.mxu0
  %v1308 = vadd.f32 0.0, %v1307
  %v1309 = vpop.f32.mrf.mxu0
  %v1310 = vpop.f32.mrf.mxu0
  %v1311 = vpop.f32.mrf.mxu0
  %1312 = vdwg.mxu0
  %v1313 = vpack.c.bf16 %v1303, %v1300
  %v1314 = vpack.c.bf16 %v1308, %v1308
  %v1317 = vunpack.c.l.b16 %v987
  %v1318 = vunpack.c.l.b16 %v988
  %v1319 = vpack.c.b16 %v1318, %v1317
  %v1322 = vsel %vm249, %v1313, 0
  %v1325 = vsel %vm249, %v1314, 0
  %1327 = vmatprep.subr.bf16.mxu0 0
  %1328 = vmatpush1.bf16.msra.mxu0 0
  %1329 = vmatprep.subr.bf16.mxu0 0
  %1330 = vmatpush1.bf16.msra.mxu0 0
  %1331 = vmatprep.subr.bf16.mxu0 0
  %1332 = vmatpush1.bf16.msra.mxu0 0
  %1333 = vmatprep.subr.bf16.mxu0 0
  %1334 = vmatpush1.bf16.msra.mxu0 0
  %1335 = vmatprep.subr.bf16.mxu0 0
  %1336 = vmatpush1.bf16.msra.mxu0 0
  %1337 = vmatprep.subr.bf16.mxu0 0
  %1338 = vmatpush1.bf16.msra.mxu0 0
  %1339 = vmatprep.subr.bf16.mxu0 0
  %1340 = vmatpush1.bf16.msra.mxu0 0
  %1341 = vmatprep.subr.bf16.mxu0 0
  %1342 = vmatpush1.bf16.msra.mxu0 %v1319
  %1343 = vmatprep.subr.bf16.mxu0 0
  %1344 = vmatpush2.bf16.msra.mxu0 0
  %1345 = vmatprep.subr.bf16.mxu0 0
  %1346 = vmatpush2.bf16.msra.mxu0 0
  %1347 = vmatprep.subr.bf16.mxu0 0
  %1348 = vmatpush2.bf16.msra.mxu0 0
  %1349 = vmatprep.subr.bf16.mxu0 0
  %1350 = vmatpush2.bf16.msra.mxu0 0
  %1351 = vmatprep.subr.bf16.mxu0 0
  %1352 = vmatpush2.bf16.msra.mxu0 0
  %1353 = vmatprep.subr.bf16.mxu0 0
  %1354 = vmatpush2.bf16.msra.mxu0 0
  %1355 = vmatprep.subr.bf16.mxu0 0
  %1356 = vmatpush2.bf16.msra.mxu0 0
  %1357 = vmatprep.subr.bf16.mxu0 0
  %1358 = vmatpush2.bf16.msra.mxu0 0
  %1359 = vmatprep.mubr.bf16.mxu0 0
  %1360 = vmatmul.mubr.bf16.gmra.mxu0 %v1322
  %v1361 = vpop.f32.mrf.mxu0
  %v1362 = vadd.f32 0.0, %v1361
  %v1363 = vpop.f32.mrf.mxu0
  %v1364 = vpop.f32.mrf.mxu0
  %v1365 = vadd.f32 0.0, %v1364
  %v1366 = vpop.f32.mrf.mxu0
  %1367 = vmatprep.mubr.bf16.mxu0 0
  %1368 = vmatmul.mubr.bf16.gmra.mxu0 %v1325
  %v1369 = vpop.f32.mrf.mxu0
  %v1370 = vadd.f32 0.0, %v1369
  %v1371 = vpop.f32.mrf.mxu0
  %v1372 = vpop.f32.mrf.mxu0
  %v1373 = vpop.f32.mrf.mxu0
  %1374 = vdwg.mxu0
  %v1375 = vadd.f32 %v978, %v1362
  %v1376 = vadd.f32 %v979, %v1365
  %v1377 = vadd.f32 %v980, %v1370
  %1378 = vrot.lane.b32.xlu0 %v1142, 112
  %v1379 = vpop.permute.xlu0 %1378
  %1380 = vrot.lane.b32.xlu0 %v1143, 112
  %v1381 = vpop.permute.xlu0 %1380
  %1382 = vrot.lane.b32.xlu0 %v1142, 80
  %v1383 = vpop.permute.xlu0 %1382
  %1384 = vrot.lane.b32.xlu0 %v1143, 80
  %v1385 = vpop.permute.xlu0 %1384
  %v1387 = vsel %vm249, %v1379, 0
  %v1390 = vsel %vm249, %v1381, 0
  %v1393 = vsel %vm249, %v1383, 0
  %v1396 = vsel %vm249, %v1385, 0
  %1398 = vmatprep.subr.bf16.mxu0 0
  %1399 = vmatpush1.bf16.xpose.msra.mxu0 0
  %1400 = vmatprep.subr.bf16.mxu0 0
  %1401 = vmatpush1.bf16.xpose.msra.mxu0 0
  %1402 = vmatprep.subr.bf16.mxu0 0
  %1403 = vmatpush1.bf16.xpose.msra.mxu0 0
  %1404 = vmatprep.subr.bf16.mxu0 0
  %1405 = vmatpush1.bf16.xpose.msra.mxu0 0
  %1406 = vmatprep.subr.bf16.mxu0 0
  %1407 = vmatpush1.bf16.xpose.msra.mxu0 0
  %1408 = vmatprep.subr.bf16.mxu0 0
  %1409 = vmatpush1.bf16.xpose.msra.mxu0 0
  %1410 = vmatprep.subr.bf16.mxu0 0
  %1411 = vmatpush1.bf16.xpose.msra.mxu0 %v1396
  %1412 = vmatprep.subr.bf16.mxu0 0
  %1413 = vmatpush1.bf16.xpose.msra.mxu0 %v1393
  %1414 = vmatprep.subr.bf16.mxu0 0
  %1415 = vmatpush2.bf16.xpose.msra.mxu0 0
  %1416 = vmatprep.subr.bf16.mxu0 0
  %1417 = vmatpush2.bf16.xpose.msra.mxu0 0
  %1418 = vmatprep.subr.bf16.mxu0 0
  %1419 = vmatpush2.bf16.xpose.msra.mxu0 0
  %1420 = vmatprep.subr.bf16.mxu0 0
  %1421 = vmatpush2.bf16.xpose.msra.mxu0 0
  %1422 = vmatprep.subr.bf16.mxu0 0
  %1423 = vmatpush2.bf16.xpose.msra.mxu0 0
  %1424 = vmatprep.subr.bf16.mxu0 0
  %1425 = vmatpush2.bf16.xpose.msra.mxu0 0
  %1426 = vmatprep.subr.bf16.mxu0 0
  %1427 = vmatpush2.bf16.xpose.msra.mxu0 0
  %1428 = vmatprep.subr.bf16.mxu0 0
  %1429 = vmatpush2.bf16.xpose.msra.mxu0 0
  %1430 = vmatprep.mubr.bf16.mxu0 0
  %1431 = vmatmul.mubr.bf16.gmra.mxu0 %v1387
  %v1432 = vpop.f32.mrf.mxu0
  %v1433 = vadd.f32 0.0, %v1432
  %v1434 = vpop.f32.mrf.mxu0
  %v1435 = vpop.f32.mrf.mxu0
  %v1436 = vadd.f32 0.0, %v1435
  %v1437 = vpop.f32.mrf.mxu0
  %1438 = vmatprep.mubr.bf16.mxu0 0
  %1439 = vmatmul.mubr.bf16.gmra.mxu0 %v1390
  %v1440 = vpop.f32.mrf.mxu0
  %v1441 = vadd.f32 0.0, %v1440
  %v1442 = vpop.f32.mrf.mxu0
  %v1443 = vpop.f32.mrf.mxu0
  %v1444 = vpop.f32.mrf.mxu0
  %1445 = vdwg.mxu0
  %v1446 = vmul.f32 %v1433, 0.25
  %v1447 = vmul.f32 %v1436, 0.25
  %v1448 = vmul.f32 %v1441, 0.25
  %v1449 = vadd.f32 %v1446, %v82
  %v1450 = vadd.f32 %v1447, %v83
  %v1451 = vadd.f32 %v1448, %v84
  %v1452 = vsel %vm316, %v1449, -inf
  %1453 = vmax.xlane.f32.xlu0 %v1452
  %v1454 = vpop.xlane.xlu0 %1453
  %v1455 = vsel %vm316, %v1450, -inf
  %1456 = vmax.xlane.f32.xlu0 %v1455
  %v1457 = vpop.xlane.xlu0 %1456
  %v1458 = vsel %vm316, %v1451, -inf
  %1459 = vmax.xlane.f32.xlu0 %v1458
  %v1460 = vpop.xlane.xlu0 %1459
  %v1461 = vsub.f32 %v1449, %v1454
  %v1462 = vsub.f32 %v1450, %v1457
  %v1463 = vsub.f32 %v1451, %v1460
  %v1464 = vmul.f32 %v1461, 1.442695
  %v1465 = vpow.pop %v1464
  %v1466 = vmul.f32 %v1462, 1.442695
  %v1467 = vpow.pop %v1466
  %v1468 = vmul.f32 %v1463, 1.442695
  %v1469 = vpow.pop %v1468
  %v1470 = vsel %vm316, %v1465, 0.0
  %1471 = vadd.xlane.f32.xlu0 %v1470
  %v1472 = vpop.xlane.xlu0 %1471
  %v1473 = vsel %vm316, %v1467, 0.0
  %1474 = vadd.xlane.f32.xlu0 %v1473
  %v1475 = vpop.xlane.xlu0 %1474
  %v1476 = vsel %vm316, %v1469, 0.0
  %1477 = vadd.xlane.f32.xlu0 %v1476
  %v1478 = vpop.xlane.xlu0 %1477
  %v1479 = vrcp.pop %v1472
  %v1480 = vrcp.pop %v1475
  %v1481 = vrcp.pop %v1478
  %v1482 = vmul.f32 %v1465, %v1479
  %v1483 = vmul.f32 %v1467, %v1480
  %v1484 = vmul.f32 %v1469, %v1481
  %v1485 = vpack.c.bf16 %v1483, %v1482
  %v1486 = vpack.c.bf16 %v1484, %v1484
  %1487 = vrot.lane.b32.xlu0 %v1142, 48
  %v1488 = vpop.permute.xlu0 %1487
  %1489 = vrot.lane.b32.xlu0 %v1143, 48
  %v1490 = vpop.permute.xlu0 %1489
  %v1493 = vsel %vm316, %v1485, 0
  %v1496 = vsel %vm316, %v1486, 0
  %v1499 = vsel %vm363, %v1490, 0
  %1501 = vmatprep.subr.bf16.mxu0 0
  %1502 = vmatpush1.bf16.msra.mxu0 0
  %1503 = vmatprep.subr.bf16.mxu0 0
  %1504 = vmatpush1.bf16.msra.mxu0 0
  %1505 = vmatprep.subr.bf16.mxu0 0
  %1506 = vmatpush1.bf16.msra.mxu0 0
  %1507 = vmatprep.subr.bf16.mxu0 0
  %1508 = vmatpush1.bf16.msra.mxu0 0
  %1509 = vmatprep.subr.bf16.mxu0 0
  %1510 = vmatpush1.bf16.msra.mxu0 0
  %1511 = vmatprep.subr.bf16.mxu0 0
  %1512 = vmatpush1.bf16.msra.mxu0 0
  %1513 = vmatprep.subr.bf16.mxu0 0
  %1514 = vmatpush1.bf16.msra.mxu0 %v1499
  %1515 = vmatprep.subr.bf16.mxu0 0
  %1516 = vmatpush1.bf16.msra.mxu0 %v1488
  %1517 = vmatprep.subr.bf16.mxu0 0
  %1518 = vmatpush2.bf16.msra.mxu0 0
  %1519 = vmatprep.subr.bf16.mxu0 0
  %1520 = vmatpush2.bf16.msra.mxu0 0
  %1521 = vmatprep.subr.bf16.mxu0 0
  %1522 = vmatpush2.bf16.msra.mxu0 0
  %1523 = vmatprep.subr.bf16.mxu0 0
  %1524 = vmatpush2.bf16.msra.mxu0 0
  %1525 = vmatprep.subr.bf16.mxu0 0
  %1526 = vmatpush2.bf16.msra.mxu0 0
  %1527 = vmatprep.subr.bf16.mxu0 0
  %1528 = vmatpush2.bf16.msra.mxu0 0
  %1529 = vmatprep.subr.bf16.mxu0 0
  %1530 = vmatpush2.bf16.msra.mxu0 0
  %1531 = vmatprep.subr.bf16.mxu0 0
  %1532 = vmatpush2.bf16.msra.mxu0 0
  %1533 = vmatprep.mubr.bf16.mxu0 0
  %1534 = vmatmul.mubr.bf16.gmra.mxu0 %v1493
  %v1535 = vpop.f32.mrf.mxu0
  %v1536 = vadd.f32 0.0, %v1535
  %v1537 = vpop.f32.mrf.mxu0
  %v1538 = vpop.f32.mrf.mxu0
  %v1539 = vadd.f32 0.0, %v1538
  %v1540 = vpop.f32.mrf.mxu0
  %1541 = vmatprep.mubr.bf16.mxu0 0
  %1542 = vmatmul.mubr.bf16.gmra.mxu0 %v1496
  %v1543 = vpop.f32.mrf.mxu0
  %v1544 = vadd.f32 0.0, %v1543
  %v1545 = vpop.f32.mrf.mxu0
  %v1546 = vpop.f32.mrf.mxu0
  %v1547 = vpop.f32.mrf.mxu0
  %1548 = vdwg.mxu0
  %v1549 = vpack.c.bf16 %v1539, %v1536
  %v1550 = vpack.c.bf16 %v1544, %v1544
  %v1553 = vunpack.c.l.b16 %v989
  %v1554 = vunpack.c.l.b16 %v990
  %v1555 = vpack.c.b16 %v1554, %v1553
  %v1558 = vsel %vm249, %v1549, 0
  %v1561 = vsel %vm249, %v1550, 0
  %1563 = vmatprep.subr.bf16.mxu0 0
  %1564 = vmatpush1.bf16.msra.mxu0 0
  %1565 = vmatprep.subr.bf16.mxu0 0
  %1566 = vmatpush1.bf16.msra.mxu0 0
  %1567 = vmatprep.subr.bf16.mxu0 0
  %1568 = vmatpush1.bf16.msra.mxu0 0
  %1569 = vmatprep.subr.bf16.mxu0 0
  %1570 = vmatpush1.bf16.msra.mxu0 0
  %1571 = vmatprep.subr.bf16.mxu0 0
  %1572 = vmatpush1.bf16.msra.mxu0 0
  %1573 = vmatprep.subr.bf16.mxu0 0
  %1574 = vmatpush1.bf16.msra.mxu0 0
  %1575 = vmatprep.subr.bf16.mxu0 0
  %1576 = vmatpush1.bf16.msra.mxu0 0
  %1577 = vmatprep.subr.bf16.mxu0 0
  %1578 = vmatpush1.bf16.msra.mxu0 %v1555
  %1579 = vmatprep.subr.bf16.mxu0 0
  %1580 = vmatpush2.bf16.msra.mxu0 0
  %1581 = vmatprep.subr.bf16.mxu0 0
  %1582 = vmatpush2.bf16.msra.mxu0 0
  %1583 = vmatprep.subr.bf16.mxu0 0
  %1584 = vmatpush2.bf16.msra.mxu0 0
  %1585 = vmatprep.subr.bf16.mxu0 0
  %1586 = vmatpush2.bf16.msra.mxu0 0
  %1587 = vmatprep.subr.bf16.mxu0 0
  %1588 = vmatpush2.bf16.msra.mxu0 0
  %1589 = vmatprep.subr.bf16.mxu0 0
  %1590 = vmatpush2.bf16.msra.mxu0 0
  %1591 = vmatprep.subr.bf16.mxu0 0
  %1592 = vmatpush2.bf16.msra.mxu0 0
  %1593 = vmatprep.subr.bf16.mxu0 0
  %1594 = vmatpush2.bf16.msra.mxu0 0
  %1595 = vmatprep.mubr.bf16.mxu0 0
  %1596 = vmatmul.mubr.bf16.gmra.mxu0 %v1558
  %v1597 = vpop.f32.mrf.mxu0
  %v1598 = vadd.f32 0.0, %v1597
  %v1599 = vpop.f32.mrf.mxu0
  %v1600 = vpop.f32.mrf.mxu0
  %v1601 = vadd.f32 0.0, %v1600
  %v1602 = vpop.f32.mrf.mxu0
  %1603 = vmatprep.mubr.bf16.mxu0 0
  %1604 = vmatmul.mubr.bf16.gmra.mxu0 %v1561
  %v1605 = vpop.f32.mrf.mxu0
  %v1606 = vadd.f32 0.0, %v1605
  %v1607 = vpop.f32.mrf.mxu0
  %v1608 = vpop.f32.mrf.mxu0
  %v1609 = vpop.f32.mrf.mxu0
  %1610 = vdwg.mxu0
  %v1611 = vadd.f32 %v1375, %v1598
  %v1612 = vadd.f32 %v1376, %v1601
  %v1613 = vadd.f32 %v1377, %v1606
  %s1614 = scalar_lea.vmem %s6, 1
  %v1615 = vld [vmem:[%s1614] sm:$0x1]
  %v1617 = vlaneseq
  %v1618 = vshrl.u32 %v1617, 7
  %v1619 = vsub.s32 0, %v1618
  %v1620 = vrot.slane %v1615, %v1619
  %v1622 = vadd.f32 %v1611, %v1620
  %v1623 = vadd.f32 %v1612, %v1620
  %v1624 = vadd.f32 %v1613, %v1620
  %s1625 = scalar_lea.vmem %s7, 1
  %v1626 = vld [vmem:[%s1625] sm:$0x1]
  %s1627 = scalar_lea.vmem %s8, 1
  %v1628 = vld [vmem:[%s1627] sm:$0x1]
  %v1629 = vsel %vm107, %v1622, 0.0
  %1630 = vadd.xlane.f32.xlu0 %v1629
  %v1631 = vpop.xlane.xlu0 %1630
  %v1632 = vsel %vm107, %v1623, 0.0
  %1633 = vadd.xlane.f32.xlu0 %v1632
  %v1634 = vpop.xlane.xlu0 %1633
  %v1635 = vsel %vm107, %v1624, 0.0
  %1636 = vadd.xlane.f32.xlu0 %v1635
  %v1637 = vpop.xlane.xlu0 %1636
  %v1638 = vmul.f32 %v1631, %v117
  %v1639 = vmul.f32 %v1634, %v117
  %v1640 = vmul.f32 %v1637, %v117
  %v1641 = vsub.f32 %v1622, %v1638
  %v1642 = vsub.f32 %v1623, %v1639
  %v1643 = vsub.f32 %v1624, %v1640
  %v1644 = vmul.f32 %v1641, %v1641
  %v1645 = vmul.f32 %v1642, %v1642
  %v1646 = vmul.f32 %v1643, %v1643
  %v1647 = vsel %vm107, %v1644, 0.0
  %1648 = vadd.xlane.f32.xlu0 %v1647
  %v1649 = vpop.xlane.xlu0 %1648
  %v1650 = vsel %vm107, %v1645, 0.0
  %1651 = vadd.xlane.f32.xlu0 %v1650
  %v1652 = vpop.xlane.xlu0 %1651
  %v1653 = vsel %vm107, %v1646, 0.0
  %1654 = vadd.xlane.f32.xlu0 %v1653
  %v1655 = vpop.xlane.xlu0 %1654
  %v1656 = vmul.f32 %v1649, %v117
  %v1657 = vmul.f32 %v1652, %v117
  %v1658 = vmul.f32 %v1655, %v117
  %v1659 = vadd.f32 %v1656, 1e-06
  %v1660 = vadd.f32 %v1657, 1e-06
  %v1661 = vadd.f32 %v1658, 1e-06
  %v1662 = vrsqrt.pop %v1659
  %v1663 = vrsqrt.pop %v1660
  %v1664 = vrsqrt.pop %v1661
  %v1665 = vmul.f32 %v1641, %v1662
  %v1666 = vmul.f32 %v1642, %v1663
  %v1667 = vmul.f32 %v1643, %v1664
  %v1669 = vlaneseq
  %v1670 = vshrl.u32 %v1669, 7
  %v1671 = vsub.s32 0, %v1670
  %v1672 = vrot.slane %v1626, %v1671
  %v1674 = vmul.f32 %v1665, %v1672
  %v1675 = vmul.f32 %v1666, %v1672
  %v1676 = vmul.f32 %v1667, %v1672
  %v1678 = vlaneseq
  %v1679 = vshrl.u32 %v1678, 7
  %v1680 = vsub.s32 0, %v1679
  %v1681 = vrot.slane %v1628, %v1680
  %v1683 = vadd.f32 %v1674, %v1681
  %v1684 = vadd.f32 %v1675, %v1681
  %v1685 = vadd.f32 %v1676, %v1681
  %v1686 = vpack.c.bf16 %v1684, %v1683
  %v1687 = vpack.c.bf16 %v1685, %v1685
  %s1688 = scalar_lea.vmem %s10, 1
  %v1689 = vld [vmem:[%s1688] sm:$0x1]
  %v1691 = vlaneseq
  %v1692 = vshrl.u32 %v1691, 7
  %v1693 = vsub.s32 0, %v1692
  %v1694 = vrot.slane %v1689, %v1693
  %v1700 = vunpack.c.l.b16 %v992
  %v1701 = vunpack.c.l.b16 %v993
  %v1702 = vunpack.c.l.b16 %v994
  %v1703 = vunpack.c.l.b16 %v995
  %v1704 = vpack.c.b16 %v1701, %v1700
  %v1705 = vpack.c.b16 %v1703, %v1702
  %v1709 = vsel %vm107, %v1686, 0
  %v1712 = vsel %vm107, %v1687, 0
  %1714 = vmatprep.subr.bf16.mxu0 0
  %1715 = vmatpush1.bf16.msra.mxu0 0
  %1716 = vmatprep.subr.bf16.mxu0 0
  %1717 = vmatpush1.bf16.msra.mxu0 0
  %1718 = vmatprep.subr.bf16.mxu0 0
  %1719 = vmatpush1.bf16.msra.mxu0 0
  %1720 = vmatprep.subr.bf16.mxu0 0
  %1721 = vmatpush1.bf16.msra.mxu0 0
  %1722 = vmatprep.subr.bf16.mxu0 0
  %1723 = vmatpush1.bf16.msra.mxu0 0
  %1724 = vmatprep.subr.bf16.mxu0 0
  %1725 = vmatpush1.bf16.msra.mxu0 0
  %1726 = vmatprep.subr.bf16.mxu0 0
  %1727 = vmatpush1.bf16.msra.mxu0 %v1705
  %1728 = vmatprep.subr.bf16.mxu0 0
  %1729 = vmatpush1.bf16.msra.mxu0 %v1704
  %1730 = vmatprep.subr.bf16.mxu0 0
  %1731 = vmatpush2.bf16.msra.mxu0 0
  %1732 = vmatprep.subr.bf16.mxu0 0
  %1733 = vmatpush2.bf16.msra.mxu0 0
  %1734 = vmatprep.subr.bf16.mxu0 0
  %1735 = vmatpush2.bf16.msra.mxu0 0
  %1736 = vmatprep.subr.bf16.mxu0 0
  %1737 = vmatpush2.bf16.msra.mxu0 0
  %1738 = vmatprep.subr.bf16.mxu0 0
  %1739 = vmatpush2.bf16.msra.mxu0 0
  %1740 = vmatprep.subr.bf16.mxu0 0
  %1741 = vmatpush2.bf16.msra.mxu0 0
  %1742 = vmatprep.subr.bf16.mxu0 0
  %1743 = vmatpush2.bf16.msra.mxu0 0
  %1744 = vmatprep.subr.bf16.mxu0 0
  %1745 = vmatpush2.bf16.msra.mxu0 0
  %1746 = vmatprep.mubr.bf16.mxu0 0
  %1747 = vmatmul.mubr.bf16.gmra.mxu0 %v1709
  %v1748 = vpop.f32.mrf.mxu0
  %v1749 = vadd.f32 %v1694, %v1748
  %v1750 = vpop.f32.mrf.mxu0
  %v1751 = vpop.f32.mrf.mxu0
  %v1752 = vadd.f32 %v1694, %v1751
  %v1753 = vpop.f32.mrf.mxu0
  %1754 = vmatprep.mubr.bf16.mxu0 0
  %1755 = vmatmul.mubr.bf16.gmra.mxu0 %v1712
  %v1756 = vpop.f32.mrf.mxu0
  %v1757 = vadd.f32 %v1694, %v1756
  %v1758 = vpop.f32.mrf.mxu0
  %v1759 = vpop.f32.mrf.mxu0
  %v1760 = vpop.f32.mrf.mxu0
  %1761 = vdwg.mxu0
  %v1762 = vmul.f32 %v1749, %v1749
  %v1763 = vmul.f32 %v1752, %v1752
  %v1764 = vmul.f32 %v1757, %v1757
  %v1765 = vmul.f32 %v1749, %v1762
  %v1766 = vmul.f32 %v1752, %v1763
  %v1767 = vmul.f32 %v1757, %v1764
  %v1768 = vmul.f32 %v1765, 0.044715
  %v1769 = vmul.f32 %v1766, 0.044715
  %v1770 = vmul.f32 %v1767, 0.044715
  %v1771 = vadd.f32 %v1749, %v1768
  %v1772 = vadd.f32 %v1752, %v1769
  %v1773 = vadd.f32 %v1757, %v1770
  %v1774 = vmul.f32 %v1771, 0.7978846
  %v1775 = vmul.f32 %v1772, 0.7978846
  %v1776 = vmul.f32 %v1773, 0.7978846
  %v1777 = vtanh.pop %v1774
  %v1778 = vtanh.pop %v1775
  %v1779 = vtanh.pop %v1776
  %v1780 = vadd.f32 %v1777, 1.0
  %v1781 = vadd.f32 %v1778, 1.0
  %v1782 = vadd.f32 %v1779, 1.0
  %v1783 = vmul.f32 %v1780, 0.5
  %v1784 = vmul.f32 %v1781, 0.5
  %v1785 = vmul.f32 %v1782, 0.5
  %v1786 = vmul.f32 %v1749, %v1783
  %v1787 = vmul.f32 %v1752, %v1784
  %v1788 = vmul.f32 %v1757, %v1785
  %v1789 = vpack.c.bf16 %v1787, %v1786
  %v1790 = vpack.c.bf16 %v1788, %v1788
  %v1799 = vunpack.c.l.b16 %v997
  %v1800 = vunpack.c.l.b16 %v998
  %v1801 = vunpack.c.l.b16 %v999
  %v1802 = vunpack.c.l.b16 %v1000
  %v1803 = vunpack.c.l.b16 %v1001
  %v1804 = vunpack.c.l.b16 %v1002
  %v1805 = vunpack.c.l.b16 %v1003
  %v1806 = vunpack.c.l.b16 %v1004
  %v1807 = vpack.c.b16 %v1800, %v1799
  %v1808 = vpack.c.b16 %v1802, %v1801
  %v1809 = vpack.c.b16 %v1804, %v1803
  %v1810 = vpack.c.b16 %v1806, %v1805
  %v1816 = vsel %vm913, %v1789, 0
  %v1819 = vsel %vm913, %v1790, 0
  %1821 = vmatprep.subr.bf16.mxu0 0
  %1822 = vmatpush1.bf16.msra.mxu0 0
  %1823 = vmatprep.subr.bf16.mxu0 0
  %1824 = vmatpush1.bf16.msra.mxu0 0
  %1825 = vmatprep.subr.bf16.mxu0 0
  %1826 = vmatpush1.bf16.msra.mxu0 0
  %1827 = vmatprep.subr.bf16.mxu0 0
  %1828 = vmatpush1.bf16.msra.mxu0 0
  %1829 = vmatprep.subr.bf16.mxu0 0
  %1830 = vmatpush1.bf16.msra.mxu0 %v1810
  %1831 = vmatprep.subr.bf16.mxu0 0
  %1832 = vmatpush1.bf16.msra.mxu0 %v1809
  %1833 = vmatprep.subr.bf16.mxu0 0
  %1834 = vmatpush1.bf16.msra.mxu0 %v1808
  %1835 = vmatprep.subr.bf16.mxu0 0
  %1836 = vmatpush1.bf16.msra.mxu0 %v1807
  %1837 = vmatprep.subr.bf16.mxu0 0
  %1838 = vmatpush2.bf16.msra.mxu0 0
  %1839 = vmatprep.subr.bf16.mxu0 0
  %1840 = vmatpush2.bf16.msra.mxu0 0
  %1841 = vmatprep.subr.bf16.mxu0 0
  %1842 = vmatpush2.bf16.msra.mxu0 0
  %1843 = vmatprep.subr.bf16.mxu0 0
  %1844 = vmatpush2.bf16.msra.mxu0 0
  %1845 = vmatprep.subr.bf16.mxu0 0
  %1846 = vmatpush2.bf16.msra.mxu0 0
  %1847 = vmatprep.subr.bf16.mxu0 0
  %1848 = vmatpush2.bf16.msra.mxu0 0
  %1849 = vmatprep.subr.bf16.mxu0 0
  %1850 = vmatpush2.bf16.msra.mxu0 0
  %1851 = vmatprep.subr.bf16.mxu0 0
  %1852 = vmatpush2.bf16.msra.mxu0 0
  %1853 = vmatprep.mubr.bf16.mxu0 0
  %1854 = vmatmul.mubr.bf16.gmra.mxu0 %v1816
  %v1855 = vpop.f32.mrf.mxu0
  %v1856 = vadd.f32 0.0, %v1855
  %v1857 = vpop.f32.mrf.mxu0
  %v1858 = vpop.f32.mrf.mxu0
  %v1859 = vadd.f32 0.0, %v1858
  %v1860 = vpop.f32.mrf.mxu0
  %1861 = vmatprep.mubr.bf16.mxu0 0
  %1862 = vmatmul.mubr.bf16.gmra.mxu0 %v1819
  %v1863 = vpop.f32.mrf.mxu0
  %v1864 = vadd.f32 0.0, %v1863
  %v1865 = vpop.f32.mrf.mxu0
  %v1866 = vpop.f32.mrf.mxu0
  %v1867 = vpop.f32.mrf.mxu0
  %1868 = vdwg.mxu0
  %v1869 = vadd.f32 %v1622, %v1856
  %v1870 = vadd.f32 %v1623, %v1859
  %v1871 = vadd.f32 %v1624, %v1864
  %s1872 = scalar_lea.vmem %s12, 1
  %v1873 = vld [vmem:[%s1872] sm:$0x1]
  %v1875 = vlaneseq
  %v1876 = vshrl.u32 %v1875, 7
  %v1877 = vsub.s32 0, %v1876
  %v1878 = vrot.slane %v1873, %v1877
  %v1880 = vadd.f32 %v1869, %v1878
  %v1881 = vadd.f32 %v1870, %v1878
  %v1882 = vadd.f32 %v1871, %v1878
  %v1883 = vpack.c.bf16 %v1881, %v1880
  %v1884 = vpack.c.bf16 %v1882, %v1882
  %v1885 = vld [vmem:[%s13] sm:$0xf]
  %v1886 = vld [vmem:[%s13 + $0x4] sm:$0xf]
  %v1887 = vld [vmem:[%s13 + $0x8] sm:$0xf]
  %v1888 = vld [vmem:[%s13 + $0xc] sm:$0xf]
  %v1889 = vld [vmem:[%s14] sm:$0x1]
  %v1891 = vlaneseq
  %v1892 = vshrl.u32 %v1891, 7
  %v1893 = vsub.s32 0, %v1892
  %v1894 = vrot.slane %v1889, %v1893
  %v1900 = vunpack.c.l.b16 %v1885
  %v1901 = vunpack.c.l.b16 %v1886
  %v1902 = vunpack.c.l.b16 %v1887
  %v1903 = vunpack.c.l.b16 %v1888
  %v1904 = vpack.c.b16 %v1901, %v1900
  %v1905 = vpack.c.b16 %v1903, %v1902
  %v1909 = vsel %vm107, %v1883, 0
  %v1912 = vsel %vm107, %v1884, 0
  %1914 = vmatprep.subr.bf16.mxu0 0
  %1915 = vmatpush1.bf16.msra.mxu0 0
  %1916 = vmatprep.subr.bf16.mxu0 0
  %1917 = vmatpush1.bf16.msra.mxu0 0
  %1918 = vmatprep.subr.bf16.mxu0 0
  %1919 = vmatpush1.bf16.msra.mxu0 0
  %1920 = vmatprep.subr.bf16.mxu0 0
  %1921 = vmatpush1.bf16.msra.mxu0 0
  %1922 = vmatprep.subr.bf16.mxu0 0
  %1923 = vmatpush1.bf16.msra.mxu0 0
  %1924 = vmatprep.subr.bf16.mxu0 0
  %1925 = vmatpush1.bf16.msra.mxu0 0
  %1926 = vmatprep.subr.bf16.mxu0 0
  %1927 = vmatpush1.bf16.msra.mxu0 %v1905
  %1928 = vmatprep.subr.bf16.mxu0 0
  %1929 = vmatpush1.bf16.msra.mxu0 %v1904
  %1930 = vmatprep.subr.bf16.mxu0 0
  %1931 = vmatpush2.bf16.msra.mxu0 0
  %1932 = vmatprep.subr.bf16.mxu0 0
  %1933 = vmatpush2.bf16.msra.mxu0 0
  %1934 = vmatprep.subr.bf16.mxu0 0
  %1935 = vmatpush2.bf16.msra.mxu0 0
  %1936 = vmatprep.subr.bf16.mxu0 0
  %1937 = vmatpush2.bf16.msra.mxu0 0
  %1938 = vmatprep.subr.bf16.mxu0 0
  %1939 = vmatpush2.bf16.msra.mxu0 0
  %1940 = vmatprep.subr.bf16.mxu0 0
  %1941 = vmatpush2.bf16.msra.mxu0 0
  %1942 = vmatprep.subr.bf16.mxu0 0
  %1943 = vmatpush2.bf16.msra.mxu0 0
  %1944 = vmatprep.subr.bf16.mxu0 0
  %1945 = vmatpush2.bf16.msra.mxu0 0
  %1946 = vmatprep.mubr.bf16.mxu0 0
  %1947 = vmatmul.mubr.bf16.gmra.mxu0 %v1909
  %v1948 = vpop.f32.mrf.mxu0
  %v1949 = vadd.f32 %v1894, %v1948
  %v1950 = vpop.f32.mrf.mxu0
  %v1951 = vpop.f32.mrf.mxu0
  %v1952 = vadd.f32 %v1894, %v1951
  %v1953 = vpop.f32.mrf.mxu0
  %1954 = vmatprep.mubr.bf16.mxu0 0
  %1955 = vmatmul.mubr.bf16.gmra.mxu0 %v1912
  %v1956 = vpop.f32.mrf.mxu0
  %v1957 = vadd.f32 %v1894, %v1956
  %v1958 = vpop.f32.mrf.mxu0
  %v1959 = vpop.f32.mrf.mxu0
  %v1960 = vpop.f32.mrf.mxu0
  %1961 = vdwg.mxu0
  %v1962 = vld [vmem:[%s15] sm:$0xff]
  %v1963 = vld [vmem:[%s15 + $0x8] sm:$0xff]
  %v1964 = vld [vmem:[%s15 + $0x10] sm:$0xff]
  %v1965 = vld [vmem:[%s15 + $0x18] sm:$0xff]
  %v1966 = vld [vmem:[%s15 + $0x20] sm:$0xff]
  %v1967 = vld [vmem:[%s15 + $0x28] sm:$0xff]
  %v1968 = vld [vmem:[%s15 + $0x30] sm:$0xff]
  %v1969 = vld [vmem:[%s15 + $0x38] sm:$0xff]
  %v1970 = vld [vmem:[%s15 + $0x40] sm:$0xff]
  %v1971 = vld [vmem:[%s15 + $0x48] sm:$0xff]
  %v1972 = vld [vmem:[%s15 + $0x50] sm:$0xff]
  %v1973 = vld [vmem:[%s15 + $0x58] sm:$0xff]
  %vm1974 = vcmask 48128
  %v1976 = vsel %vm1974, %v1962, 0
  %v1979 = vsel %vm1974, %v1963, 0
  %v1982 = vsel %vm1974, %v1964, 0
  %v1985 = vsel %vm1974, %v1965, 0
  %v1988 = vsel %vm1974, %v1966, 0
  %v1991 = vsel %vm1974, %v1967, 0
  %v1994 = vsel %vm1974, %v1968, 0
  %v1997 = vsel %vm1974, %v1969, 0
  %v2000 = vsel %vm1974, %v1970, 0
  %v2003 = vsel %vm1974, %v1971, 0
  %v2006 = vsel %vm1974, %v1972, 0
  %v2009 = vsel %vm1974, %v1973, 0
  %vm2011 = vcmask 1045504
  %v2013 = vsel %vm2011, %v1949, 0
  %2015 = vmatprep.subr.mxu0 0.0
  %2016 = vmatpush1.msra.mxu0 0.0
  %2017 = vmatprep.subr.mxu0 0.0
  %2018 = vmatpush1.msra.mxu0 0.0
  %2019 = vmatprep.subr.mxu0 0.0
  %2020 = vmatpush1.msra.mxu0 0.0
  %2021 = vmatprep.subr.mxu0 0.0
  %2022 = vmatpush1.msra.mxu0 0.0
  %2023 = vmatprep.subr.mxu0 0.0
  %2024 = vmatpush1.msra.mxu0 0.0
  %2025 = vmatprep.subr.mxu0 0.0
  %2026 = vmatpush1.msra.mxu0 0.0
  %2027 = vmatprep.subr.mxu0 0.0
  %2028 = vmatpush1.msra.mxu0 0.0
  %2029 = vmatprep.subr.mxu0 0.0
  %2030 = vmatpush1.msra.mxu0 0.0
  %2031 = vmatprep.subr.mxu0 0.0
  %2032 = vmatpush1.msra.mxu0 0.0
  %2033 = vmatprep.subr.mxu0 0.0
  %2034 = vmatpush1.msra.mxu0 0.0
  %2035 = vmatprep.subr.mxu0 0.0
  %2036 = vmatpush1.msra.mxu0 0.0
  %2037 = vmatprep.subr.mxu0 0.0
  %2038 = vmatpush1.msra.mxu0 0.0
  %2039 = vmatprep.subr.mxu0 0.0
  %2040 = vmatpush1.msra.mxu0 0.0
  %2041 = vmatprep.subr.mxu0 0.0
  %2042 = vmatpush1.msra.mxu0 0.0
  %2043 = vmatprep.subr.mxu0 0.0
  %2044 = vmatpush1.msra.mxu0 0.0
  %2045 = vmatprep.subr.mxu0 0.0
  %2046 = vmatpush1.msra.mxu0 %v2013
  %2047 = vmatprep.subr.mxu0 0.0
  %2048 = vmatpush2.msra.mxu0 0.0
  %2049 = vmatprep.subr.mxu0 0.0
  %2050 = vmatpush2.msra.mxu0 0.0
  %2051 = vmatprep.subr.mxu0 0.0
  %2052 = vmatpush2.msra.mxu0 0.0
  %2053 = vmatprep.subr.mxu0 0.0
  %2054 = vmatpush2.msra.mxu0 0.0
  %2055 = vmatprep.subr.mxu0 0.0
  %2056 = vmatpush2.msra.mxu0 0.0
  %2057 = vmatprep.subr.mxu0 0.0
  %2058 = vmatpush2.msra.mxu0 0.0
  %2059 = vmatprep.subr.mxu0 0.0
  %2060 = vmatpush2.msra.mxu0 0.0
  %2061 = vmatprep.subr.mxu0 0.0
  %2062 = vmatpush2.msra.mxu0 0.0
  %2063 = vmatprep.subr.mxu0 0.0
  %2064 = vmatpush2.msra.mxu0 0.0
  %2065 = vmatprep.subr.mxu0 0.0
  %2066 = vmatpush2.msra.mxu0 0.0
  %2067 = vmatprep.subr.mxu0 0.0
  %2068 = vmatpush2.msra.mxu0 0.0
  %2069 = vmatprep.subr.mxu0 0.0
  %2070 = vmatpush2.msra.mxu0 0.0
  %2071 = vmatprep.subr.mxu0 0.0
  %2072 = vmatpush2.msra.mxu0 0.0
  %2073 = vmatprep.subr.mxu0 0.0
  %2074 = vmatpush2.msra.mxu0 0.0
  %2075 = vmatprep.subr.mxu0 0.0
  %2076 = vmatpush2.msra.mxu0 0.0
  %2077 = vmatprep.subr.mxu0 0.0
  %2078 = vmatpush2.msra.mxu0 0.0
  %2079 = vmatprep.mubr.f32.mxu0 0.0
  %2080 = vmatmul.mubr.f32.gmra.mxu0 %v1976
  %v2081 = vpop.f32.mrf.mxu0
  %v2082 = vadd.f32 0.0, %v2081
  %v2083 = vpop.f32.mrf.mxu0
  %2084 = vmatprep.mubr.f32.mxu0 0.0
  %2085 = vmatmul.mubr.f32.gmra.mxu0 %v1979
  %v2086 = vpop.f32.mrf.mxu0
  %v2087 = vadd.f32 0.0, %v2086
  %v2088 = vpop.f32.mrf.mxu0
  %2089 = vmatprep.mubr.f32.mxu0 0.0
  %2090 = vmatmul.mubr.f32.gmra.mxu0 %v1982
  %v2091 = vpop.f32.mrf.mxu0
  %v2092 = vadd.f32 0.0, %v2091
  %v2093 = vpop.f32.mrf.mxu0
  %2094 = vmatprep.mubr.f32.mxu0 0.0
  %2095 = vmatmul.mubr.f32.gmra.mxu0 %v1985
  %v2096 = vpop.f32.mrf.mxu0
  %v2097 = vadd.f32 0.0, %v2096
  %v2098 = vpop.f32.mrf.mxu0
  %2099 = vmatprep.mubr.f32.mxu0 0.0
  %2100 = vmatmul.mubr.f32.gmra.mxu0 %v1988
  %v2101 = vpop.f32.mrf.mxu0
  %v2102 = vadd.f32 0.0, %v2101
  %v2103 = vpop.f32.mrf.mxu0
  %2104 = vmatprep.mubr.f32.mxu0 0.0
  %2105 = vmatmul.mubr.f32.gmra.mxu0 %v1991
  %v2106 = vpop.f32.mrf.mxu0
  %v2107 = vadd.f32 0.0, %v2106
  %v2108 = vpop.f32.mrf.mxu0
  %2109 = vmatprep.mubr.f32.mxu0 0.0
  %2110 = vmatmul.mubr.f32.gmra.mxu0 %v1994
  %v2111 = vpop.f32.mrf.mxu0
  %v2112 = vadd.f32 0.0, %v2111
  %v2113 = vpop.f32.mrf.mxu0
  %2114 = vmatprep.mubr.f32.mxu0 0.0
  %2115 = vmatmul.mubr.f32.gmra.mxu0 %v1997
  %v2116 = vpop.f32.mrf.mxu0
  %v2117 = vadd.f32 0.0, %v2116
  %v2118 = vpop.f32.mrf.mxu0
  %2119 = vmatprep.mubr.f32.mxu0 0.0
  %2120 = vmatmul.mubr.f32.gmra.mxu0 %v2000
  %v2121 = vpop.f32.mrf.mxu0
  %v2122 = vadd.f32 0.0, %v2121
  %v2123 = vpop.f32.mrf.mxu0
  %2124 = vmatprep.mubr.f32.mxu0 0.0
  %2125 = vmatmul.mubr.f32.gmra.mxu0 %v2003
  %v2126 = vpop.f32.mrf.mxu0
  %v2127 = vadd.f32 0.0, %v2126
  %v2128 = vpop.f32.mrf.mxu0
  %2129 = vmatprep.mubr.f32.mxu0 0.0
  %2130 = vmatmul.mubr.f32.gmra.mxu0 %v2006
  %v2131 = vpop.f32.mrf.mxu0
  %v2132 = vadd.f32 0.0, %v2131
  %v2133 = vpop.f32.mrf.mxu0
  %2134 = vmatprep.mubr.f32.mxu0 0.0
  %2135 = vmatmul.mubr.f32.gmra.mxu0 %v2009
  %v2136 = vpop.f32.mrf.mxu0
  %v2137 = vadd.f32 0.0, %v2136
  %v2138 = vpop.f32.mrf.mxu0
  %2139 = vdwg.mxu0
  %2140 = vst [vmem:[%s16] sm:$0xff] %v2082
  %2141 = vst [vmem:[%s16 + $0x8] sm:$0xff] %v2087
  %2142 = vst [vmem:[%s16 + $0x10] sm:$0xff] %v2092
  %2143 = vst [vmem:[%s16 + $0x18] sm:$0xff] %v2097
  %2144 = vst [vmem:[%s16 + $0x20] sm:$0xff] %v2102
  %2145 = vst [vmem:[%s16 + $0x28] sm:$0xff] %v2107
  %2146 = vst [vmem:[%s16 + $0x30] sm:$0xff] %v2112
  %2147 = vst [vmem:[%s16 + $0x38] sm:$0xff] %v2117
  %2148 = vst [vmem:[%s16 + $0x40] sm:$0xff] %v2122
  %2149 = vst [vmem:[%s16 + $0x48] sm:$0xff] %v2127
  %2150 = vst [vmem:[%s16 + $0x50] sm:$0xff] %v2132
  %2151 = vst [vmem:[%s16 + $0x58] sm:$0xff] %v2137
  %vm2153 = vcmask 1041408
  %v2154 = vrot.slane %v1949, 6
  %v2155 = vrot.slane %v1952, 6
  %v2156 = vsel %vm2153, %v2154, %v2155
  %v2157 = vsel %vm2011, %v2156, 0
  %2159 = vmatprep.subr.mxu0 0.0
  %2160 = vmatpush1.msra.mxu0 0.0
  %2161 = vmatprep.subr.mxu0 0.0
  %2162 = vmatpush1.msra.mxu0 0.0
  %2163 = vmatprep.subr.mxu0 0.0
  %2164 = vmatpush1.msra.mxu0 0.0
  %2165 = vmatprep.subr.mxu0 0.0
  %2166 = vmatpush1.msra.mxu0 0.0
  %2167 = vmatprep.subr.mxu0 0.0
  %2168 = vmatpush1.msra.mxu0 0.0
  %2169 = vmatprep.subr.mxu0 0.0
  %2170 = vmatpush1.msra.mxu0 0.0
  %2171 = vmatprep.subr.mxu0 0.0
  %2172 = vmatpush1.msra.mxu0 0.0
  %2173 = vmatprep.subr.mxu0 0.0
  %2174 = vmatpush1.msra.mxu0 0.0
  %2175 = vmatprep.subr.mxu0 0.0
  %2176 = vmatpush1.msra.mxu0 0.0
  %2177 = vmatprep.subr.mxu0 0.0
  %2178 = vmatpush1.msra.mxu0 0.0
  %2179 = vmatprep.subr.mxu0 0.0
  %2180 = vmatpush1.msra.mxu0 0.0
  %2181 = vmatprep.subr.mxu0 0.0
  %2182 = vmatpush1.msra.mxu0 0.0
  %2183 = vmatprep.subr.mxu0 0.0
  %2184 = vmatpush1.msra.mxu0 0.0
  %2185 = vmatprep.subr.mxu0 0.0
  %2186 = vmatpush1.msra.mxu0 0.0
  %2187 = vmatprep.subr.mxu0 0.0
  %2188 = vmatpush1.msra.mxu0 0.0
  %2189 = vmatprep.subr.mxu0 0.0
  %2190 = vmatpush1.msra.mxu0 %v2157
  %2191 = vmatprep.subr.mxu0 0.0
  %2192 = vmatpush2.msra.mxu0 0.0
  %2193 = vmatprep.subr.mxu0 0.0
  %2194 = vmatpush2.msra.mxu0 0.0
  %2195 = vmatprep.subr.mxu0 0.0
  %2196 = vmatpush2.msra.mxu0 0.0
  %2197 = vmatprep.subr.mxu0 0.0
  %2198 = vmatpush2.msra.mxu0 0.0
  %2199 = vmatprep.subr.mxu0 0.0
  %2200 = vmatpush2.msra.mxu0 0.0
  %2201 = vmatprep.subr.mxu0 0.0
  %2202 = vmatpush2.msra.mxu0 0.0
  %2203 = vmatprep.subr.mxu0 0.0
  %2204 = vmatpush2.msra.mxu0 0.0
  %2205 = vmatprep.subr.mxu0 0.0
  %2206 = vmatpush2.msra.mxu0 0.0
  %2207 = vmatprep.subr.mxu0 0.0
  %2208 = vmatpush2.msra.mxu0 0.0
  %2209 = vmatprep.subr.mxu0 0.0
  %2210 = vmatpush2.msra.mxu0 0.0
  %2211 = vmatprep.subr.mxu0 0.0
  %2212 = vmatpush2.msra.mxu0 0.0
  %2213 = vmatprep.subr.mxu0 0.0
  %2214 = vmatpush2.msra.mxu0 0.0
  %2215 = vmatprep.subr.mxu0 0.0
  %2216 = vmatpush2.msra.mxu0 0.0
  %2217 = vmatprep.subr.mxu0 0.0
  %2218 = vmatpush2.msra.mxu0 0.0
  %2219 = vmatprep.subr.mxu0 0.0
  %2220 = vmatpush2.msra.mxu0 0.0
  %2221 = vmatprep.subr.mxu0 0.0
  %2222 = vmatpush2.msra.mxu0 0.0
  %2223 = vmatprep.mubr.f32.mxu0 0.0
  %2224 = vmatmul.mubr.f32.gmra.mxu0 %v1976
  %v2225 = vpop.f32.mrf.mxu0
  %v2226 = vadd.f32 0.0, %v2225
  %v2227 = vpop.f32.mrf.mxu0
  %2228 = vmatprep.mubr.f32.mxu0 0.0
  %2229 = vmatmul.mubr.f32.gmra.mxu0 %v1979
  %v2230 = vpop.f32.mrf.mxu0
  %v2231 = vadd.f32 0.0, %v2230
  %v2232 = vpop.f32.mrf.mxu0
  %2233 = vmatprep.mubr.f32.mxu0 0.0
  %2234 = vmatmul.mubr.f32.gmra.mxu0 %v1982
  %v2235 = vpop.f32.mrf.mxu0
  %v2236 = vadd.f32 0.0, %v2235
  %v2237 = vpop.f32.mrf.mxu0
  %2238 = vmatprep.mubr.f32.mxu0 0.0
  %2239 = vmatmul.mubr.f32.gmra.mxu0 %v1985
  %v2240 = vpop.f32.mrf.mxu0
  %v2241 = vadd.f32 0.0, %v2240
  %v2242 = vpop.f32.mrf.mxu0
  %2243 = vmatprep.mubr.f32.mxu0 0.0
  %2244 = vmatmul.mubr.f32.gmra.mxu0 %v1988
  %v2245 = vpop.f32.mrf.mxu0
  %v2246 = vadd.f32 0.0, %v2245
  %v2247 = vpop.f32.mrf.mxu0
  %2248 = vmatprep.mubr.f32.mxu0 0.0
  %2249 = vmatmul.mubr.f32.gmra.mxu0 %v1991
  %v2250 = vpop.f32.mrf.mxu0
  %v2251 = vadd.f32 0.0, %v2250
  %v2252 = vpop.f32.mrf.mxu0
  %2253 = vmatprep.mubr.f32.mxu0 0.0
  %2254 = vmatmul.mubr.f32.gmra.mxu0 %v1994
  %v2255 = vpop.f32.mrf.mxu0
  %v2256 = vadd.f32 0.0, %v2255
  %v2257 = vpop.f32.mrf.mxu0
  %2258 = vmatprep.mubr.f32.mxu0 0.0
  %2259 = vmatmul.mubr.f32.gmra.mxu0 %v1997
  %v2260 = vpop.f32.mrf.mxu0
  %v2261 = vadd.f32 0.0, %v2260
  %v2262 = vpop.f32.mrf.mxu0
  %2263 = vmatprep.mubr.f32.mxu0 0.0
  %2264 = vmatmul.mubr.f32.gmra.mxu0 %v2000
  %v2265 = vpop.f32.mrf.mxu0
  %v2266 = vadd.f32 0.0, %v2265
  %v2267 = vpop.f32.mrf.mxu0
  %2268 = vmatprep.mubr.f32.mxu0 0.0
  %2269 = vmatmul.mubr.f32.gmra.mxu0 %v2003
  %v2270 = vpop.f32.mrf.mxu0
  %v2271 = vadd.f32 0.0, %v2270
  %v2272 = vpop.f32.mrf.mxu0
  %2273 = vmatprep.mubr.f32.mxu0 0.0
  %2274 = vmatmul.mubr.f32.gmra.mxu0 %v2006
  %v2275 = vpop.f32.mrf.mxu0
  %v2276 = vadd.f32 0.0, %v2275
  %v2277 = vpop.f32.mrf.mxu0
  %2278 = vmatprep.mubr.f32.mxu0 0.0
  %2279 = vmatmul.mubr.f32.gmra.mxu0 %v2009
  %v2280 = vpop.f32.mrf.mxu0
  %v2281 = vadd.f32 0.0, %v2280
  %v2282 = vpop.f32.mrf.mxu0
  %2283 = vdwg.mxu0
  %2284 = vst [vmem:[%s16 + $0x60] sm:$0xff] %v2226
  %2285 = vst [vmem:[%s16 + $0x68] sm:$0xff] %v2231
  %2286 = vst [vmem:[%s16 + $0x70] sm:$0xff] %v2236
  %2287 = vst [vmem:[%s16 + $0x78] sm:$0xff] %v2241
  %2288 = vst [vmem:[%s16 + $0x80] sm:$0xff] %v2246
  %2289 = vst [vmem:[%s16 + $0x88] sm:$0xff] %v2251
  %2290 = vst [vmem:[%s16 + $0x90] sm:$0xff] %v2256
  %2291 = vst [vmem:[%s16 + $0x98] sm:$0xff] %v2261
  %2292 = vst [vmem:[%s16 + $0xa0] sm:$0xff] %v2266
  %2293 = vst [vmem:[%s16 + $0xa8] sm:$0xff] %v2271
  %2294 = vst [vmem:[%s16 + $0xb0] sm:$0xff] %v2276
  %2295 = vst [vmem:[%s16 + $0xb8] sm:$0xff] %v2281
  %v2297 = vrot.slane %v1952, 4
  %v2298 = vrot.slane %v1957, 4
  %v2299 = vsel %vm363, %v2297, %v2298
  %v2300 = vsel %vm2011, %v2299, 0
  %2302 = vmatprep.subr.mxu0 0.0
  %2303 = vmatpush1.msra.mxu0 0.0
  %2304 = vmatprep.subr.mxu0 0.0
  %2305 = vmatpush1.msra.mxu0 0.0
  %2306 = vmatprep.subr.mxu0 0.0
  %2307 = vmatpush1.msra.mxu0 0.0
  %2308 = vmatprep.subr.mxu0 0.0
  %2309 = vmatpush1.msra.mxu0 0.0
  %2310 = vmatprep.subr.mxu0 0.0
  %2311 = vmatpush1.msra.mxu0 0.0
  %2312 = vmatprep.subr.mxu0 0.0
  %2313 = vmatpush1.msra.mxu0 0.0
  %2314 = vmatprep.subr.mxu0 0.0
  %2315 = vmatpush1.msra.mxu0 0.0
  %2316 = vmatprep.subr.mxu0 0.0
  %2317 = vmatpush1.msra.mxu0 0.0
  %2318 = vmatprep.subr.mxu0 0.0
  %2319 = vmatpush1.msra.mxu0 0.0
  %2320 = vmatprep.subr.mxu0 0.0
  %2321 = vmatpush1.msra.mxu0 0.0
  %2322 = vmatprep.subr.mxu0 0.0
  %2323 = vmatpush1.msra.mxu0 0.0
  %2324 = vmatprep.subr.mxu0 0.0
  %2325 = vmatpush1.msra.mxu0 0.0
  %2326 = vmatprep.subr.mxu0 0.0
  %2327 = vmatpush1.msra.mxu0 0.0
  %2328 = vmatprep.subr.mxu0 0.0
  %2329 = vmatpush1.msra.mxu0 0.0
  %2330 = vmatprep.subr.mxu0 0.0
  %2331 = vmatpush1.msra.mxu0 0.0
  %2332 = vmatprep.subr.mxu0 0.0
  %2333 = vmatpush1.msra.mxu0 %v2300
  %2334 = vmatprep.subr.mxu0 0.0
  %2335 = vmatpush2.msra.mxu0 0.0
  %2336 = vmatprep.subr.mxu0 0.0
  %2337 = vmatpush2.msra.mxu0 0.0
  %2338 = vmatprep.subr.mxu0 0.0
  %2339 = vmatpush2.msra.mxu0 0.0
  %2340 = vmatprep.subr.mxu0 0.0
  %2341 = vmatpush2.msra.mxu0 0.0
  %2342 = vmatprep.subr.mxu0 0.0
  %2343 = vmatpush2.msra.mxu0 0.0
  %2344 = vmatprep.subr.mxu0 0.0
  %2345 = vmatpush2.msra.mxu0 0.0
  %2346 = vmatprep.subr.mxu0 0.0
  %2347 = vmatpush2.msra.mxu0 0.0
  %2348 = vmatprep.subr.mxu0 0.0
  %2349 = vmatpush2.msra.mxu0 0.0
  %2350 = vmatprep.subr.mxu0 0.0
  %2351 = vmatpush2.msra.mxu0 0.0
  %2352 = vmatprep.subr.mxu0 0.0
  %2353 = vmatpush2.msra.mxu0 0.0
  %2354 = vmatprep.subr.mxu0 0.0
  %2355 = vmatpush2.msra.mxu0 0.0
  %2356 = vmatprep.subr.mxu0 0.0
  %2357 = vmatpush2.msra.mxu0 0.0
  %2358 = vmatprep.subr.mxu0 0.0
  %2359 = vmatpush2.msra.mxu0 0.0
  %2360 = vmatprep.subr.mxu0 0.0
  %2361 = vmatpush2.msra.mxu0 0.0
  %2362 = vmatprep.subr.mxu0 0.0
  %2363 = vmatpush2.msra.mxu0 0.0
  %2364 = vmatprep.subr.mxu0 0.0
  %2365 = vmatpush2.msra.mxu0 0.0
  %2366 = vmatprep.mubr.f32.mxu0 0.0
  %2367 = vmatmul.mubr.f32.gmra.mxu0 %v1976
  %v2368 = vpop.f32.mrf.mxu0
  %v2369 = vadd.f32 0.0, %v2368
  %v2370 = vpop.f32.mrf.mxu0
  %2371 = vmatprep.mubr.f32.mxu0 0.0
  %2372 = vmatmul.mubr.f32.gmra.mxu0 %v1979
  %v2373 = vpop.f32.mrf.mxu0
  %v2374 = vadd.f32 0.0, %v2373
  %v2375 = vpop.f32.mrf.mxu0
  %2376 = vmatprep.mubr.f32.mxu0 0.0
  %2377 = vmatmul.mubr.f32.gmra.mxu0 %v1982
  %v2378 = vpop.f32.mrf.mxu0
  %v2379 = vadd.f32 0.0, %v2378
  %v2380 = vpop.f32.mrf.mxu0
  %2381 = vmatprep.mubr.f32.mxu0 0.0
  %2382 = vmatmul.mubr.f32.gmra.mxu0 %v1985
  %v2383 = vpop.f32.mrf.mxu0
  %v2384 = vadd.f32 0.0, %v2383
  %v2385 = vpop.f32.mrf.mxu0
  %2386 = vmatprep.mubr.f32.mxu0 0.0
  %2387 = vmatmul.mubr.f32.gmra.mxu0 %v1988
  %v2388 = vpop.f32.mrf.mxu0
  %v2389 = vadd.f32 0.0, %v2388
  %v2390 = vpop.f32.mrf.mxu0
  %2391 = vmatprep.mubr.f32.mxu0 0.0
  %2392 = vmatmul.mubr.f32.gmra.mxu0 %v1991
  %v2393 = vpop.f32.mrf.mxu0
  %v2394 = vadd.f32 0.0, %v2393
  %v2395 = vpop.f32.mrf.mxu0
  %2396 = vmatprep.mubr.f32.mxu0 0.0
  %2397 = vmatmul.mubr.f32.gmra.mxu0 %v1994
  %v2398 = vpop.f32.mrf.mxu0
  %v2399 = vadd.f32 0.0, %v2398
  %v2400 = vpop.f32.mrf.mxu0
  %2401 = vmatprep.mubr.f32.mxu0 0.0
  %2402 = vmatmul.mubr.f32.gmra.mxu0 %v1997
  %v2403 = vpop.f32.mrf.mxu0
  %v2404 = vadd.f32 0.0, %v2403
  %v2405 = vpop.f32.mrf.mxu0
  %2406 = vmatprep.mubr.f32.mxu0 0.0
  %2407 = vmatmul.mubr.f32.gmra.mxu0 %v2000
  %v2408 = vpop.f32.mrf.mxu0
  %v2409 = vadd.f32 0.0, %v2408
  %v2410 = vpop.f32.mrf.mxu0
  %2411 = vmatprep.mubr.f32.mxu0 0.0
  %2412 = vmatmul.mubr.f32.gmra.mxu0 %v2003
  %v2413 = vpop.f32.mrf.mxu0
  %v2414 = vadd.f32 0.0, %v2413
  %v2415 = vpop.f32.mrf.mxu0
  %2416 = vmatprep.mubr.f32.mxu0 0.0
  %2417 = vmatmul.mubr.f32.gmra.mxu0 %v2006
  %v2418 = vpop.f32.mrf.mxu0
  %v2419 = vadd.f32 0.0, %v2418
  %v2420 = vpop.f32.mrf.mxu0
  %2421 = vmatprep.mubr.f32.mxu0 0.0
  %2422 = vmatmul.mubr.f32.gmra.mxu0 %v2009
  %v2423 = vpop.f32.mrf.mxu0
  %v2424 = vadd.f32 0.0, %v2423
  %v2425 = vpop.f32.mrf.mxu0
  %2426 = vdwg.mxu0
  %2427 = vst [vmem:[%s16 + $0xc0] sm:$0xff] %v2369
  %2428 = vst [vmem:[%s16 + $0xc8] sm:$0xff] %v2374
  %2429 = vst [vmem:[%s16 + $0xd0] sm:$0xff] %v2379
  %2430 = vst [vmem:[%s16 + $0xd8] sm:$0xff] %v2384
  %2431 = vst [vmem:[%s16 + $0xe0] sm:$0xff] %v2389
  %2432 = vst [vmem:[%s16 + $0xe8] sm:$0xff] %v2394
  %2433 = vst [vmem:[%s16 + $0xf0] sm:$0xff] %v2399
  %2434 = vst [vmem:[%s16 + $0xf8] sm:$0xff] %v2404
  %2435 = vst [vmem:[%s16 + $0x100] sm:$0xff] %v2409
  %2436 = vst [vmem:[%s16 + $0x108] sm:$0xff] %v2414
  %2437 = vst [vmem:[%s16 + $0x110] sm:$0xff] %v2419
  %2438 = vst [vmem:[%s16 + $0x118] sm:$0xff] %v2424
  %v2439 = vrot.slane %v1957, 2
  %v2440 = vsel %vm2011, %v2439, 0
  %2442 = vmatprep.subr.mxu0 0.0
  %2443 = vmatpush1.msra.mxu0 0.0
  %2444 = vmatprep.subr.mxu0 0.0
  %2445 = vmatpush1.msra.mxu0 0.0
  %2446 = vmatprep.subr.mxu0 0.0
  %2447 = vmatpush1.msra.mxu0 0.0
  %2448 = vmatprep.subr.mxu0 0.0
  %2449 = vmatpush1.msra.mxu0 0.0
  %2450 = vmatprep.subr.mxu0 0.0
  %2451 = vmatpush1.msra.mxu0 0.0
  %2452 = vmatprep.subr.mxu0 0.0
  %2453 = vmatpush1.msra.mxu0 0.0
  %2454 = vmatprep.subr.mxu0 0.0
  %2455 = vmatpush1.msra.mxu0 0.0
  %2456 = vmatprep.subr.mxu0 0.0
  %2457 = vmatpush1.msra.mxu0 0.0
  %2458 = vmatprep.subr.mxu0 0.0
  %2459 = vmatpush1.msra.mxu0 0.0
  %2460 = vmatprep.subr.mxu0 0.0
  %2461 = vmatpush1.msra.mxu0 0.0
  %2462 = vmatprep.subr.mxu0 0.0
  %2463 = vmatpush1.msra.mxu0 0.0
  %2464 = vmatprep.subr.mxu0 0.0
  %2465 = vmatpush1.msra.mxu0 0.0
  %2466 = vmatprep.subr.mxu0 0.0
  %2467 = vmatpush1.msra.mxu0 0.0
  %2468 = vmatprep.subr.mxu0 0.0
  %2469 = vmatpush1.msra.mxu0 0.0
  %2470 = vmatprep.subr.mxu0 0.0
  %2471 = vmatpush1.msra.mxu0 0.0
  %2472 = vmatprep.subr.mxu0 0.0
  %2473 = vmatpush1.msra.mxu0 %v2440
  %2474 = vmatprep.subr.mxu0 0.0
  %2475 = vmatpush2.msra.mxu0 0.0
  %2476 = vmatprep.subr.mxu0 0.0
  %2477 = vmatpush2.msra.mxu0 0.0
  %2478 = vmatprep.subr.mxu0 0.0
  %2479 = vmatpush2.msra.mxu0 0.0
  %2480 = vmatprep.subr.mxu0 0.0
  %2481 = vmatpush2.msra.mxu0 0.0
  %2482 = vmatprep.subr.mxu0 0.0
  %2483 = vmatpush2.msra.mxu0 0.0
  %2484 = vmatprep.subr.mxu0 0.0
  %2485 = vmatpush2.msra.mxu0 0.0
  %2486 = vmatprep.subr.mxu0 0.0
  %2487 = vmatpush2.msra.mxu0 0.0
  %2488 = vmatprep.subr.mxu0 0.0
  %2489 = vmatpush2.msra.mxu0 0.0
  %2490 = vmatprep.subr.mxu0 0.0
  %2491 = vmatpush2.msra.mxu0 0.0
  %2492 = vmatprep.subr.mxu0 0.0
  %2493 = vmatpush2.msra.mxu0 0.0
  %2494 = vmatprep.subr.mxu0 0.0
  %2495 = vmatpush2.msra.mxu0 0.0
  %2496 = vmatprep.subr.mxu0 0.0
  %2497 = vmatpush2.msra.mxu0 0.0
  %2498 = vmatprep.subr.mxu0 0.0
  %2499 = vmatpush2.msra.mxu0 0.0
  %2500 = vmatprep.subr.mxu0 0.0
  %2501 = vmatpush2.msra.mxu0 0.0
  %2502 = vmatprep.subr.mxu0 0.0
  %2503 = vmatpush2.msra.mxu0 0.0
  %2504 = vmatprep.subr.mxu0 0.0
  %2505 = vmatpush2.msra.mxu0 0.0
  %2506 = vmatprep.mubr.f32.mxu0 0.0
  %2507 = vmatmul.mubr.f32.gmra.mxu0 %v1976
  %v2508 = vpop.f32.mrf.mxu0
  %v2509 = vadd.f32 0.0, %v2508
  %v2510 = vpop.f32.mrf.mxu0
  %2511 = vmatprep.mubr.f32.mxu0 0.0
  %2512 = vmatmul.mubr.f32.gmra.mxu0 %v1979
  %v2513 = vpop.f32.mrf.mxu0
  %v2514 = vadd.f32 0.0, %v2513
  %v2515 = vpop.f32.mrf.mxu0
  %2516 = vmatprep.mubr.f32.mxu0 0.0
  %2517 = vmatmul.mubr.f32.gmra.mxu0 %v1982
  %v2518 = vpop.f32.mrf.mxu0
  %v2519 = vadd.f32 0.0, %v2518
  %v2520 = vpop.f32.mrf.mxu0
  %2521 = vmatprep.mubr.f32.mxu0 0.0
  %2522 = vmatmul.mubr.f32.gmra.mxu0 %v1985
  %v2523 = vpop.f32.mrf.mxu0
  %v2524 = vadd.f32 0.0, %v2523
  %v2525 = vpop.f32.mrf.mxu0
  %2526 = vmatprep.mubr.f32.mxu0 0.0
  %2527 = vmatmul.mubr.f32.gmra.mxu0 %v1988
  %v2528 = vpop.f32.mrf.mxu0
  %v2529 = vadd.f32 0.0, %v2528
  %v2530 = vpop.f32.mrf.mxu0
  %2531 = vmatprep.mubr.f32.mxu0 0.0
  %2532 = vmatmul.mubr.f32.gmra.mxu0 %v1991
  %v2533 = vpop.f32.mrf.mxu0
  %v2534 = vadd.f32 0.0, %v2533
  %v2535 = vpop.f32.mrf.mxu0
  %2536 = vmatprep.mubr.f32.mxu0 0.0
  %2537 = vmatmul.mubr.f32.gmra.mxu0 %v1994
  %v2538 = vpop.f32.mrf.mxu0
  %v2539 = vadd.f32 0.0, %v2538
  %v2540 = vpop.f32.mrf.mxu0
  %2541 = vmatprep.mubr.f32.mxu0 0.0
  %2542 = vmatmul.mubr.f32.gmra.mxu0 %v1997
  %v2543 = vpop.f32.mrf.mxu0
  %v2544 = vadd.f32 0.0, %v2543
  %v2545 = vpop.f32.mrf.mxu0
  %2546 = vmatprep.mubr.f32.mxu0 0.0
  %2547 = vmatmul.mubr.f32.gmra.mxu0 %v2000
  %v2548 = vpop.f32.mrf.mxu0
  %v2549 = vadd.f32 0.0, %v2548
  %v2550 = vpop.f32.mrf.mxu0
  %2551 = vmatprep.mubr.f32.mxu0 0.0
  %2552 = vmatmul.mubr.f32.gmra.mxu0 %v2003
  %v2553 = vpop.f32.mrf.mxu0
  %v2554 = vadd.f32 0.0, %v2553
  %v2555 = vpop.f32.mrf.mxu0
  %2556 = vmatprep.mubr.f32.mxu0 0.0
  %2557 = vmatmul.mubr.f32.gmra.mxu0 %v2006
  %v2558 = vpop.f32.mrf.mxu0
  %v2559 = vadd.f32 0.0, %v2558
  %v2560 = vpop.f32.mrf.mxu0
  %2561 = vmatprep.mubr.f32.mxu0 0.0
  %2562 = vmatmul.mubr.f32.gmra.mxu0 %v2009
  %v2563 = vpop.f32.mrf.mxu0
  %v2564 = vadd.f32 0.0, %v2563
  %v2565 = vpop.f32.mrf.mxu0
  %2566 = vdwg.mxu0
  %2567 = vst [vmem:[%s16 + $0x120] sm:$0xff] %v2509
  %2568 = vst [vmem:[%s16 + $0x128] sm:$0xff] %v2514
  %2569 = vst [vmem:[%s16 + $0x130] sm:$0xff] %v2519
  %2570 = vst [vmem:[%s16 + $0x138] sm:$0xff] %v2524
  %2571 = vst [vmem:[%s16 + $0x140] sm:$0xff] %v2529
  %2572 = vst [vmem:[%s16 + $0x148] sm:$0xff] %v2534
  %2573 = vst [vmem:[%s16 + $0x150] sm:$0xff] %v2539
  %2574 = vst [vmem:[%s16 + $0x158] sm:$0xff] %v2544
  %2575 = vst [vmem:[%s16 + $0x160] sm:$0xff] %v2549
  %2576 = vst [vmem:[%s16 + $0x168] sm:$0xff] %v2554
  %2577 = vst [vmem:[%s16 + $0x170] sm:$0xff] %v2559
  %2578 = vst [vmem:[%s16 + $0x178] sm:$0xff] %v2564
  // Predicated region
  $region66: #{heatmap_infer.1} parent=0 // pred_check
    _
  $region67: #{heatmap_infer.1} parent=0 // pred_check_branch
    %2580 = sbr.rel (0) target = $region69
  $region68: #{heatmap_infer.1} parent=0 // pred_region
    _
  $region69: #{heatmap_infer.1} parent=0 // pred_fallthru
    _
  // Predicated region
  $region70: #{heatmap_infer.1} parent=0 // pred_check
    _
  $region71: #{heatmap_infer.1} parent=0 // pred_check_branch
    %2582 = sbr.rel (0) target = $region73
  $region72: #{heatmap_infer.1} parent=0 // pred_region
    _
  $region73: #{heatmap_infer.1} parent=0 // pred_fallthru
    _

</llo_original>
